<compile_context>
chip_gen: v5e
topology: v5e:2x2
jax: 0.10.0
libtpu: 0.0.40
codegen_flags: <defaults>
</compile_context>

<pallas_src>
import functools
import itertools

import numpy as np
import jax
import jax.numpy as jnp
from jax.experimental import pallas as pl
from jax.experimental.pallas import tpu as pltpu

_EPS = 1e-6
_DEG2RAD = float(np.pi / 180.0)


def _acos(x):
    """arccos on the clipped domain [-1+eps, 1-eps].

    Abramowitz & Stegun 4.4.45 polynomial seed + one Newton step on cos(t)=x,
    so only sqrt/sin/cos are required (all have guaranteed Mosaic lowerings).
    Residual error is <2e-6 at the clip edges and ~f32 roundoff elsewhere.
    """
    ax = jnp.abs(x)
    poly = 1.5707288 + ax * (-0.2121144 + ax * (0.0742610 - 0.0187293 * ax))
    p = jnp.sqrt(jnp.maximum(1.0 - ax, 0.0)) * poly
    t = jnp.where(x < 0.0, float(np.pi) - p, p)
    return t + (jnp.cos(t) - x) / jnp.maximum(jnp.sin(t), 1e-6)


def _euler_rotation(row):
    """Rotation elements of InstanceRigidModel._compute_matrix.

    `row(i)` returns the i-th Euler-angle row (degrees) as a (1, X) array.
    Returns a dict (i, j) -> (1, X); everything stays unrolled VPU FMAs.
    """
    a = [row(i) * _DEG2RAD for i in range(3)]
    s = [jnp.sin(v) for v in a]
    c = [jnp.cos(v) for v in a]
    R = {}
    R[(0, 0)] = c[2] * c[1]
    R[(1, 0)] = s[2] * c[1]
    R[(2, 0)] = -s[1]
    R[(0, 1)] = c[2] * s[1] * s[0] - s[2] * c[0]
    R[(1, 1)] = s[2] * s[1] * s[0] + c[2] * c[0]
    R[(2, 1)] = c[1] * s[0]
    R[(0, 2)] = c[2] * s[1] * c[0] + s[2] * s[0]
    R[(1, 2)] = s[2] * s[1] * c[0] - c[2] * s[0]
    R[(2, 2)] = c[1] * c[0]
    return R


def _log_map(Rel, Trel):
    """SE(3) log map (InstanceRigidModel._compute_log), vectorized over lanes."""
    tr = Rel(0, 0) + Rel(1, 1) + Rel(2, 2)
    t = _acos(jnp.clip((tr - 1.0) * 0.5, -1.0 + _EPS, 1.0 - _EPS)) + _EPS
    sin_t = jnp.sin(t)
    cos_t = jnp.cos(t)
    s = t / (2.0 * sin_t)

    # Three unique antisymmetric components of W = s * (R - R^T); the rest are
    # sign flips (CSE of the redundant per-element torch formulas).
    w0 = s * (Rel(2, 1) - Rel(1, 2))   # W[2,1] = -W[1,2]
    w1 = s * (Rel(0, 2) - Rel(2, 0))   # W[0,2] = -W[2,0]
    w2 = s * (Rel(1, 0) - Rel(0, 1))   # W[1,0] = -W[0,1]

    # coef = (1 - t*cos(t/2)/(2 sin(t/2)))/t^2 via the half-angle identity
    # cos(t/2)/(2 sin(t/2)) == (1+cos t)/(2 sin t); the naive form cancels
    # catastrophically as t -> 0, so switch to its Taylor series there.
    coef_naive = (1.0 - s * (1.0 + cos_t)) / (t * t)
    coef_series = 1.0 / 12.0 + (t * t) * (1.0 / 720.0)
    coef = jnp.where(t < 1e-2, coef_series, coef_naive)

    c0 = coef * (w0 * w0)
    c1 = coef * (w1 * w1)
    c2 = coef * (w2 * w2)

    # Vinv = I - 0.5*W + coef*(W elementwise-squared); the diagonal is exactly 1.
    t0, t1, t2 = Trel(0), Trel(1), Trel(2)
    u0 = t0 + (0.5 * w2 + c2) * t1 + (c1 - 0.5 * w1) * t2
    u1 = (c2 - 0.5 * w2) * t0 + t1 + (0.5 * w0 + c0) * t2
    u2 = (0.5 * w1 + c1) * t0 + (c0 - 0.5 * w0) * t1 + t2
    return [w0, w1, w2, u0, u1, u2]


def _rigid_loss_kernel(params_ref, sel1_ref, sel0_ref, logr_ref, out_ref, *,
                       B, N, K, reg_weight, cost):
    """Whole InstanceRigidModel forward for B lane-packed instances.

    params_ref: (6, B*N)  rows [angle0..2 (deg), translation0..2], instance-major lanes
    sel1_ref  : (B*N, B*K) one-hot "floating" (idx1) pair-selection constant
    sel0_ref  : (B*N, B*K) one-hot "reference" (idx0) pair-selection constant
    logr_ref  : (6, B*K)   observed log transforms
    out_ref   : (1, B)     per-instance losses
    """
    BN = B * N
    BK = B * K

    # ---- in-kernel pair expansion: unrolled one-hot broadcast-FMAs (VPU) ----
    pf = jnp.zeros((6, BK), jnp.float32)   # floating  (idx1) params per pair
    pr = jnp.zeros((6, BK), jnp.float32)   # reference (idx0) params per pair
    for c in range(BN):
        col = params_ref[:, c:c + 1]                 # (6, 1) ref slice (vld)
        pf = pf + col * sel1_ref[c:c + 1, :]         # (6, BK) broadcast FMA
        pr = pr + col * sel0_ref[c:c + 1, :]

    # ---- pair branch: Tij = T1 @ inv(T0) with the analytic rigid inverse
    #      inv(T0) = [R0^T, -R0^T t0; 0 1], fully unrolled VPU FMAs ----
    R1 = _euler_rotation(lambda i: pf[i:i + 1, :])
    R0 = _euler_rotation(lambda i: pr[i:i + 1, :])
    t1 = [pf[3 + i:4 + i, :] for i in range(3)]
    t0 = [pr[3 + i:4 + i, :] for i in range(3)]

    Tij = {}
    for i in range(3):
        for l in range(3):
            Tij[(i, l)] = (R1[(i, 0)] * R0[(l, 0)] + R1[(i, 1)] * R0[(l, 1)]
                           + R1[(i, 2)] * R0[(l, 2)])
        Tij[(i, 3)] = (t1[i] - Tij[(i, 0)] * t0[0] - Tij[(i, 1)] * t0[1]
                       - Tij[(i, 2)] * t0[2])

    logTij = _log_map(lambda i, j: Tij[(i, j)], lambda i: Tij[(i, 3)])

    d2 = (logTij[0] - logr_ref[0:1, :]) ** 2
    for r in range(1, 6):
        d2 = d2 + (logTij[r] - logr_ref[r:r + 1, :]) ** 2      # (1, BK)

    if cost == 'l1':
        # TODO(synk): no epsilon under the sqrt (matches torch); the gradient
        # is unbounded if logTij ever equals logRobs exactly.
        data_e = jnp.sqrt(d2)
    elif cost == 'l2':
        data_e = d2 + 6.0e-6   # torch adds 1e-6 to each of the 6 rows per pair
    else:
        raise ValueError(cost)

    # ---- regularizer branch (per-timepoint log map), evaluated after d2 so
    #      the pair-branch live ranges stay short ----
    Rt = _euler_rotation(lambda i: params_ref[i:i + 1, :])
    logTi = _log_map(lambda i, j: Rt[(i, j)],
                     lambda i: params_ref[3 + i:4 + i, :])
    reg_e = logTi[0] * logTi[0]
    for r in range(1, 6):
        reg_e = reg_e + logTi[r] * logTi[r]                    # (1, BN)

    # ---- per-instance segmented lane reductions -> lane-dense (1, B) row ----
    lane_k = jax.lax.broadcasted_iota(jnp.int32, (1, BK), 1)
    lane_n = jax.lax.broadcasted_iota(jnp.int32, (1, BN), 1)
    out_lane = jax.lax.broadcasted_iota(jnp.int32, (1, B), 1)
    out_row = jnp.zeros((1, B), jnp.float32)
    for b in range(B):
        mk = (lane_k >= b * K) & (lane_k < (b + 1) * K)
        mn = (lane_n >= b * N) & (lane_n < (b + 1) * N)
        data_b = jnp.sum(jnp.where(mk, data_e, 0.0), axis=1, keepdims=True)
        reg_b = jnp.sum(jnp.where(mn, reg_e, 0.0), axis=1, keepdims=True)
        loss_b = (data_b + reg_weight * reg_b) / K             # (1, 1)
        out_row = out_row + jnp.where(out_lane == b, loss_b, 0.0)
    out_ref[...] = out_row


def instance_rigid_loss_batched(angle, translation, logRobs, reg_weight=0.001,
                                cost='l1'):
    """Batched InstanceRigidModel.forward.

    angle, translation: (B, 3, N); logRobs: (B, 6, K) with K = N*(N-1)/2 in
    itertools.combinations(range(N), 2) order.  Returns (B,) losses; instances
    share one kernel invocation, packed along the 128-lane axis.
    """
    B, three, N = angle.shape
    assert three == 3 and translation.shape == (B, 3, N)
    pairs = list(itertools.combinations(range(N), 2))
    K = len(pairs)
    assert logRobs.shape == (B, 6, K)

    # Static one-hot pair-selection matrices (block-diagonal over instances).
    # Built with numpy at trace time -> baked constants, zero runtime HLOs.
    sel1 = np.zeros((B * N, B * K), np.float32)
    sel0 = np.zeros((B * N, B * K), np.float32)
    for b in range(B):
        for k, (i0, i1) in enumerate(pairs):
            sel1[b * N + i1, b * K + k] = 1.0   # floating  (idx1)
            sel0[b * N + i0, b * K + k] = 1.0   # reference (idx0)

    def pack(x):                       # (B, R, C) -> (R, B*C), instance-major
        return jnp.transpose(x, (1, 0, 2)).reshape(x.shape[1], -1)

    params = pack(jnp.concatenate([angle, translation], axis=1)
                  .astype(jnp.float32))                          # (6, B*N)
    logr = pack(logRobs.astype(jnp.float32))                     # (6, B*K)

    kernel = functools.partial(_rigid_loss_kernel, B=B, N=N, K=K,
                               reg_weight=float(reg_weight), cost=cost)

    # TODO(synk): for large K, tile the pair axis with an "arbitrary" K grid
    # accumulating into the same output block; on v7x add a leading size-2
    # "parallel" core axis whose output BlockSpec maps to distinct lanes
    # (per-core partial sums, summed in glue) and guard the N-regularizer with
    # pl.when(k == 0) so it is added exactly once.
    out = pl.pallas_call(
        kernel,
        out_shape=jax.ShapeDtypeStruct((1, B), jnp.float32),
        grid=(1,),
        in_specs=[
            pl.BlockSpec((6, B * N), lambda i: (0, 0)),
            pl.BlockSpec((B * N, B * K), lambda i: (0, 0)),
            pl.BlockSpec((B * N, B * K), lambda i: (0, 0)),
            pl.BlockSpec((6, B * K), lambda i: (0, 0)),
        ],
        out_specs=pl.BlockSpec((1, B), lambda i: (0, 0)),
        compiler_params=pltpu.CompilerParams(
            dimension_semantics=("arbitrary",)),
    )(params, jnp.asarray(sel1), jnp.asarray(sel0), logr)
    return out[0]


def instance_rigid_loss(angle, translation, logRobs, reg_weight=0.001, cost='l1'):
    """Single-instance InstanceRigidModel.forward (scalar loss)."""
    return instance_rigid_loss_batched(angle[None], translation[None],
                                       logRobs[None], reg_weight=reg_weight,
                                       cost=cost)[0]


# ----------------------------- verification ---------------------------------
def _compute_matrix_ref(angle, translation):
    """Plain-JAX port of InstanceRigidModel._compute_matrix -> (4, 4, N)."""
    ang = angle / 180.0 * jnp.pi
    cos = jnp.cos(ang)
    sin = jnp.sin(ang)
    Nn = angle.shape[1]
    z = jnp.zeros((Nn,), angle.dtype)
    o = jnp.ones((Nn,), angle.dtype)
    r0 = jnp.stack([cos[2] * cos[1],
                    cos[2] * sin[1] * sin[0] - sin[2] * cos[0],
                    cos[2] * sin[1] * cos[0] + sin[2] * sin[0],
                    translation[0]], axis=0)
    r1 = jnp.stack([sin[2] * cos[1],
                    sin[2] * sin[1] * sin[0] + cos[2] * cos[0],
                    sin[2] * sin[1] * cos[0] - cos[2] * sin[0],
                    translation[1]], axis=0)
    r2 = jnp.stack([-sin[1], cos[1] * sin[0], cos[1] * cos[0],
                    translation[2]], axis=0)
    r3 = jnp.stack([z, z, z, o], axis=0)
    return jnp.stack([r0, r1, r2, r3], axis=0)


def _reference_loss(angle, translation, logRobs, reg_weight, cost):
    """Plain-JAX port of the torch forward (general matrix inverse), 1 instance."""
    N = angle.shape[1]
    pairs = list(itertools.combinations(range(N), 2))
    K = len(pairs)
    idx0 = jnp.array([p[0] for p in pairs], dtype=jnp.int32)
    idx1 = jnp.array([p[1] for p in pairs], dtype=jnp.int32)
    T = _compute_matrix_ref(angle, translation)
    Tn = jnp.transpose(T, (2, 0, 1))
    Tij = jnp.einsum('kij,kjl->kil', Tn[idx1], jnp.linalg.inv(Tn[idx0]))

    def logmap(Tb):  # (X, 4, 4) -> (6, X)
        eps = _EPS
        R = Tb[:, :3, :3]
        Tr = Tb[:, :3, 3]
        tr = R[:, 0, 0] + R[:, 1, 1] + R[:, 2, 2]
        t = jnp.arccos(jnp.clip((tr - 1.0) / 2.0, -1.0 + eps, 1.0 - eps)) + eps
        s = t / (2.0 * jnp.sin(t))
        W = s[:, None, None] * (R - jnp.transpose(R, (0, 2, 1)))
        coef = (1.0 - t * jnp.cos(t / 2.0) / (2.0 * jnp.sin(t / 2.0))) / t ** 2
        Vinv = jnp.eye(3)[None] - 0.5 * W + coef[:, None, None] * W * W
        u = jnp.einsum('kij,kj->ki', Vinv, Tr)
        return jnp.stack([W[:, 2, 1], W[:, 0, 2], W[:, 1, 0],
                          u[:, 0], u[:, 1], u[:, 2]], axis=0)

    logTij = logmap(Tij)
    logTi = logmap(Tn)
    if cost == 'l1':
        loss = jnp.sum(jnp.sqrt(jnp.sum((logTij - logRobs) ** 2, axis=0))) / K
    else:
        loss = jnp.sum((logTij - logRobs) ** 2 + 1e-6) / K
    return loss + reg_weight * jnp.sum(logTi ** 2) / K


if __name__ == "__main__":
    N = 8                       # timepoints per instance
    K = N * (N - 1) // 2        # 28 pairs
    B = 4                       # instances on the lane axis: 4*28 = 112/128 lanes

    key = jax.random.PRNGKey(0)
    k1, k2, k3 = jax.random.split(key, 3)
    # Parameters are nn.Parameter zeros in __init__; use small deterministic
    # random values so the rigid math is exercised away from the identity.
    angle = 10.0 * jax.random.normal(k1, (B, 3, N), dtype=jnp.float32)       # degrees
    translation = 0.5 * jax.random.normal(k2, (B, 3, N), dtype=jnp.float32)
    logRobs = 0.1 * jax.random.normal(k3, (B, 6, K), dtype=jnp.float32)

    loss_fn = jax.jit(functools.partial(instance_rigid_loss_batched,
                                        reg_weight=0.001, cost='l1'))
    losses = jax.block_until_ready(loss_fn(angle, translation, logRobs))
    assert losses.shape == (B,), losses.shape
    assert bool(jnp.all(jnp.isfinite(losses))), losses

    for b in range(B):
        ref = float(_reference_loss(angle[b], translation[b], logRobs[b],
                                    0.001, 'l1'))
        got = float(losses[b])
        assert abs(got - ref) <= 1e-4 + 1e-3 * abs(ref), (b, got, ref)

    print("KERNEL_OK")
</pallas_src>

<mosaic_0001>
module attributes {stable_mosaic.version = 11 : i64} {
  func.func @_rigid_loss_kernel(%arg0: i32, %arg1: memref<6x32xf32, #tpu.memory_space<vmem>>, %arg2: memref<32x112xf32, #tpu.memory_space<vmem>>, %arg3: memref<32x112xf32, #tpu.memory_space<vmem>>, %arg4: memref<6x112xf32, #tpu.memory_space<vmem>>, %arg5: memref<1x4xf32, #tpu.memory_space<vmem>>) attributes {dimension_semantics = [#tpu.dimension_semantics<arbitrary>], iteration_bounds = array<i64: 1>, scalar_prefetch = 0 : i64, scratch_operands = 0 : i64, tpu.core_type = #tpu.core_type<tc>, window_params = [{pipeline_mode = #tpu.pipeline_mode<synchronous>, transform_indices = @transform_0, window_bounds = array<i64: 6, 32>}, {pipeline_mode = #tpu.pipeline_mode<synchronous>, transform_indices = @transform_1, window_bounds = array<i64: 32, 112>}, {pipeline_mode = #tpu.pipeline_mode<synchronous>, transform_indices = @transform_2, window_bounds = array<i64: 32, 112>}, {pipeline_mode = #tpu.pipeline_mode<synchronous>, transform_indices = @transform_3, window_bounds = array<i64: 6, 112>}, {pipeline_mode = #tpu.pipeline_mode<synchronous>, transform_indices = @transform_4, window_bounds = array<i64: 1, 4>}]} {
    %cst = arith.constant 0.000000e+00 : f32
    %0 = vector.broadcast %cst : f32 to vector<6x112xf32>
    %cst_0 = arith.constant 0.000000e+00 : f32
    %1 = vector.broadcast %cst_0 : f32 to vector<6x112xf32>
    %c0 = arith.constant 0 : index
    %c0_1 = arith.constant 0 : index
    %2 = vector.load %arg1[%c0, %c0_1] : memref<6x32xf32, #tpu.memory_space<vmem>>, vector<6x1xf32>
    %c0_2 = arith.constant 0 : index
    %c0_3 = arith.constant 0 : index
    %3 = vector.load %arg2[%c0_2, %c0_3] : memref<32x112xf32, #tpu.memory_space<vmem>>, vector<1x112xf32>
    %4 = vector.broadcast %2 : vector<6x1xf32> to vector<6x112xf32>
    %5 = vector.broadcast %3 : vector<1x112xf32> to vector<6x112xf32>
    %6 = arith.mulf %4, %5 : vector<6x112xf32>
    %7 = arith.addf %0, %6 : vector<6x112xf32>
    %c0_4 = arith.constant 0 : index
    %c0_5 = arith.constant 0 : index
    %8 = vector.load %arg3[%c0_4, %c0_5] : memref<32x112xf32, #tpu.memory_space<vmem>>, vector<1x112xf32>
    %9 = vector.broadcast %2 : vector<6x1xf32> to vector<6x112xf32>
    %10 = vector.broadcast %8 : vector<1x112xf32> to vector<6x112xf32>
    %11 = arith.mulf %9, %10 : vector<6x112xf32>
    %12 = arith.addf %1, %11 : vector<6x112xf32>
    %c0_6 = arith.constant 0 : index
    %c1 = arith.constant 1 : index
    %13 = vector.load %arg1[%c0_6, %c1] : memref<6x32xf32, #tpu.memory_space<vmem>>, vector<6x1xf32>
    %c1_7 = arith.constant 1 : index
    %c0_8 = arith.constant 0 : index
    %14 = vector.load %arg2[%c1_7, %c0_8] : memref<32x112xf32, #tpu.memory_space<vmem>>, vector<1x112xf32>
    %15 = vector.broadcast %13 : vector<6x1xf32> to vector<6x112xf32>
    %16 = vector.broadcast %14 : vector<1x112xf32> to vector<6x112xf32>
    %17 = arith.mulf %15, %16 : vector<6x112xf32>
    %18 = arith.addf %7, %17 : vector<6x112xf32>
    %c1_9 = arith.constant 1 : index
    %c0_10 = arith.constant 0 : index
    %19 = vector.load %arg3[%c1_9, %c0_10] : memref<32x112xf32, #tpu.memory_space<vmem>>, vector<1x112xf32>
    %20 = vector.broadcast %13 : vector<6x1xf32> to vector<6x112xf32>
    %21 = vector.broadcast %19 : vector<1x112xf32> to vector<6x112xf32>
    %22 = arith.mulf %20, %21 : vector<6x112xf32>
    %23 = arith.addf %12, %22 : vector<6x112xf32>
    %c0_11 = arith.constant 0 : index
    %c2 = arith.constant 2 : index
    %24 = vector.load %arg1[%c0_11, %c2] : memref<6x32xf32, #tpu.memory_space<vmem>>, vector<6x1xf32>
    %c2_12 = arith.constant 2 : index
    %c0_13 = arith.constant 0 : index
    %25 = vector.load %arg2[%c2_12, %c0_13] : memref<32x112xf32, #tpu.memory_space<vmem>>, vector<1x112xf32>
    %26 = vector.broadcast %24 : vector<6x1xf32> to vector<6x112xf32>
    %27 = vector.broadcast %25 : vector<1x112xf32> to vector<6x112xf32>
    %28 = arith.mulf %26, %27 : vector<6x112xf32>
    %29 = arith.addf %18, %28 : vector<6x112xf32>
    %c2_14 = arith.constant 2 : index
    %c0_15 = arith.constant 0 : index
    %30 = vector.load %arg3[%c2_14, %c0_15] : memref<32x112xf32, #tpu.memory_space<vmem>>, vector<1x112xf32>
    %31 = vector.broadcast %24 : vector<6x1xf32> to vector<6x112xf32>
    %32 = vector.broadcast %30 : vector<1x112xf32> to vector<6x112xf32>
    %33 = arith.mulf %31, %32 : vector<6x112xf32>
    %34 = arith.addf %23, %33 : vector<6x112xf32>
    %c0_16 = arith.constant 0 : index
    %c3 = arith.constant 3 : index
    %35 = vector.load %arg1[%c0_16, %c3] : memref<6x32xf32, #tpu.memory_space<vmem>>, vector<6x1xf32>
    %c3_17 = arith.constant 3 : index
    %c0_18 = arith.constant 0 : index
    %36 = vector.load %arg2[%c3_17, %c0_18] : memref<32x112xf32, #tpu.memory_space<vmem>>, vector<1x112xf32>
    %37 = vector.broadcast %35 : vector<6x1xf32> to vector<6x112xf32>
    %38 = vector.broadcast %36 : vector<1x112xf32> to vector<6x112xf32>
    %39 = arith.mulf %37, %38 : vector<6x112xf32>
    %40 = arith.addf %29, %39 : vector<6x112xf32>
    %c3_19 = arith.constant 3 : index
    %c0_20 = arith.constant 0 : index
    %41 = vector.load %arg3[%c3_19, %c0_20] : memref<32x112xf32, #tpu.memory_space<vmem>>, vector<1x112xf32>
    %42 = vector.broadcast %35 : vector<6x1xf32> to vector<6x112xf32>
    %43 = vector.broadcast %41 : vector<1x112xf32> to vector<6x112xf32>
    %44 = arith.mulf %42, %43 : vector<6x112xf32>
    %45 = arith.addf %34, %44 : vector<6x112xf32>
    %c0_21 = arith.constant 0 : index
    %c4 = arith.constant 4 : index
    %46 = vector.load %arg1[%c0_21, %c4] : memref<6x32xf32, #tpu.memory_space<vmem>>, vector<6x1xf32>
    %c4_22 = arith.constant 4 : index
    %c0_23 = arith.constant 0 : index
    %47 = vector.load %arg2[%c4_22, %c0_23] : memref<32x112xf32, #tpu.memory_space<vmem>>, vector<1x112xf32>
    %48 = vector.broadcast %46 : vector<6x1xf32> to vector<6x112xf32>
    %49 = vector.broadcast %47 : vector<1x112xf32> to vector<6x112xf32>
    %50 = arith.mulf %48, %49 : vector<6x112xf32>
    %51 = arith.addf %40, %50 : vector<6x112xf32>
    %c4_24 = arith.constant 4 : index
    %c0_25 = arith.constant 0 : index
    %52 = vector.load %arg3[%c4_24, %c0_25] : memref<32x112xf32, #tpu.memory_space<vmem>>, vector<1x112xf32>
    %53 = vector.broadcast %46 : vector<6x1xf32> to vector<6x112xf32>
    %54 = vector.broadcast %52 : vector<1x112xf32> to vector<6x112xf32>
    %55 = arith.mulf %53, %54 : vector<6x112xf32>
    %56 = arith.addf %45, %55 : vector<6x112xf32>
    %c0_26 = arith.constant 0 : index
    %c5 = arith.constant 5 : index
    %57 = vector.load %arg1[%c0_26, %c5] : memref<6x32xf32, #tpu.memory_space<vmem>>, vector<6x1xf32>
    %c5_27 = arith.constant 5 : index
    %c0_28 = arith.constant 0 : index
    %58 = vector.load %arg2[%c5_27, %c0_28] : memref<32x112xf32, #tpu.memory_space<vmem>>, vector<1x112xf32>
    %59 = vector.broadcast %57 : vector<6x1xf32> to vector<6x112xf32>
    %60 = vector.broadcast %58 : vector<1x112xf32> to vector<6x112xf32>
    %61 = arith.mulf %59, %60 : vector<6x112xf32>
    %62 = arith.addf %51, %61 : vector<6x112xf32>
    %c5_29 = arith.constant 5 : index
    %c0_30 = arith.constant 0 : index
    %63 = vector.load %arg3[%c5_29, %c0_30] : memref<32x112xf32, #tpu.memory_space<vmem>>, vector<1x112xf32>
    %64 = vector.broadcast %57 : vector<6x1xf32> to vector<6x112xf32>
    %65 = vector.broadcast %63 : vector<1x112xf32> to vector<6x112xf32>
    %66 = arith.mulf %64, %65 : vector<6x112xf32>
    %67 = arith.addf %56, %66 : vector<6x112xf32>
    %c0_31 = arith.constant 0 : index
    %c6 = arith.constant 6 : index
    %68 = vector.load %arg1[%c0_31, %c6] : memref<6x32xf32, #tpu.memory_space<vmem>>, vector<6x1xf32>
    %c6_32 = arith.constant 6 : index
    %c0_33 = arith.constant 0 : index
    %69 = vector.load %arg2[%c6_32, %c0_33] : memref<32x112xf32, #tpu.memory_space<vmem>>, vector<1x112xf32>
    %70 = vector.broadcast %68 : vector<6x1xf32> to vector<6x112xf32>
    %71 = vector.broadcast %69 : vector<1x112xf32> to vector<6x112xf32>
    %72 = arith.mulf %70, %71 : vector<6x112xf32>
    %73 = arith.addf %62, %72 : vector<6x112xf32>
    %c6_34 = arith.constant 6 : index
    %c0_35 = arith.constant 0 : index
    %74 = vector.load %arg3[%c6_34, %c0_35] : memref<32x112xf32, #tpu.memory_space<vmem>>, vector<1x112xf32>
    %75 = vector.broadcast %68 : vector<6x1xf32> to vector<6x112xf32>
    %76 = vector.broadcast %74 : vector<1x112xf32> to vector<6x112xf32>
    %77 = arith.mulf %75, %76 : vector<6x112xf32>
    %78 = arith.addf %67, %77 : vector<6x112xf32>
    %c0_36 = arith.constant 0 : index
    %c7 = arith.constant 7 : index
    %79 = vector.load %arg1[%c0_36, %c7] : memref<6x32xf32, #tpu.memory_space<vmem>>, vector<6x1xf32>
    %c7_37 = arith.constant 7 : index
    %c0_38 = arith.constant 0 : index
    %80 = vector.load %arg2[%c7_37, %c0_38] : memref<32x112xf32, #tpu.memory_space<vmem>>, vector<1x112xf32>
    %81 = vector.broadcast %79 : vector<6x1xf32> to vector<6x112xf32>
    %82 = vector.broadcast %80 : vector<1x112xf32> to vector<6x112xf32>
    %83 = arith.mulf %81, %82 : vector<6x112xf32>
    %84 = arith.addf %73, %83 : vector<6x112xf32>
    %c7_39 = arith.constant 7 : index
    %c0_40 = arith.constant 0 : index
    %85 = vector.load %arg3[%c7_39, %c0_40] : memref<32x112xf32, #tpu.memory_space<vmem>>, vector<1x112xf32>
    %86 = vector.broadcast %79 : vector<6x1xf32> to vector<6x112xf32>
    %87 = vector.broadcast %85 : vector<1x112xf32> to vector<6x112xf32>
    %88 = arith.mulf %86, %87 : vector<6x112xf32>
    %89 = arith.addf %78, %88 : vector<6x112xf32>
    %c0_41 = arith.constant 0 : index
    %c8 = arith.constant 8 : index
    %90 = vector.load %arg1[%c0_41, %c8] : memref<6x32xf32, #tpu.memory_space<vmem>>, vector<6x1xf32>
    %c8_42 = arith.constant 8 : index
    %c0_43 = arith.constant 0 : index
    %91 = vector.load %arg2[%c8_42, %c0_43] : memref<32x112xf32, #tpu.memory_space<vmem>>, vector<1x112xf32>
    %92 = vector.broadcast %90 : vector<6x1xf32> to vector<6x112xf32>
    %93 = vector.broadcast %91 : vector<1x112xf32> to vector<6x112xf32>
    %94 = arith.mulf %92, %93 : vector<6x112xf32>
    %95 = arith.addf %84, %94 : vector<6x112xf32>
    %c8_44 = arith.constant 8 : index
    %c0_45 = arith.constant 0 : index
    %96 = vector.load %arg3[%c8_44, %c0_45] : memref<32x112xf32, #tpu.memory_space<vmem>>, vector<1x112xf32>
    %97 = vector.broadcast %90 : vector<6x1xf32> to vector<6x112xf32>
    %98 = vector.broadcast %96 : vector<1x112xf32> to vector<6x112xf32>
    %99 = arith.mulf %97, %98 : vector<6x112xf32>
    %100 = arith.addf %89, %99 : vector<6x112xf32>
    %c0_46 = arith.constant 0 : index
    %c9 = arith.constant 9 : index
    %101 = vector.load %arg1[%c0_46, %c9] : memref<6x32xf32, #tpu.memory_space<vmem>>, vector<6x1xf32>
    %c9_47 = arith.constant 9 : index
    %c0_48 = arith.constant 0 : index
    %102 = vector.load %arg2[%c9_47, %c0_48] : memref<32x112xf32, #tpu.memory_space<vmem>>, vector<1x112xf32>
    %103 = vector.broadcast %101 : vector<6x1xf32> to vector<6x112xf32>
    %104 = vector.broadcast %102 : vector<1x112xf32> to vector<6x112xf32>
    %105 = arith.mulf %103, %104 : vector<6x112xf32>
    %106 = arith.addf %95, %105 : vector<6x112xf32>
    %c9_49 = arith.constant 9 : index
    %c0_50 = arith.constant 0 : index
    %107 = vector.load %arg3[%c9_49, %c0_50] : memref<32x112xf32, #tpu.memory_space<vmem>>, vector<1x112xf32>
    %108 = vector.broadcast %101 : vector<6x1xf32> to vector<6x112xf32>
    %109 = vector.broadcast %107 : vector<1x112xf32> to vector<6x112xf32>
    %110 = arith.mulf %108, %109 : vector<6x112xf32>
    %111 = arith.addf %100, %110 : vector<6x112xf32>
    %c0_51 = arith.constant 0 : index
    %c10 = arith.constant 10 : index
    %112 = vector.load %arg1[%c0_51, %c10] : memref<6x32xf32, #tpu.memory_space<vmem>>, vector<6x1xf32>
    %c10_52 = arith.constant 10 : index
    %c0_53 = arith.constant 0 : index
    %113 = vector.load %arg2[%c10_52, %c0_53] : memref<32x112xf32, #tpu.memory_space<vmem>>, vector<1x112xf32>
    %114 = vector.broadcast %112 : vector<6x1xf32> to vector<6x112xf32>
    %115 = vector.broadcast %113 : vector<1x112xf32> to vector<6x112xf32>
    %116 = arith.mulf %114, %115 : vector<6x112xf32>
    %117 = arith.addf %106, %116 : vector<6x112xf32>
    %c10_54 = arith.constant 10 : index
    %c0_55 = arith.constant 0 : index
    %118 = vector.load %arg3[%c10_54, %c0_55] : memref<32x112xf32, #tpu.memory_space<vmem>>, vector<1x112xf32>
    %119 = vector.broadcast %112 : vector<6x1xf32> to vector<6x112xf32>
    %120 = vector.broadcast %118 : vector<1x112xf32> to vector<6x112xf32>
    %121 = arith.mulf %119, %120 : vector<6x112xf32>
    %122 = arith.addf %111, %121 : vector<6x112xf32>
    %c0_56 = arith.constant 0 : index
    %c11 = arith.constant 11 : index
    %123 = vector.load %arg1[%c0_56, %c11] : memref<6x32xf32, #tpu.memory_space<vmem>>, vector<6x1xf32>
    %c11_57 = arith.constant 11 : index
    %c0_58 = arith.constant 0 : index
    %124 = vector.load %arg2[%c11_57, %c0_58] : memref<32x112xf32, #tpu.memory_space<vmem>>, vector<1x112xf32>
    %125 = vector.broadcast %123 : vector<6x1xf32> to vector<6x112xf32>
    %126 = vector.broadcast %124 : vector<1x112xf32> to vector<6x112xf32>
    %127 = arith.mulf %125, %126 : vector<6x112xf32>
    %128 = arith.addf %117, %127 : vector<6x112xf32>
    %c11_59 = arith.constant 11 : index
    %c0_60 = arith.constant 0 : index
    %129 = vector.load %arg3[%c11_59, %c0_60] : memref<32x112xf32, #tpu.memory_space<vmem>>, vector<1x112xf32>
    %130 = vector.broadcast %123 : vector<6x1xf32> to vector<6x112xf32>
    %131 = vector.broadcast %129 : vector<1x112xf32> to vector<6x112xf32>
    %132 = arith.mulf %130, %131 : vector<6x112xf32>
    %133 = arith.addf %122, %132 : vector<6x112xf32>
    %c0_61 = arith.constant 0 : index
    %c12 = arith.constant 12 : index
    %134 = vector.load %arg1[%c0_61, %c12] : memref<6x32xf32, #tpu.memory_space<vmem>>, vector<6x1xf32>
    %c12_62 = arith.constant 12 : index
    %c0_63 = arith.constant 0 : index
    %135 = vector.load %arg2[%c12_62, %c0_63] : memref<32x112xf32, #tpu.memory_space<vmem>>, vector<1x112xf32>
    %136 = vector.broadcast %134 : vector<6x1xf32> to vector<6x112xf32>
    %137 = vector.broadcast %135 : vector<1x112xf32> to vector<6x112xf32>
    %138 = arith.mulf %136, %137 : vector<6x112xf32>
    %139 = arith.addf %128, %138 : vector<6x112xf32>
    %c12_64 = arith.constant 12 : index
    %c0_65 = arith.constant 0 : index
    %140 = vector.load %arg3[%c12_64, %c0_65] : memref<32x112xf32, #tpu.memory_space<vmem>>, vector<1x112xf32>
    %141 = vector.broadcast %134 : vector<6x1xf32> to vector<6x112xf32>
    %142 = vector.broadcast %140 : vector<1x112xf32> to vector<6x112xf32>
    %143 = arith.mulf %141, %142 : vector<6x112xf32>
    %144 = arith.addf %133, %143 : vector<6x112xf32>
    %c0_66 = arith.constant 0 : index
    %c13 = arith.constant 13 : index
    %145 = vector.load %arg1[%c0_66, %c13] : memref<6x32xf32, #tpu.memory_space<vmem>>, vector<6x1xf32>
    %c13_67 = arith.constant 13 : index
    %c0_68 = arith.constant 0 : index
    %146 = vector.load %arg2[%c13_67, %c0_68] : memref<32x112xf32, #tpu.memory_space<vmem>>, vector<1x112xf32>
    %147 = vector.broadcast %145 : vector<6x1xf32> to vector<6x112xf32>
    %148 = vector.broadcast %146 : vector<1x112xf32> to vector<6x112xf32>
    %149 = arith.mulf %147, %148 : vector<6x112xf32>
    %150 = arith.addf %139, %149 : vector<6x112xf32>
    %c13_69 = arith.constant 13 : index
    %c0_70 = arith.constant 0 : index
    %151 = vector.load %arg3[%c13_69, %c0_70] : memref<32x112xf32, #tpu.memory_space<vmem>>, vector<1x112xf32>
    %152 = vector.broadcast %145 : vector<6x1xf32> to vector<6x112xf32>
    %153 = vector.broadcast %151 : vector<1x112xf32> to vector<6x112xf32>
    %154 = arith.mulf %152, %153 : vector<6x112xf32>
    %155 = arith.addf %144, %154 : vector<6x112xf32>
    %c0_71 = arith.constant 0 : index
    %c14 = arith.constant 14 : index
    %156 = vector.load %arg1[%c0_71, %c14] : memref<6x32xf32, #tpu.memory_space<vmem>>, vector<6x1xf32>
    %c14_72 = arith.constant 14 : index
    %c0_73 = arith.constant 0 : index
    %157 = vector.load %arg2[%c14_72, %c0_73] : memref<32x112xf32, #tpu.memory_space<vmem>>, vector<1x112xf32>
    %158 = vector.broadcast %156 : vector<6x1xf32> to vector<6x112xf32>
    %159 = vector.broadcast %157 : vector<1x112xf32> to vector<6x112xf32>
    %160 = arith.mulf %158, %159 : vector<6x112xf32>
    %161 = arith.addf %150, %160 : vector<6x112xf32>
    %c14_74 = arith.constant 14 : index
    %c0_75 = arith.constant 0 : index
    %162 = vector.load %arg3[%c14_74, %c0_75] : memref<32x112xf32, #tpu.memory_space<vmem>>, vector<1x112xf32>
    %163 = vector.broadcast %156 : vector<6x1xf32> to vector<6x112xf32>
    %164 = vector.broadcast %162 : vector<1x112xf32> to vector<6x112xf32>
    %165 = arith.mulf %163, %164 : vector<6x112xf32>
    %166 = arith.addf %155, %165 : vector<6x112xf32>
    %c0_76 = arith.constant 0 : index
    %c15 = arith.constant 15 : index
    %167 = vector.load %arg1[%c0_76, %c15] : memref<6x32xf32, #tpu.memory_space<vmem>>, vector<6x1xf32>
    %c15_77 = arith.constant 15 : index
    %c0_78 = arith.constant 0 : index
    %168 = vector.load %arg2[%c15_77, %c0_78] : memref<32x112xf32, #tpu.memory_space<vmem>>, vector<1x112xf32>
    %169 = vector.broadcast %167 : vector<6x1xf32> to vector<6x112xf32>
    %170 = vector.broadcast %168 : vector<1x112xf32> to vector<6x112xf32>
    %171 = arith.mulf %169, %170 : vector<6x112xf32>
    %172 = arith.addf %161, %171 : vector<6x112xf32>
    %c15_79 = arith.constant 15 : index
    %c0_80 = arith.constant 0 : index
    %173 = vector.load %arg3[%c15_79, %c0_80] : memref<32x112xf32, #tpu.memory_space<vmem>>, vector<1x112xf32>
    %174 = vector.broadcast %167 : vector<6x1xf32> to vector<6x112xf32>
    %175 = vector.broadcast %173 : vector<1x112xf32> to vector<6x112xf32>
    %176 = arith.mulf %174, %175 : vector<6x112xf32>
    %177 = arith.addf %166, %176 : vector<6x112xf32>
    %c0_81 = arith.constant 0 : index
    %c16 = arith.constant 16 : index
    %178 = vector.load %arg1[%c0_81, %c16] : memref<6x32xf32, #tpu.memory_space<vmem>>, vector<6x1xf32>
    %c16_82 = arith.constant 16 : index
    %c0_83 = arith.constant 0 : index
    %179 = vector.load %arg2[%c16_82, %c0_83] : memref<32x112xf32, #tpu.memory_space<vmem>>, vector<1x112xf32>
    %180 = vector.broadcast %178 : vector<6x1xf32> to vector<6x112xf32>
    %181 = vector.broadcast %179 : vector<1x112xf32> to vector<6x112xf32>
    %182 = arith.mulf %180, %181 : vector<6x112xf32>
    %183 = arith.addf %172, %182 : vector<6x112xf32>
    %c16_84 = arith.constant 16 : index
    %c0_85 = arith.constant 0 : index
    %184 = vector.load %arg3[%c16_84, %c0_85] : memref<32x112xf32, #tpu.memory_space<vmem>>, vector<1x112xf32>
    %185 = vector.broadcast %178 : vector<6x1xf32> to vector<6x112xf32>
    %186 = vector.broadcast %184 : vector<1x112xf32> to vector<6x112xf32>
    %187 = arith.mulf %185, %186 : vector<6x112xf32>
    %188 = arith.addf %177, %187 : vector<6x112xf32>
    %c0_86 = arith.constant 0 : index
    %c17 = arith.constant 17 : index
    %189 = vector.load %arg1[%c0_86, %c17] : memref<6x32xf32, #tpu.memory_space<vmem>>, vector<6x1xf32>
    %c17_87 = arith.constant 17 : index
    %c0_88 = arith.constant 0 : index
    %190 = vector.load %arg2[%c17_87, %c0_88] : memref<32x112xf32, #tpu.memory_space<vmem>>, vector<1x112xf32>
    %191 = vector.broadcast %189 : vector<6x1xf32> to vector<6x112xf32>
    %192 = vector.broadcast %190 : vector<1x112xf32> to vector<6x112xf32>
    %193 = arith.mulf %191, %192 : vector<6x112xf32>
    %194 = arith.addf %183, %193 : vector<6x112xf32>
    %c17_89 = arith.constant 17 : index
    %c0_90 = arith.constant 0 : index
    %195 = vector.load %arg3[%c17_89, %c0_90] : memref<32x112xf32, #tpu.memory_space<vmem>>, vector<1x112xf32>
    %196 = vector.broadcast %189 : vector<6x1xf32> to vector<6x112xf32>
    %197 = vector.broadcast %195 : vector<1x112xf32> to vector<6x112xf32>
    %198 = arith.mulf %196, %197 : vector<6x112xf32>
    %199 = arith.addf %188, %198 : vector<6x112xf32>
    %c0_91 = arith.constant 0 : index
    %c18 = arith.constant 18 : index
    %200 = vector.load %arg1[%c0_91, %c18] : memref<6x32xf32, #tpu.memory_space<vmem>>, vector<6x1xf32>
    %c18_92 = arith.constant 18 : index
    %c0_93 = arith.constant 0 : index
    %201 = vector.load %arg2[%c18_92, %c0_93] : memref<32x112xf32, #tpu.memory_space<vmem>>, vector<1x112xf32>
    %202 = vector.broadcast %200 : vector<6x1xf32> to vector<6x112xf32>
    %203 = vector.broadcast %201 : vector<1x112xf32> to vector<6x112xf32>
    %204 = arith.mulf %202, %203 : vector<6x112xf32>
    %205 = arith.addf %194, %204 : vector<6x112xf32>
    %c18_94 = arith.constant 18 : index
    %c0_95 = arith.constant 0 : index
    %206 = vector.load %arg3[%c18_94, %c0_95] : memref<32x112xf32, #tpu.memory_space<vmem>>, vector<1x112xf32>
    %207 = vector.broadcast %200 : vector<6x1xf32> to vector<6x112xf32>
    %208 = vector.broadcast %206 : vector<1x112xf32> to vector<6x112xf32>
    %209 = arith.mulf %207, %208 : vector<6x112xf32>
    %210 = arith.addf %199, %209 : vector<6x112xf32>
    %c0_96 = arith.constant 0 : index
    %c19 = arith.constant 19 : index
    %211 = vector.load %arg1[%c0_96, %c19] : memref<6x32xf32, #tpu.memory_space<vmem>>, vector<6x1xf32>
    %c19_97 = arith.constant 19 : index
    %c0_98 = arith.constant 0 : index
    %212 = vector.load %arg2[%c19_97, %c0_98] : memref<32x112xf32, #tpu.memory_space<vmem>>, vector<1x112xf32>
    %213 = vector.broadcast %211 : vector<6x1xf32> to vector<6x112xf32>
    %214 = vector.broadcast %212 : vector<1x112xf32> to vector<6x112xf32>
    %215 = arith.mulf %213, %214 : vector<6x112xf32>
    %216 = arith.addf %205, %215 : vector<6x112xf32>
    %c19_99 = arith.constant 19 : index
    %c0_100 = arith.constant 0 : index
    %217 = vector.load %arg3[%c19_99, %c0_100] : memref<32x112xf32, #tpu.memory_space<vmem>>, vector<1x112xf32>
    %218 = vector.broadcast %211 : vector<6x1xf32> to vector<6x112xf32>
    %219 = vector.broadcast %217 : vector<1x112xf32> to vector<6x112xf32>
    %220 = arith.mulf %218, %219 : vector<6x112xf32>
    %221 = arith.addf %210, %220 : vector<6x112xf32>
    %c0_101 = arith.constant 0 : index
    %c20 = arith.constant 20 : index
    %222 = vector.load %arg1[%c0_101, %c20] : memref<6x32xf32, #tpu.memory_space<vmem>>, vector<6x1xf32>
    %c20_102 = arith.constant 20 : index
    %c0_103 = arith.constant 0 : index
    %223 = vector.load %arg2[%c20_102, %c0_103] : memref<32x112xf32, #tpu.memory_space<vmem>>, vector<1x112xf32>
    %224 = vector.broadcast %222 : vector<6x1xf32> to vector<6x112xf32>
    %225 = vector.broadcast %223 : vector<1x112xf32> to vector<6x112xf32>
    %226 = arith.mulf %224, %225 : vector<6x112xf32>
    %227 = arith.addf %216, %226 : vector<6x112xf32>
    %c20_104 = arith.constant 20 : index
    %c0_105 = arith.constant 0 : index
    %228 = vector.load %arg3[%c20_104, %c0_105] : memref<32x112xf32, #tpu.memory_space<vmem>>, vector<1x112xf32>
    %229 = vector.broadcast %222 : vector<6x1xf32> to vector<6x112xf32>
    %230 = vector.broadcast %228 : vector<1x112xf32> to vector<6x112xf32>
    %231 = arith.mulf %229, %230 : vector<6x112xf32>
    %232 = arith.addf %221, %231 : vector<6x112xf32>
    %c0_106 = arith.constant 0 : index
    %c21 = arith.constant 21 : index
    %233 = vector.load %arg1[%c0_106, %c21] : memref<6x32xf32, #tpu.memory_space<vmem>>, vector<6x1xf32>
    %c21_107 = arith.constant 21 : index
    %c0_108 = arith.constant 0 : index
    %234 = vector.load %arg2[%c21_107, %c0_108] : memref<32x112xf32, #tpu.memory_space<vmem>>, vector<1x112xf32>
    %235 = vector.broadcast %233 : vector<6x1xf32> to vector<6x112xf32>
    %236 = vector.broadcast %234 : vector<1x112xf32> to vector<6x112xf32>
    %237 = arith.mulf %235, %236 : vector<6x112xf32>
    %238 = arith.addf %227, %237 : vector<6x112xf32>
    %c21_109 = arith.constant 21 : index
    %c0_110 = arith.constant 0 : index
    %239 = vector.load %arg3[%c21_109, %c0_110] : memref<32x112xf32, #tpu.memory_space<vmem>>, vector<1x112xf32>
    %240 = vector.broadcast %233 : vector<6x1xf32> to vector<6x112xf32>
    %241 = vector.broadcast %239 : vector<1x112xf32> to vector<6x112xf32>
    %242 = arith.mulf %240, %241 : vector<6x112xf32>
    %243 = arith.addf %232, %242 : vector<6x112xf32>
    %c0_111 = arith.constant 0 : index
    %c22 = arith.constant 22 : index
    %244 = vector.load %arg1[%c0_111, %c22] : memref<6x32xf32, #tpu.memory_space<vmem>>, vector<6x1xf32>
    %c22_112 = arith.constant 22 : index
    %c0_113 = arith.constant 0 : index
    %245 = vector.load %arg2[%c22_112, %c0_113] : memref<32x112xf32, #tpu.memory_space<vmem>>, vector<1x112xf32>
    %246 = vector.broadcast %244 : vector<6x1xf32> to vector<6x112xf32>
    %247 = vector.broadcast %245 : vector<1x112xf32> to vector<6x112xf32>
    %248 = arith.mulf %246, %247 : vector<6x112xf32>
    %249 = arith.addf %238, %248 : vector<6x112xf32>
    %c22_114 = arith.constant 22 : index
    %c0_115 = arith.constant 0 : index
    %250 = vector.load %arg3[%c22_114, %c0_115] : memref<32x112xf32, #tpu.memory_space<vmem>>, vector<1x112xf32>
    %251 = vector.broadcast %244 : vector<6x1xf32> to vector<6x112xf32>
    %252 = vector.broadcast %250 : vector<1x112xf32> to vector<6x112xf32>
    %253 = arith.mulf %251, %252 : vector<6x112xf32>
    %254 = arith.addf %243, %253 : vector<6x112xf32>
    %c0_116 = arith.constant 0 : index
    %c23 = arith.constant 23 : index
    %255 = vector.load %arg1[%c0_116, %c23] : memref<6x32xf32, #tpu.memory_space<vmem>>, vector<6x1xf32>
    %c23_117 = arith.constant 23 : index
    %c0_118 = arith.constant 0 : index
    %256 = vector.load %arg2[%c23_117, %c0_118] : memref<32x112xf32, #tpu.memory_space<vmem>>, vector<1x112xf32>
    %257 = vector.broadcast %255 : vector<6x1xf32> to vector<6x112xf32>
    %258 = vector.broadcast %256 : vector<1x112xf32> to vector<6x112xf32>
    %259 = arith.mulf %257, %258 : vector<6x112xf32>
    %260 = arith.addf %249, %259 : vector<6x112xf32>
    %c23_119 = arith.constant 23 : index
    %c0_120 = arith.constant 0 : index
    %261 = vector.load %arg3[%c23_119, %c0_120] : memref<32x112xf32, #tpu.memory_space<vmem>>, vector<1x112xf32>
    %262 = vector.broadcast %255 : vector<6x1xf32> to vector<6x112xf32>
    %263 = vector.broadcast %261 : vector<1x112xf32> to vector<6x112xf32>
    %264 = arith.mulf %262, %263 : vector<6x112xf32>
    %265 = arith.addf %254, %264 : vector<6x112xf32>
    %c0_121 = arith.constant 0 : index
    %c24 = arith.constant 24 : index
    %266 = vector.load %arg1[%c0_121, %c24] : memref<6x32xf32, #tpu.memory_space<vmem>>, vector<6x1xf32>
    %c24_122 = arith.constant 24 : index
    %c0_123 = arith.constant 0 : index
    %267 = vector.load %arg2[%c24_122, %c0_123] : memref<32x112xf32, #tpu.memory_space<vmem>>, vector<1x112xf32>
    %268 = vector.broadcast %266 : vector<6x1xf32> to vector<6x112xf32>
    %269 = vector.broadcast %267 : vector<1x112xf32> to vector<6x112xf32>
    %270 = arith.mulf %268, %269 : vector<6x112xf32>
    %271 = arith.addf %260, %270 : vector<6x112xf32>
    %c24_124 = arith.constant 24 : index
    %c0_125 = arith.constant 0 : index
    %272 = vector.load %arg3[%c24_124, %c0_125] : memref<32x112xf32, #tpu.memory_space<vmem>>, vector<1x112xf32>
    %273 = vector.broadcast %266 : vector<6x1xf32> to vector<6x112xf32>
    %274 = vector.broadcast %272 : vector<1x112xf32> to vector<6x112xf32>
    %275 = arith.mulf %273, %274 : vector<6x112xf32>
    %276 = arith.addf %265, %275 : vector<6x112xf32>
    %c0_126 = arith.constant 0 : index
    %c25 = arith.constant 25 : index
    %277 = vector.load %arg1[%c0_126, %c25] : memref<6x32xf32, #tpu.memory_space<vmem>>, vector<6x1xf32>
    %c25_127 = arith.constant 25 : index
    %c0_128 = arith.constant 0 : index
    %278 = vector.load %arg2[%c25_127, %c0_128] : memref<32x112xf32, #tpu.memory_space<vmem>>, vector<1x112xf32>
    %279 = vector.broadcast %277 : vector<6x1xf32> to vector<6x112xf32>
    %280 = vector.broadcast %278 : vector<1x112xf32> to vector<6x112xf32>
    %281 = arith.mulf %279, %280 : vector<6x112xf32>
    %282 = arith.addf %271, %281 : vector<6x112xf32>
    %c25_129 = arith.constant 25 : index
    %c0_130 = arith.constant 0 : index
    %283 = vector.load %arg3[%c25_129, %c0_130] : memref<32x112xf32, #tpu.memory_space<vmem>>, vector<1x112xf32>
    %284 = vector.broadcast %277 : vector<6x1xf32> to vector<6x112xf32>
    %285 = vector.broadcast %283 : vector<1x112xf32> to vector<6x112xf32>
    %286 = arith.mulf %284, %285 : vector<6x112xf32>
    %287 = arith.addf %276, %286 : vector<6x112xf32>
    %c0_131 = arith.constant 0 : index
    %c26 = arith.constant 26 : index
    %288 = vector.load %arg1[%c0_131, %c26] : memref<6x32xf32, #tpu.memory_space<vmem>>, vector<6x1xf32>
    %c26_132 = arith.constant 26 : index
    %c0_133 = arith.constant 0 : index
    %289 = vector.load %arg2[%c26_132, %c0_133] : memref<32x112xf32, #tpu.memory_space<vmem>>, vector<1x112xf32>
    %290 = vector.broadcast %288 : vector<6x1xf32> to vector<6x112xf32>
    %291 = vector.broadcast %289 : vector<1x112xf32> to vector<6x112xf32>
    %292 = arith.mulf %290, %291 : vector<6x112xf32>
    %293 = arith.addf %282, %292 : vector<6x112xf32>
    %c26_134 = arith.constant 26 : index
    %c0_135 = arith.constant 0 : index
    %294 = vector.load %arg3[%c26_134, %c0_135] : memref<32x112xf32, #tpu.memory_space<vmem>>, vector<1x112xf32>
    %295 = vector.broadcast %288 : vector<6x1xf32> to vector<6x112xf32>
    %296 = vector.broadcast %294 : vector<1x112xf32> to vector<6x112xf32>
    %297 = arith.mulf %295, %296 : vector<6x112xf32>
    %298 = arith.addf %287, %297 : vector<6x112xf32>
    %c0_136 = arith.constant 0 : index
    %c27 = arith.constant 27 : index
    %299 = vector.load %arg1[%c0_136, %c27] : memref<6x32xf32, #tpu.memory_space<vmem>>, vector<6x1xf32>
    %c27_137 = arith.constant 27 : index
    %c0_138 = arith.constant 0 : index
    %300 = vector.load %arg2[%c27_137, %c0_138] : memref<32x112xf32, #tpu.memory_space<vmem>>, vector<1x112xf32>
    %301 = vector.broadcast %299 : vector<6x1xf32> to vector<6x112xf32>
    %302 = vector.broadcast %300 : vector<1x112xf32> to vector<6x112xf32>
    %303 = arith.mulf %301, %302 : vector<6x112xf32>
    %304 = arith.addf %293, %303 : vector<6x112xf32>
    %c27_139 = arith.constant 27 : index
    %c0_140 = arith.constant 0 : index
    %305 = vector.load %arg3[%c27_139, %c0_140] : memref<32x112xf32, #tpu.memory_space<vmem>>, vector<1x112xf32>
    %306 = vector.broadcast %299 : vector<6x1xf32> to vector<6x112xf32>
    %307 = vector.broadcast %305 : vector<1x112xf32> to vector<6x112xf32>
    %308 = arith.mulf %306, %307 : vector<6x112xf32>
    %309 = arith.addf %298, %308 : vector<6x112xf32>
    %c0_141 = arith.constant 0 : index
    %c28 = arith.constant 28 : index
    %310 = vector.load %arg1[%c0_141, %c28] : memref<6x32xf32, #tpu.memory_space<vmem>>, vector<6x1xf32>
    %c28_142 = arith.constant 28 : index
    %c0_143 = arith.constant 0 : index
    %311 = vector.load %arg2[%c28_142, %c0_143] : memref<32x112xf32, #tpu.memory_space<vmem>>, vector<1x112xf32>
    %312 = vector.broadcast %310 : vector<6x1xf32> to vector<6x112xf32>
    %313 = vector.broadcast %311 : vector<1x112xf32> to vector<6x112xf32>
    %314 = arith.mulf %312, %313 : vector<6x112xf32>
    %315 = arith.addf %304, %314 : vector<6x112xf32>
    %c28_144 = arith.constant 28 : index
    %c0_145 = arith.constant 0 : index
    %316 = vector.load %arg3[%c28_144, %c0_145] : memref<32x112xf32, #tpu.memory_space<vmem>>, vector<1x112xf32>
    %317 = vector.broadcast %310 : vector<6x1xf32> to vector<6x112xf32>
    %318 = vector.broadcast %316 : vector<1x112xf32> to vector<6x112xf32>
    %319 = arith.mulf %317, %318 : vector<6x112xf32>
    %320 = arith.addf %309, %319 : vector<6x112xf32>
    %c0_146 = arith.constant 0 : index
    %c29 = arith.constant 29 : index
    %321 = vector.load %arg1[%c0_146, %c29] : memref<6x32xf32, #tpu.memory_space<vmem>>, vector<6x1xf32>
    %c29_147 = arith.constant 29 : index
    %c0_148 = arith.constant 0 : index
    %322 = vector.load %arg2[%c29_147, %c0_148] : memref<32x112xf32, #tpu.memory_space<vmem>>, vector<1x112xf32>
    %323 = vector.broadcast %321 : vector<6x1xf32> to vector<6x112xf32>
    %324 = vector.broadcast %322 : vector<1x112xf32> to vector<6x112xf32>
    %325 = arith.mulf %323, %324 : vector<6x112xf32>
    %326 = arith.addf %315, %325 : vector<6x112xf32>
    %c29_149 = arith.constant 29 : index
    %c0_150 = arith.constant 0 : index
    %327 = vector.load %arg3[%c29_149, %c0_150] : memref<32x112xf32, #tpu.memory_space<vmem>>, vector<1x112xf32>
    %328 = vector.broadcast %321 : vector<6x1xf32> to vector<6x112xf32>
    %329 = vector.broadcast %327 : vector<1x112xf32> to vector<6x112xf32>
    %330 = arith.mulf %328, %329 : vector<6x112xf32>
    %331 = arith.addf %320, %330 : vector<6x112xf32>
    %c0_151 = arith.constant 0 : index
    %c30 = arith.constant 30 : index
    %332 = vector.load %arg1[%c0_151, %c30] : memref<6x32xf32, #tpu.memory_space<vmem>>, vector<6x1xf32>
    %c30_152 = arith.constant 30 : index
    %c0_153 = arith.constant 0 : index
    %333 = vector.load %arg2[%c30_152, %c0_153] : memref<32x112xf32, #tpu.memory_space<vmem>>, vector<1x112xf32>
    %334 = vector.broadcast %332 : vector<6x1xf32> to vector<6x112xf32>
    %335 = vector.broadcast %333 : vector<1x112xf32> to vector<6x112xf32>
    %336 = arith.mulf %334, %335 : vector<6x112xf32>
    %337 = arith.addf %326, %336 : vector<6x112xf32>
    %c30_154 = arith.constant 30 : index
    %c0_155 = arith.constant 0 : index
    %338 = vector.load %arg3[%c30_154, %c0_155] : memref<32x112xf32, #tpu.memory_space<vmem>>, vector<1x112xf32>
    %339 = vector.broadcast %332 : vector<6x1xf32> to vector<6x112xf32>
    %340 = vector.broadcast %338 : vector<1x112xf32> to vector<6x112xf32>
    %341 = arith.mulf %339, %340 : vector<6x112xf32>
    %342 = arith.addf %331, %341 : vector<6x112xf32>
    %c0_156 = arith.constant 0 : index
    %c31 = arith.constant 31 : index
    %343 = vector.load %arg1[%c0_156, %c31] : memref<6x32xf32, #tpu.memory_space<vmem>>, vector<6x1xf32>
    %c31_157 = arith.constant 31 : index
    %c0_158 = arith.constant 0 : index
    %344 = vector.load %arg2[%c31_157, %c0_158] : memref<32x112xf32, #tpu.memory_space<vmem>>, vector<1x112xf32>
    %345 = vector.broadcast %343 : vector<6x1xf32> to vector<6x112xf32>
    %346 = vector.broadcast %344 : vector<1x112xf32> to vector<6x112xf32>
    %347 = arith.mulf %345, %346 : vector<6x112xf32>
    %348 = arith.addf %337, %347 : vector<6x112xf32>
    %c31_159 = arith.constant 31 : index
    %c0_160 = arith.constant 0 : index
    %349 = vector.load %arg3[%c31_159, %c0_160] : memref<32x112xf32, #tpu.memory_space<vmem>>, vector<1x112xf32>
    %350 = vector.broadcast %343 : vector<6x1xf32> to vector<6x112xf32>
    %351 = vector.broadcast %349 : vector<1x112xf32> to vector<6x112xf32>
    %352 = arith.mulf %350, %351 : vector<6x112xf32>
    %353 = arith.addf %342, %352 : vector<6x112xf32>
    %354 = vector.extract_strided_slice %348 {offsets = [0, 0], sizes = [1, 112], strides = [1, 1]} : vector<6x112xf32> to vector<1x112xf32>
    %cst_161 = arith.constant 0.0174532924 : f32
    %355 = vector.broadcast %cst_161 : f32 to vector<1x112xf32>
    %356 = arith.mulf %354, %355 : vector<1x112xf32>
    %357 = vector.extract_strided_slice %348 {offsets = [1, 0], sizes = [1, 112], strides = [1, 1]} : vector<6x112xf32> to vector<1x112xf32>
    %cst_162 = arith.constant 0.0174532924 : f32
    %358 = vector.broadcast %cst_162 : f32 to vector<1x112xf32>
    %359 = arith.mulf %357, %358 : vector<1x112xf32>
    %360 = vector.extract_strided_slice %348 {offsets = [2, 0], sizes = [1, 112], strides = [1, 1]} : vector<6x112xf32> to vector<1x112xf32>
    %cst_163 = arith.constant 0.0174532924 : f32
    %361 = vector.broadcast %cst_163 : f32 to vector<1x112xf32>
    %362 = arith.mulf %360, %361 : vector<1x112xf32>
    %363 = math.sin %356 : vector<1x112xf32>
    %364 = math.sin %359 : vector<1x112xf32>
    %365 = math.sin %362 : vector<1x112xf32>
    %366 = math.cos %356 : vector<1x112xf32>
    %367 = math.cos %359 : vector<1x112xf32>
    %368 = math.cos %362 : vector<1x112xf32>
    %369 = arith.mulf %368, %367 : vector<1x112xf32>
    %370 = arith.mulf %365, %367 : vector<1x112xf32>
    %cst_164 = arith.constant 0.000000e+00 : f32
    %371 = vector.broadcast %cst_164 : f32 to vector<1x112xf32>
    %372 = arith.subf %371, %364 : vector<1x112xf32>
    %373 = arith.mulf %368, %364 : vector<1x112xf32>
    %374 = arith.mulf %373, %363 : vector<1x112xf32>
    %375 = arith.mulf %365, %366 : vector<1x112xf32>
    %376 = arith.subf %374, %375 : vector<1x112xf32>
    %377 = arith.mulf %365, %364 : vector<1x112xf32>
    %378 = arith.mulf %377, %363 : vector<1x112xf32>
    %379 = arith.mulf %368, %366 : vector<1x112xf32>
    %380 = arith.addf %378, %379 : vector<1x112xf32>
    %381 = arith.mulf %367, %363 : vector<1x112xf32>
    %382 = arith.mulf %368, %364 : vector<1x112xf32>
    %383 = arith.mulf %382, %366 : vector<1x112xf32>
    %384 = arith.mulf %365, %363 : vector<1x112xf32>
    %385 = arith.addf %383, %384 : vector<1x112xf32>
    %386 = arith.mulf %365, %364 : vector<1x112xf32>
    %387 = arith.mulf %386, %366 : vector<1x112xf32>
    %388 = arith.mulf %368, %363 : vector<1x112xf32>
    %389 = arith.subf %387, %388 : vector<1x112xf32>
    %390 = arith.mulf %367, %366 : vector<1x112xf32>
    %391 = vector.extract_strided_slice %353 {offsets = [0, 0], sizes = [1, 112], strides = [1, 1]} : vector<6x112xf32> to vector<1x112xf32>
    %cst_165 = arith.constant 0.0174532924 : f32
    %392 = vector.broadcast %cst_165 : f32 to vector<1x112xf32>
    %393 = arith.mulf %391, %392 : vector<1x112xf32>
    %394 = vector.extract_strided_slice %353 {offsets = [1, 0], sizes = [1, 112], strides = [1, 1]} : vector<6x112xf32> to vector<1x112xf32>
    %cst_166 = arith.constant 0.0174532924 : f32
    %395 = vector.broadcast %cst_166 : f32 to vector<1x112xf32>
    %396 = arith.mulf %394, %395 : vector<1x112xf32>
    %397 = vector.extract_strided_slice %353 {offsets = [2, 0], sizes = [1, 112], strides = [1, 1]} : vector<6x112xf32> to vector<1x112xf32>
    %cst_167 = arith.constant 0.0174532924 : f32
    %398 = vector.broadcast %cst_167 : f32 to vector<1x112xf32>
    %399 = arith.mulf %397, %398 : vector<1x112xf32>
    %400 = math.sin %393 : vector<1x112xf32>
    %401 = math.sin %396 : vector<1x112xf32>
    %402 = math.sin %399 : vector<1x112xf32>
    %403 = math.cos %393 : vector<1x112xf32>
    %404 = math.cos %396 : vector<1x112xf32>
    %405 = math.cos %399 : vector<1x112xf32>
    %406 = arith.mulf %405, %404 : vector<1x112xf32>
    %407 = arith.mulf %402, %404 : vector<1x112xf32>
    %cst_168 = arith.constant 0.000000e+00 : f32
    %408 = vector.broadcast %cst_168 : f32 to vector<1x112xf32>
    %409 = arith.subf %408, %401 : vector<1x112xf32>
    %410 = arith.mulf %405, %401 : vector<1x112xf32>
    %411 = arith.mulf %410, %400 : vector<1x112xf32>
    %412 = arith.mulf %402, %403 : vector<1x112xf32>
    %413 = arith.subf %411, %412 : vector<1x112xf32>
    %414 = arith.mulf %402, %401 : vector<1x112xf32>
    %415 = arith.mulf %414, %400 : vector<1x112xf32>
    %416 = arith.mulf %405, %403 : vector<1x112xf32>
    %417 = arith.addf %415, %416 : vector<1x112xf32>
    %418 = arith.mulf %404, %400 : vector<1x112xf32>
    %419 = arith.mulf %405, %401 : vector<1x112xf32>
    %420 = arith.mulf %419, %403 : vector<1x112xf32>
    %421 = arith.mulf %402, %400 : vector<1x112xf32>
    %422 = arith.addf %420, %421 : vector<1x112xf32>
    %423 = arith.mulf %402, %401 : vector<1x112xf32>
    %424 = arith.mulf %423, %403 : vector<1x112xf32>
    %425 = arith.mulf %405, %400 : vector<1x112xf32>
    %426 = arith.subf %424, %425 : vector<1x112xf32>
    %427 = arith.mulf %404, %403 : vector<1x112xf32>
    %428 = vector.extract_strided_slice %348 {offsets = [3, 0], sizes = [1, 112], strides = [1, 1]} : vector<6x112xf32> to vector<1x112xf32>
    %429 = vector.extract_strided_slice %348 {offsets = [4, 0], sizes = [1, 112], strides = [1, 1]} : vector<6x112xf32> to vector<1x112xf32>
    %430 = vector.extract_strided_slice %348 {offsets = [5, 0], sizes = [1, 112], strides = [1, 1]} : vector<6x112xf32> to vector<1x112xf32>
    %431 = vector.extract_strided_slice %353 {offsets = [3, 0], sizes = [1, 112], strides = [1, 1]} : vector<6x112xf32> to vector<1x112xf32>
    %432 = vector.extract_strided_slice %353 {offsets = [4, 0], sizes = [1, 112], strides = [1, 1]} : vector<6x112xf32> to vector<1x112xf32>
    %433 = vector.extract_strided_slice %353 {offsets = [5, 0], sizes = [1, 112], strides = [1, 1]} : vector<6x112xf32> to vector<1x112xf32>
    %434 = arith.mulf %369, %406 : vector<1x112xf32>
    %435 = arith.mulf %376, %413 : vector<1x112xf32>
    %436 = arith.addf %434, %435 : vector<1x112xf32>
    %437 = arith.mulf %385, %422 : vector<1x112xf32>
    %438 = arith.addf %436, %437 : vector<1x112xf32>
    %439 = arith.mulf %369, %407 : vector<1x112xf32>
    %440 = arith.mulf %376, %417 : vector<1x112xf32>
    %441 = arith.addf %439, %440 : vector<1x112xf32>
    %442 = arith.mulf %385, %426 : vector<1x112xf32>
    %443 = arith.addf %441, %442 : vector<1x112xf32>
    %444 = arith.mulf %369, %409 : vector<1x112xf32>
    %445 = arith.mulf %376, %418 : vector<1x112xf32>
    %446 = arith.addf %444, %445 : vector<1x112xf32>
    %447 = arith.mulf %385, %427 : vector<1x112xf32>
    %448 = arith.addf %446, %447 : vector<1x112xf32>
    %449 = arith.mulf %438, %431 : vector<1x112xf32>
    %450 = arith.subf %428, %449 : vector<1x112xf32>
    %451 = arith.mulf %443, %432 : vector<1x112xf32>
    %452 = arith.subf %450, %451 : vector<1x112xf32>
    %453 = arith.mulf %448, %433 : vector<1x112xf32>
    %454 = arith.subf %452, %453 : vector<1x112xf32>
    %455 = arith.mulf %370, %406 : vector<1x112xf32>
    %456 = arith.mulf %380, %413 : vector<1x112xf32>
    %457 = arith.addf %455, %456 : vector<1x112xf32>
    %458 = arith.mulf %389, %422 : vector<1x112xf32>
    %459 = arith.addf %457, %458 : vector<1x112xf32>
    %460 = arith.mulf %370, %407 : vector<1x112xf32>
    %461 = arith.mulf %380, %417 : vector<1x112xf32>
    %462 = arith.addf %460, %461 : vector<1x112xf32>
    %463 = arith.mulf %389, %426 : vector<1x112xf32>
    %464 = arith.addf %462, %463 : vector<1x112xf32>
    %465 = arith.mulf %370, %409 : vector<1x112xf32>
    %466 = arith.mulf %380, %418 : vector<1x112xf32>
    %467 = arith.addf %465, %466 : vector<1x112xf32>
    %468 = arith.mulf %389, %427 : vector<1x112xf32>
    %469 = arith.addf %467, %468 : vector<1x112xf32>
    %470 = arith.mulf %459, %431 : vector<1x112xf32>
    %471 = arith.subf %429, %470 : vector<1x112xf32>
    %472 = arith.mulf %464, %432 : vector<1x112xf32>
    %473 = arith.subf %471, %472 : vector<1x112xf32>
    %474 = arith.mulf %469, %433 : vector<1x112xf32>
    %475 = arith.subf %473, %474 : vector<1x112xf32>
    %476 = arith.mulf %372, %406 : vector<1x112xf32>
    %477 = arith.mulf %381, %413 : vector<1x112xf32>
    %478 = arith.addf %476, %477 : vector<1x112xf32>
    %479 = arith.mulf %390, %422 : vector<1x112xf32>
    %480 = arith.addf %478, %479 : vector<1x112xf32>
    %481 = arith.mulf %372, %407 : vector<1x112xf32>
    %482 = arith.mulf %381, %417 : vector<1x112xf32>
    %483 = arith.addf %481, %482 : vector<1x112xf32>
    %484 = arith.mulf %390, %426 : vector<1x112xf32>
    %485 = arith.addf %483, %484 : vector<1x112xf32>
    %486 = arith.mulf %372, %409 : vector<1x112xf32>
    %487 = arith.mulf %381, %418 : vector<1x112xf32>
    %488 = arith.addf %486, %487 : vector<1x112xf32>
    %489 = arith.mulf %390, %427 : vector<1x112xf32>
    %490 = arith.addf %488, %489 : vector<1x112xf32>
    %491 = arith.mulf %480, %431 : vector<1x112xf32>
    %492 = arith.subf %430, %491 : vector<1x112xf32>
    %493 = arith.mulf %485, %432 : vector<1x112xf32>
    %494 = arith.subf %492, %493 : vector<1x112xf32>
    %495 = arith.mulf %490, %433 : vector<1x112xf32>
    %496 = arith.subf %494, %495 : vector<1x112xf32>
    %497 = arith.addf %438, %464 : vector<1x112xf32>
    %498 = arith.addf %497, %490 : vector<1x112xf32>
    %cst_169 = arith.constant 1.000000e+00 : f32
    %499 = vector.broadcast %cst_169 : f32 to vector<1x112xf32>
    %500 = arith.subf %498, %499 : vector<1x112xf32>
    %cst_170 = arith.constant 5.000000e-01 : f32
    %501 = vector.broadcast %cst_170 : f32 to vector<1x112xf32>
    %502 = arith.mulf %500, %501 : vector<1x112xf32>
    %cst_171 = arith.constant -0.999998986 : f32
    %cst_172 = arith.constant 0.999998986 : f32
    %503 = vector.broadcast %cst_171 : f32 to vector<1x112xf32>
    %504 = arith.maximumf %503, %502 : vector<1x112xf32>
    %505 = vector.broadcast %cst_172 : f32 to vector<1x112xf32>
    %506 = arith.minimumf %505, %504 : vector<1x112xf32>
    %507 = math.absf %506 : vector<1x112xf32>
    %cst_173 = arith.constant 1.872930e-02 : f32
    %508 = vector.broadcast %cst_173 : f32 to vector<1x112xf32>
    %509 = arith.mulf %508, %507 : vector<1x112xf32>
    %cst_174 = arith.constant 7.426100e-02 : f32
    %510 = vector.broadcast %cst_174 : f32 to vector<1x112xf32>
    %511 = arith.subf %510, %509 : vector<1x112xf32>
    %512 = arith.mulf %507, %511 : vector<1x112xf32>
    %cst_175 = arith.constant -0.212114394 : f32
    %513 = vector.broadcast %cst_175 : f32 to vector<1x112xf32>
    %514 = arith.addf %513, %512 : vector<1x112xf32>
    %515 = arith.mulf %507, %514 : vector<1x112xf32>
    %cst_176 = arith.constant 1.57072878 : f32
    %516 = vector.broadcast %cst_176 : f32 to vector<1x112xf32>
    %517 = arith.addf %516, %515 : vector<1x112xf32>
    %cst_177 = arith.constant 1.000000e+00 : f32
    %518 = vector.broadcast %cst_177 : f32 to vector<1x112xf32>
    %519 = arith.subf %518, %507 : vector<1x112xf32>
    %cst_178 = arith.constant 0.000000e+00 : f32
    %520 = vector.broadcast %cst_178 : f32 to vector<1x112xf32>
    %521 = arith.maximumf %519, %520 : vector<1x112xf32>
    %522 = math.sqrt %521 : vector<1x112xf32>
    %523 = arith.mulf %522, %517 : vector<1x112xf32>
    %cst_179 = arith.constant 0.000000e+00 : f32
    %524 = vector.broadcast %cst_179 : f32 to vector<1x112xf32>
    %525 = arith.cmpf olt, %506, %524 : vector<1x112xf32>
    %cst_180 = arith.constant 3.14159274 : f32
    %526 = vector.broadcast %cst_180 : f32 to vector<1x112xf32>
    %527 = arith.subf %526, %523 : vector<1x112xf32>
    %528 = arith.select %525, %527, %523 : vector<1x112xi1>, vector<1x112xf32>
    %529 = math.cos %528 : vector<1x112xf32>
    %530 = arith.subf %529, %506 : vector<1x112xf32>
    %531 = math.sin %528 : vector<1x112xf32>
    %cst_181 = arith.constant 9.99999997E-7 : f32
    %532 = vector.broadcast %cst_181 : f32 to vector<1x112xf32>
    %533 = arith.maximumf %531, %532 : vector<1x112xf32>
    %534 = arith.divf %530, %533 : vector<1x112xf32>
    %535 = arith.addf %528, %534 : vector<1x112xf32>
    %cst_182 = arith.constant 9.99999997E-7 : f32
    %536 = vector.broadcast %cst_182 : f32 to vector<1x112xf32>
    %537 = arith.addf %535, %536 : vector<1x112xf32>
    %538 = math.sin %537 : vector<1x112xf32>
    %539 = math.cos %537 : vector<1x112xf32>
    %cst_183 = arith.constant 2.000000e+00 : f32
    %540 = vector.broadcast %cst_183 : f32 to vector<1x112xf32>
    %541 = arith.mulf %540, %538 : vector<1x112xf32>
    %542 = arith.divf %537, %541 : vector<1x112xf32>
    %543 = arith.subf %485, %469 : vector<1x112xf32>
    %544 = arith.mulf %542, %543 : vector<1x112xf32>
    %545 = arith.subf %448, %480 : vector<1x112xf32>
    %546 = arith.mulf %542, %545 : vector<1x112xf32>
    %547 = arith.subf %459, %443 : vector<1x112xf32>
    %548 = arith.mulf %542, %547 : vector<1x112xf32>
    %cst_184 = arith.constant 1.000000e+00 : f32
    %549 = vector.broadcast %cst_184 : f32 to vector<1x112xf32>
    %550 = arith.addf %549, %539 : vector<1x112xf32>
    %551 = arith.mulf %542, %550 : vector<1x112xf32>
    %cst_185 = arith.constant 1.000000e+00 : f32
    %552 = vector.broadcast %cst_185 : f32 to vector<1x112xf32>
    %553 = arith.subf %552, %551 : vector<1x112xf32>
    %554 = arith.mulf %537, %537 : vector<1x112xf32>
    %555 = arith.divf %553, %554 : vector<1x112xf32>
    %556 = arith.mulf %537, %537 : vector<1x112xf32>
    %cst_186 = arith.constant 0.00138888892 : f32
    %557 = vector.broadcast %cst_186 : f32 to vector<1x112xf32>
    %558 = arith.mulf %556, %557 : vector<1x112xf32>
    %cst_187 = arith.constant 0.0833333358 : f32
    %559 = vector.broadcast %cst_187 : f32 to vector<1x112xf32>
    %560 = arith.addf %559, %558 : vector<1x112xf32>
    %cst_188 = arith.constant 0.00999999977 : f32
    %561 = vector.broadcast %cst_188 : f32 to vector<1x112xf32>
    %562 = arith.cmpf olt, %537, %561 : vector<1x112xf32>
    %563 = arith.select %562, %560, %555 : vector<1x112xi1>, vector<1x112xf32>
    %564 = arith.mulf %544, %544 : vector<1x112xf32>
    %565 = arith.mulf %563, %564 : vector<1x112xf32>
    %566 = arith.mulf %546, %546 : vector<1x112xf32>
    %567 = arith.mulf %563, %566 : vector<1x112xf32>
    %568 = arith.mulf %548, %548 : vector<1x112xf32>
    %569 = arith.mulf %563, %568 : vector<1x112xf32>
    %cst_189 = arith.constant 5.000000e-01 : f32
    %570 = vector.broadcast %cst_189 : f32 to vector<1x112xf32>
    %571 = arith.mulf %570, %548 : vector<1x112xf32>
    %572 = arith.addf %571, %569 : vector<1x112xf32>
    %573 = arith.mulf %572, %475 : vector<1x112xf32>
    %574 = arith.addf %454, %573 : vector<1x112xf32>
    %cst_190 = arith.constant 5.000000e-01 : f32
    %575 = vector.broadcast %cst_190 : f32 to vector<1x112xf32>
    %576 = arith.mulf %575, %546 : vector<1x112xf32>
    %577 = arith.subf %567, %576 : vector<1x112xf32>
    %578 = arith.mulf %577, %496 : vector<1x112xf32>
    %579 = arith.addf %574, %578 : vector<1x112xf32>
    %cst_191 = arith.constant 5.000000e-01 : f32
    %580 = vector.broadcast %cst_191 : f32 to vector<1x112xf32>
    %581 = arith.mulf %580, %548 : vector<1x112xf32>
    %582 = arith.subf %569, %581 : vector<1x112xf32>
    %583 = arith.mulf %582, %454 : vector<1x112xf32>
    %584 = arith.addf %583, %475 : vector<1x112xf32>
    %cst_192 = arith.constant 5.000000e-01 : f32
    %585 = vector.broadcast %cst_192 : f32 to vector<1x112xf32>
    %586 = arith.mulf %585, %544 : vector<1x112xf32>
    %587 = arith.addf %586, %565 : vector<1x112xf32>
    %588 = arith.mulf %587, %496 : vector<1x112xf32>
    %589 = arith.addf %584, %588 : vector<1x112xf32>
    %cst_193 = arith.constant 5.000000e-01 : f32
    %590 = vector.broadcast %cst_193 : f32 to vector<1x112xf32>
    %591 = arith.mulf %590, %546 : vector<1x112xf32>
    %592 = arith.addf %591, %567 : vector<1x112xf32>
    %593 = arith.mulf %592, %454 : vector<1x112xf32>
    %cst_194 = arith.constant 5.000000e-01 : f32
    %594 = vector.broadcast %cst_194 : f32 to vector<1x112xf32>
    %595 = arith.mulf %594, %544 : vector<1x112xf32>
    %596 = arith.subf %565, %595 : vector<1x112xf32>
    %597 = arith.mulf %596, %475 : vector<1x112xf32>
    %598 = arith.addf %593, %597 : vector<1x112xf32>
    %599 = arith.addf %598, %496 : vector<1x112xf32>
    %c0_195 = arith.constant 0 : index
    %c0_196 = arith.constant 0 : index
    %600 = vector.load %arg4[%c0_195, %c0_196] : memref<6x112xf32, #tpu.memory_space<vmem>>, vector<1x112xf32>
    %601 = arith.subf %544, %600 : vector<1x112xf32>
    %602 = arith.mulf %601, %601 : vector<1x112xf32>
    %c1_197 = arith.constant 1 : index
    %c0_198 = arith.constant 0 : index
    %603 = vector.load %arg4[%c1_197, %c0_198] : memref<6x112xf32, #tpu.memory_space<vmem>>, vector<1x112xf32>
    %604 = arith.subf %546, %603 : vector<1x112xf32>
    %605 = arith.mulf %604, %604 : vector<1x112xf32>
    %606 = arith.addf %602, %605 : vector<1x112xf32>
    %c2_199 = arith.constant 2 : index
    %c0_200 = arith.constant 0 : index
    %607 = vector.load %arg4[%c2_199, %c0_200] : memref<6x112xf32, #tpu.memory_space<vmem>>, vector<1x112xf32>
    %608 = arith.subf %548, %607 : vector<1x112xf32>
    %609 = arith.mulf %608, %608 : vector<1x112xf32>
    %610 = arith.addf %606, %609 : vector<1x112xf32>
    %c3_201 = arith.constant 3 : index
    %c0_202 = arith.constant 0 : index
    %611 = vector.load %arg4[%c3_201, %c0_202] : memref<6x112xf32, #tpu.memory_space<vmem>>, vector<1x112xf32>
    %612 = arith.subf %579, %611 : vector<1x112xf32>
    %613 = arith.mulf %612, %612 : vector<1x112xf32>
    %614 = arith.addf %610, %613 : vector<1x112xf32>
    %c4_203 = arith.constant 4 : index
    %c0_204 = arith.constant 0 : index
    %615 = vector.load %arg4[%c4_203, %c0_204] : memref<6x112xf32, #tpu.memory_space<vmem>>, vector<1x112xf32>
    %616 = arith.subf %589, %615 : vector<1x112xf32>
    %617 = arith.mulf %616, %616 : vector<1x112xf32>
    %618 = arith.addf %614, %617 : vector<1x112xf32>
    %c5_205 = arith.constant 5 : index
    %c0_206 = arith.constant 0 : index
    %619 = vector.load %arg4[%c5_205, %c0_206] : memref<6x112xf32, #tpu.memory_space<vmem>>, vector<1x112xf32>
    %620 = arith.subf %599, %619 : vector<1x112xf32>
    %621 = arith.mulf %620, %620 : vector<1x112xf32>
    %622 = arith.addf %618, %621 : vector<1x112xf32>
    %623 = math.sqrt %622 : vector<1x112xf32>
    %c0_207 = arith.constant 0 : index
    %c0_208 = arith.constant 0 : index
    %624 = vector.load %arg1[%c0_207, %c0_208] : memref<6x32xf32, #tpu.memory_space<vmem>>, vector<1x32xf32>
    %cst_209 = arith.constant 0.0174532924 : f32
    %625 = vector.broadcast %cst_209 : f32 to vector<1x32xf32>
    %626 = arith.mulf %624, %625 : vector<1x32xf32>
    %c1_210 = arith.constant 1 : index
    %c0_211 = arith.constant 0 : index
    %627 = vector.load %arg1[%c1_210, %c0_211] : memref<6x32xf32, #tpu.memory_space<vmem>>, vector<1x32xf32>
    %cst_212 = arith.constant 0.0174532924 : f32
    %628 = vector.broadcast %cst_212 : f32 to vector<1x32xf32>
    %629 = arith.mulf %627, %628 : vector<1x32xf32>
    %c2_213 = arith.constant 2 : index
    %c0_214 = arith.constant 0 : index
    %630 = vector.load %arg1[%c2_213, %c0_214] : memref<6x32xf32, #tpu.memory_space<vmem>>, vector<1x32xf32>
    %cst_215 = arith.constant 0.0174532924 : f32
    %631 = vector.broadcast %cst_215 : f32 to vector<1x32xf32>
    %632 = arith.mulf %630, %631 : vector<1x32xf32>
    %633 = math.sin %626 : vector<1x32xf32>
    %634 = math.sin %629 : vector<1x32xf32>
    %635 = math.sin %632 : vector<1x32xf32>
    %636 = math.cos %626 : vector<1x32xf32>
    %637 = math.cos %629 : vector<1x32xf32>
    %638 = math.cos %632 : vector<1x32xf32>
    %639 = arith.mulf %638, %637 : vector<1x32xf32>
    %640 = arith.mulf %635, %637 : vector<1x32xf32>
    %cst_216 = arith.constant 0.000000e+00 : f32
    %641 = vector.broadcast %cst_216 : f32 to vector<1x32xf32>
    %642 = arith.subf %641, %634 : vector<1x32xf32>
    %643 = arith.mulf %638, %634 : vector<1x32xf32>
    %644 = arith.mulf %643, %633 : vector<1x32xf32>
    %645 = arith.mulf %635, %636 : vector<1x32xf32>
    %646 = arith.subf %644, %645 : vector<1x32xf32>
    %647 = arith.mulf %635, %634 : vector<1x32xf32>
    %648 = arith.mulf %647, %633 : vector<1x32xf32>
    %649 = arith.mulf %638, %636 : vector<1x32xf32>
    %650 = arith.addf %648, %649 : vector<1x32xf32>
    %651 = arith.mulf %637, %633 : vector<1x32xf32>
    %652 = arith.mulf %638, %634 : vector<1x32xf32>
    %653 = arith.mulf %652, %636 : vector<1x32xf32>
    %654 = arith.mulf %635, %633 : vector<1x32xf32>
    %655 = arith.addf %653, %654 : vector<1x32xf32>
    %656 = arith.mulf %635, %634 : vector<1x32xf32>
    %657 = arith.mulf %656, %636 : vector<1x32xf32>
    %658 = arith.mulf %638, %633 : vector<1x32xf32>
    %659 = arith.subf %657, %658 : vector<1x32xf32>
    %660 = arith.mulf %637, %636 : vector<1x32xf32>
    %661 = arith.addf %639, %650 : vector<1x32xf32>
    %662 = arith.addf %661, %660 : vector<1x32xf32>
    %cst_217 = arith.constant 1.000000e+00 : f32
    %663 = vector.broadcast %cst_217 : f32 to vector<1x32xf32>
    %664 = arith.subf %662, %663 : vector<1x32xf32>
    %cst_218 = arith.constant 5.000000e-01 : f32
    %665 = vector.broadcast %cst_218 : f32 to vector<1x32xf32>
    %666 = arith.mulf %664, %665 : vector<1x32xf32>
    %cst_219 = arith.constant -0.999998986 : f32
    %cst_220 = arith.constant 0.999998986 : f32
    %667 = vector.broadcast %cst_219 : f32 to vector<1x32xf32>
    %668 = arith.maximumf %667, %666 : vector<1x32xf32>
    %669 = vector.broadcast %cst_220 : f32 to vector<1x32xf32>
    %670 = arith.minimumf %669, %668 : vector<1x32xf32>
    %671 = math.absf %670 : vector<1x32xf32>
    %cst_221 = arith.constant 1.872930e-02 : f32
    %672 = vector.broadcast %cst_221 : f32 to vector<1x32xf32>
    %673 = arith.mulf %672, %671 : vector<1x32xf32>
    %cst_222 = arith.constant 7.426100e-02 : f32
    %674 = vector.broadcast %cst_222 : f32 to vector<1x32xf32>
    %675 = arith.subf %674, %673 : vector<1x32xf32>
    %676 = arith.mulf %671, %675 : vector<1x32xf32>
    %cst_223 = arith.constant -0.212114394 : f32
    %677 = vector.broadcast %cst_223 : f32 to vector<1x32xf32>
    %678 = arith.addf %677, %676 : vector<1x32xf32>
    %679 = arith.mulf %671, %678 : vector<1x32xf32>
    %cst_224 = arith.constant 1.57072878 : f32
    %680 = vector.broadcast %cst_224 : f32 to vector<1x32xf32>
    %681 = arith.addf %680, %679 : vector<1x32xf32>
    %cst_225 = arith.constant 1.000000e+00 : f32
    %682 = vector.broadcast %cst_225 : f32 to vector<1x32xf32>
    %683 = arith.subf %682, %671 : vector<1x32xf32>
    %cst_226 = arith.constant 0.000000e+00 : f32
    %684 = vector.broadcast %cst_226 : f32 to vector<1x32xf32>
    %685 = arith.maximumf %683, %684 : vector<1x32xf32>
    %686 = math.sqrt %685 : vector<1x32xf32>
    %687 = arith.mulf %686, %681 : vector<1x32xf32>
    %cst_227 = arith.constant 0.000000e+00 : f32
    %688 = vector.broadcast %cst_227 : f32 to vector<1x32xf32>
    %689 = arith.cmpf olt, %670, %688 : vector<1x32xf32>
    %cst_228 = arith.constant 3.14159274 : f32
    %690 = vector.broadcast %cst_228 : f32 to vector<1x32xf32>
    %691 = arith.subf %690, %687 : vector<1x32xf32>
    %692 = arith.select %689, %691, %687 : vector<1x32xi1>, vector<1x32xf32>
    %693 = math.cos %692 : vector<1x32xf32>
    %694 = arith.subf %693, %670 : vector<1x32xf32>
    %695 = math.sin %692 : vector<1x32xf32>
    %cst_229 = arith.constant 9.99999997E-7 : f32
    %696 = vector.broadcast %cst_229 : f32 to vector<1x32xf32>
    %697 = arith.maximumf %695, %696 : vector<1x32xf32>
    %698 = arith.divf %694, %697 : vector<1x32xf32>
    %699 = arith.addf %692, %698 : vector<1x32xf32>
    %cst_230 = arith.constant 9.99999997E-7 : f32
    %700 = vector.broadcast %cst_230 : f32 to vector<1x32xf32>
    %701 = arith.addf %699, %700 : vector<1x32xf32>
    %702 = math.sin %701 : vector<1x32xf32>
    %703 = math.cos %701 : vector<1x32xf32>
    %cst_231 = arith.constant 2.000000e+00 : f32
    %704 = vector.broadcast %cst_231 : f32 to vector<1x32xf32>
    %705 = arith.mulf %704, %702 : vector<1x32xf32>
    %706 = arith.divf %701, %705 : vector<1x32xf32>
    %707 = arith.subf %651, %659 : vector<1x32xf32>
    %708 = arith.mulf %706, %707 : vector<1x32xf32>
    %709 = arith.subf %655, %642 : vector<1x32xf32>
    %710 = arith.mulf %706, %709 : vector<1x32xf32>
    %711 = arith.subf %640, %646 : vector<1x32xf32>
    %712 = arith.mulf %706, %711 : vector<1x32xf32>
    %cst_232 = arith.constant 1.000000e+00 : f32
    %713 = vector.broadcast %cst_232 : f32 to vector<1x32xf32>
    %714 = arith.addf %713, %703 : vector<1x32xf32>
    %715 = arith.mulf %706, %714 : vector<1x32xf32>
    %cst_233 = arith.constant 1.000000e+00 : f32
    %716 = vector.broadcast %cst_233 : f32 to vector<1x32xf32>
    %717 = arith.subf %716, %715 : vector<1x32xf32>
    %718 = arith.mulf %701, %701 : vector<1x32xf32>
    %719 = arith.divf %717, %718 : vector<1x32xf32>
    %720 = arith.mulf %701, %701 : vector<1x32xf32>
    %cst_234 = arith.constant 0.00138888892 : f32
    %721 = vector.broadcast %cst_234 : f32 to vector<1x32xf32>
    %722 = arith.mulf %720, %721 : vector<1x32xf32>
    %cst_235 = arith.constant 0.0833333358 : f32
    %723 = vector.broadcast %cst_235 : f32 to vector<1x32xf32>
    %724 = arith.addf %723, %722 : vector<1x32xf32>
    %cst_236 = arith.constant 0.00999999977 : f32
    %725 = vector.broadcast %cst_236 : f32 to vector<1x32xf32>
    %726 = arith.cmpf olt, %701, %725 : vector<1x32xf32>
    %727 = arith.select %726, %724, %719 : vector<1x32xi1>, vector<1x32xf32>
    %728 = arith.mulf %708, %708 : vector<1x32xf32>
    %729 = arith.mulf %727, %728 : vector<1x32xf32>
    %730 = arith.mulf %710, %710 : vector<1x32xf32>
    %731 = arith.mulf %727, %730 : vector<1x32xf32>
    %732 = arith.mulf %712, %712 : vector<1x32xf32>
    %733 = arith.mulf %727, %732 : vector<1x32xf32>
    %c3_237 = arith.constant 3 : index
    %c0_238 = arith.constant 0 : index
    %734 = vector.load %arg1[%c3_237, %c0_238] : memref<6x32xf32, #tpu.memory_space<vmem>>, vector<1x32xf32>
    %c4_239 = arith.constant 4 : index
    %c0_240 = arith.constant 0 : index
    %735 = vector.load %arg1[%c4_239, %c0_240] : memref<6x32xf32, #tpu.memory_space<vmem>>, vector<1x32xf32>
    %c5_241 = arith.constant 5 : index
    %c0_242 = arith.constant 0 : index
    %736 = vector.load %arg1[%c5_241, %c0_242] : memref<6x32xf32, #tpu.memory_space<vmem>>, vector<1x32xf32>
    %cst_243 = arith.constant 5.000000e-01 : f32
    %737 = vector.broadcast %cst_243 : f32 to vector<1x32xf32>
    %738 = arith.mulf %737, %712 : vector<1x32xf32>
    %739 = arith.addf %738, %733 : vector<1x32xf32>
    %740 = arith.mulf %739, %735 : vector<1x32xf32>
    %741 = arith.addf %734, %740 : vector<1x32xf32>
    %cst_244 = arith.constant 5.000000e-01 : f32
    %742 = vector.broadcast %cst_244 : f32 to vector<1x32xf32>
    %743 = arith.mulf %742, %710 : vector<1x32xf32>
    %744 = arith.subf %731, %743 : vector<1x32xf32>
    %745 = arith.mulf %744, %736 : vector<1x32xf32>
    %746 = arith.addf %741, %745 : vector<1x32xf32>
    %cst_245 = arith.constant 5.000000e-01 : f32
    %747 = vector.broadcast %cst_245 : f32 to vector<1x32xf32>
    %748 = arith.mulf %747, %712 : vector<1x32xf32>
    %749 = arith.subf %733, %748 : vector<1x32xf32>
    %750 = arith.mulf %749, %734 : vector<1x32xf32>
    %751 = arith.addf %750, %735 : vector<1x32xf32>
    %cst_246 = arith.constant 5.000000e-01 : f32
    %752 = vector.broadcast %cst_246 : f32 to vector<1x32xf32>
    %753 = arith.mulf %752, %708 : vector<1x32xf32>
    %754 = arith.addf %753, %729 : vector<1x32xf32>
    %755 = arith.mulf %754, %736 : vector<1x32xf32>
    %756 = arith.addf %751, %755 : vector<1x32xf32>
    %cst_247 = arith.constant 5.000000e-01 : f32
    %757 = vector.broadcast %cst_247 : f32 to vector<1x32xf32>
    %758 = arith.mulf %757, %710 : vector<1x32xf32>
    %759 = arith.addf %758, %731 : vector<1x32xf32>
    %760 = arith.mulf %759, %734 : vector<1x32xf32>
    %cst_248 = arith.constant 5.000000e-01 : f32
    %761 = vector.broadcast %cst_248 : f32 to vector<1x32xf32>
    %762 = arith.mulf %761, %708 : vector<1x32xf32>
    %763 = arith.subf %729, %762 : vector<1x32xf32>
    %764 = arith.mulf %763, %735 : vector<1x32xf32>
    %765 = arith.addf %760, %764 : vector<1x32xf32>
    %766 = arith.addf %765, %736 : vector<1x32xf32>
    %767 = arith.mulf %708, %708 : vector<1x32xf32>
    %768 = arith.mulf %710, %710 : vector<1x32xf32>
    %769 = arith.addf %767, %768 : vector<1x32xf32>
    %770 = arith.mulf %712, %712 : vector<1x32xf32>
    %771 = arith.addf %769, %770 : vector<1x32xf32>
    %772 = arith.mulf %746, %746 : vector<1x32xf32>
    %773 = arith.addf %771, %772 : vector<1x32xf32>
    %774 = arith.mulf %756, %756 : vector<1x32xf32>
    %775 = arith.addf %773, %774 : vector<1x32xf32>
    %776 = arith.mulf %766, %766 : vector<1x32xf32>
    %777 = arith.addf %775, %776 : vector<1x32xf32>
    %778 = tpu.iota {dimensions = array<i32: 1>} : vector<1x112xi32>
    %779 = tpu.iota {dimensions = array<i32: 1>} : vector<1x32xi32>
    %780 = tpu.iota {dimensions = array<i32: 1>} : vector<1x4xi32>
    %cst_249 = arith.constant 0.000000e+00 : f32
    %781 = vector.broadcast %cst_249 : f32 to vector<1x4xf32>
    %c0_i32 = arith.constant 0 : i32
    %782 = vector.broadcast %c0_i32 : i32 to vector<1x112xi32>
    %783 = arith.cmpi sge, %778, %782 : vector<1x112xi32>
    %c28_i32 = arith.constant 28 : i32
    %784 = vector.broadcast %c28_i32 : i32 to vector<1x112xi32>
    %785 = arith.cmpi slt, %778, %784 : vector<1x112xi32>
    %786 = arith.andi %783, %785 : vector<1x112xi1>
    %c0_i32_250 = arith.constant 0 : i32
    %787 = vector.broadcast %c0_i32_250 : i32 to vector<1x32xi32>
    %788 = arith.cmpi sge, %779, %787 : vector<1x32xi32>
    %c8_i32 = arith.constant 8 : i32
    %789 = vector.broadcast %c8_i32 : i32 to vector<1x32xi32>
    %790 = arith.cmpi slt, %779, %789 : vector<1x32xi32>
    %791 = arith.andi %788, %790 : vector<1x32xi1>
    %cst_251 = arith.constant 0.000000e+00 : f32
    %792 = vector.broadcast %cst_251 : f32 to vector<1x112xf32>
    %793 = arith.select %786, %623, %792 : vector<1x112xi1>, vector<1x112xf32>
    %cst_252 = arith.constant dense<0.000000e+00> : vector<1xf32>
    %794 = vector.multi_reduction <add>, %793, %cst_252 [1] : vector<1x112xf32> to vector<1xf32>
    %795 = vector.shape_cast %794 : vector<1xf32> to vector<1x1xf32>
    %cst_253 = arith.constant 0.000000e+00 : f32
    %796 = vector.broadcast %cst_253 : f32 to vector<1x32xf32>
    %797 = arith.select %791, %777, %796 : vector<1x32xi1>, vector<1x32xf32>
    %cst_254 = arith.constant dense<0.000000e+00> : vector<1xf32>
    %798 = vector.multi_reduction <add>, %797, %cst_254 [1] : vector<1x32xf32> to vector<1xf32>
    %799 = vector.shape_cast %798 : vector<1xf32> to vector<1x1xf32>
    %cst_255 = arith.constant 1.000000e-03 : f32
    %800 = vector.broadcast %cst_255 : f32 to vector<1x1xf32>
    %801 = arith.mulf %800, %799 : vector<1x1xf32>
    %802 = arith.addf %795, %801 : vector<1x1xf32>
    %cst_256 = arith.constant 2.800000e+01 : f32
    %803 = vector.broadcast %cst_256 : f32 to vector<1x1xf32>
    %804 = arith.divf %802, %803 : vector<1x1xf32>
    %c0_i32_257 = arith.constant 0 : i32
    %805 = vector.broadcast %c0_i32_257 : i32 to vector<1x4xi32>
    %806 = arith.cmpi eq, %780, %805 : vector<1x4xi32>
    %cst_258 = arith.constant 0.000000e+00 : f32
    %807 = vector.shape_cast %804 : vector<1x1xf32> to vector<1x1xf32>
    %808 = vector.broadcast %807 : vector<1x1xf32> to vector<1x4xf32>
    %809 = vector.broadcast %cst_258 : f32 to vector<1x4xf32>
    %810 = arith.select %806, %808, %809 : vector<1x4xi1>, vector<1x4xf32>
    %811 = arith.addf %781, %810 : vector<1x4xf32>
    %c28_i32_259 = arith.constant 28 : i32
    %812 = vector.broadcast %c28_i32_259 : i32 to vector<1x112xi32>
    %813 = arith.cmpi sge, %778, %812 : vector<1x112xi32>
    %c56_i32 = arith.constant 56 : i32
    %814 = vector.broadcast %c56_i32 : i32 to vector<1x112xi32>
    %815 = arith.cmpi slt, %778, %814 : vector<1x112xi32>
    %816 = arith.andi %813, %815 : vector<1x112xi1>
    %c8_i32_260 = arith.constant 8 : i32
    %817 = vector.broadcast %c8_i32_260 : i32 to vector<1x32xi32>
    %818 = arith.cmpi sge, %779, %817 : vector<1x32xi32>
    %c16_i32 = arith.constant 16 : i32
    %819 = vector.broadcast %c16_i32 : i32 to vector<1x32xi32>
    %820 = arith.cmpi slt, %779, %819 : vector<1x32xi32>
    %821 = arith.andi %818, %820 : vector<1x32xi1>
    %cst_261 = arith.constant 0.000000e+00 : f32
    %822 = vector.broadcast %cst_261 : f32 to vector<1x112xf32>
    %823 = arith.select %816, %623, %822 : vector<1x112xi1>, vector<1x112xf32>
    %cst_262 = arith.constant dense<0.000000e+00> : vector<1xf32>
    %824 = vector.multi_reduction <add>, %823, %cst_262 [1] : vector<1x112xf32> to vector<1xf32>
    %825 = vector.shape_cast %824 : vector<1xf32> to vector<1x1xf32>
    %cst_263 = arith.constant 0.000000e+00 : f32
    %826 = vector.broadcast %cst_263 : f32 to vector<1x32xf32>
    %827 = arith.select %821, %777, %826 : vector<1x32xi1>, vector<1x32xf32>
    %cst_264 = arith.constant dense<0.000000e+00> : vector<1xf32>
    %828 = vector.multi_reduction <add>, %827, %cst_264 [1] : vector<1x32xf32> to vector<1xf32>
    %829 = vector.shape_cast %828 : vector<1xf32> to vector<1x1xf32>
    %cst_265 = arith.constant 1.000000e-03 : f32
    %830 = vector.broadcast %cst_265 : f32 to vector<1x1xf32>
    %831 = arith.mulf %830, %829 : vector<1x1xf32>
    %832 = arith.addf %825, %831 : vector<1x1xf32>
    %cst_266 = arith.constant 2.800000e+01 : f32
    %833 = vector.broadcast %cst_266 : f32 to vector<1x1xf32>
    %834 = arith.divf %832, %833 : vector<1x1xf32>
    %c1_i32 = arith.constant 1 : i32
    %835 = vector.broadcast %c1_i32 : i32 to vector<1x4xi32>
    %836 = arith.cmpi eq, %780, %835 : vector<1x4xi32>
    %cst_267 = arith.constant 0.000000e+00 : f32
    %837 = vector.shape_cast %834 : vector<1x1xf32> to vector<1x1xf32>
    %838 = vector.broadcast %837 : vector<1x1xf32> to vector<1x4xf32>
    %839 = vector.broadcast %cst_267 : f32 to vector<1x4xf32>
    %840 = arith.select %836, %838, %839 : vector<1x4xi1>, vector<1x4xf32>
    %841 = arith.addf %811, %840 : vector<1x4xf32>
    %c56_i32_268 = arith.constant 56 : i32
    %842 = vector.broadcast %c56_i32_268 : i32 to vector<1x112xi32>
    %843 = arith.cmpi sge, %778, %842 : vector<1x112xi32>
    %c84_i32 = arith.constant 84 : i32
    %844 = vector.broadcast %c84_i32 : i32 to vector<1x112xi32>
    %845 = arith.cmpi slt, %778, %844 : vector<1x112xi32>
    %846 = arith.andi %843, %845 : vector<1x112xi1>
    %c16_i32_269 = arith.constant 16 : i32
    %847 = vector.broadcast %c16_i32_269 : i32 to vector<1x32xi32>
    %848 = arith.cmpi sge, %779, %847 : vector<1x32xi32>
    %c24_i32 = arith.constant 24 : i32
    %849 = vector.broadcast %c24_i32 : i32 to vector<1x32xi32>
    %850 = arith.cmpi slt, %779, %849 : vector<1x32xi32>
    %851 = arith.andi %848, %850 : vector<1x32xi1>
    %cst_270 = arith.constant 0.000000e+00 : f32
    %852 = vector.broadcast %cst_270 : f32 to vector<1x112xf32>
    %853 = arith.select %846, %623, %852 : vector<1x112xi1>, vector<1x112xf32>
    %cst_271 = arith.constant dense<0.000000e+00> : vector<1xf32>
    %854 = vector.multi_reduction <add>, %853, %cst_271 [1] : vector<1x112xf32> to vector<1xf32>
    %855 = vector.shape_cast %854 : vector<1xf32> to vector<1x1xf32>
    %cst_272 = arith.constant 0.000000e+00 : f32
    %856 = vector.broadcast %cst_272 : f32 to vector<1x32xf32>
    %857 = arith.select %851, %777, %856 : vector<1x32xi1>, vector<1x32xf32>
    %cst_273 = arith.constant dense<0.000000e+00> : vector<1xf32>
    %858 = vector.multi_reduction <add>, %857, %cst_273 [1] : vector<1x32xf32> to vector<1xf32>
    %859 = vector.shape_cast %858 : vector<1xf32> to vector<1x1xf32>
    %cst_274 = arith.constant 1.000000e-03 : f32
    %860 = vector.broadcast %cst_274 : f32 to vector<1x1xf32>
    %861 = arith.mulf %860, %859 : vector<1x1xf32>
    %862 = arith.addf %855, %861 : vector<1x1xf32>
    %cst_275 = arith.constant 2.800000e+01 : f32
    %863 = vector.broadcast %cst_275 : f32 to vector<1x1xf32>
    %864 = arith.divf %862, %863 : vector<1x1xf32>
    %c2_i32 = arith.constant 2 : i32
    %865 = vector.broadcast %c2_i32 : i32 to vector<1x4xi32>
    %866 = arith.cmpi eq, %780, %865 : vector<1x4xi32>
    %cst_276 = arith.constant 0.000000e+00 : f32
    %867 = vector.shape_cast %864 : vector<1x1xf32> to vector<1x1xf32>
    %868 = vector.broadcast %867 : vector<1x1xf32> to vector<1x4xf32>
    %869 = vector.broadcast %cst_276 : f32 to vector<1x4xf32>
    %870 = arith.select %866, %868, %869 : vector<1x4xi1>, vector<1x4xf32>
    %871 = arith.addf %841, %870 : vector<1x4xf32>
    %c84_i32_277 = arith.constant 84 : i32
    %872 = vector.broadcast %c84_i32_277 : i32 to vector<1x112xi32>
    %873 = arith.cmpi sge, %778, %872 : vector<1x112xi32>
    %c112_i32 = arith.constant 112 : i32
    %874 = vector.broadcast %c112_i32 : i32 to vector<1x112xi32>
    %875 = arith.cmpi slt, %778, %874 : vector<1x112xi32>
    %876 = arith.andi %873, %875 : vector<1x112xi1>
    %c24_i32_278 = arith.constant 24 : i32
    %877 = vector.broadcast %c24_i32_278 : i32 to vector<1x32xi32>
    %878 = arith.cmpi sge, %779, %877 : vector<1x32xi32>
    %c32_i32 = arith.constant 32 : i32
    %879 = vector.broadcast %c32_i32 : i32 to vector<1x32xi32>
    %880 = arith.cmpi slt, %779, %879 : vector<1x32xi32>
    %881 = arith.andi %878, %880 : vector<1x32xi1>
    %cst_279 = arith.constant 0.000000e+00 : f32
    %882 = vector.broadcast %cst_279 : f32 to vector<1x112xf32>
    %883 = arith.select %876, %623, %882 : vector<1x112xi1>, vector<1x112xf32>
    %cst_280 = arith.constant dense<0.000000e+00> : vector<1xf32>
    %884 = vector.multi_reduction <add>, %883, %cst_280 [1] : vector<1x112xf32> to vector<1xf32>
    %885 = vector.shape_cast %884 : vector<1xf32> to vector<1x1xf32>
    %cst_281 = arith.constant 0.000000e+00 : f32
    %886 = vector.broadcast %cst_281 : f32 to vector<1x32xf32>
    %887 = arith.select %881, %777, %886 : vector<1x32xi1>, vector<1x32xf32>
    %cst_282 = arith.constant dense<0.000000e+00> : vector<1xf32>
    %888 = vector.multi_reduction <add>, %887, %cst_282 [1] : vector<1x32xf32> to vector<1xf32>
    %889 = vector.shape_cast %888 : vector<1xf32> to vector<1x1xf32>
    %cst_283 = arith.constant 1.000000e-03 : f32
    %890 = vector.broadcast %cst_283 : f32 to vector<1x1xf32>
    %891 = arith.mulf %890, %889 : vector<1x1xf32>
    %892 = arith.addf %885, %891 : vector<1x1xf32>
    %cst_284 = arith.constant 2.800000e+01 : f32
    %893 = vector.broadcast %cst_284 : f32 to vector<1x1xf32>
    %894 = arith.divf %892, %893 : vector<1x1xf32>
    %c3_i32 = arith.constant 3 : i32
    %895 = vector.broadcast %c3_i32 : i32 to vector<1x4xi32>
    %896 = arith.cmpi eq, %780, %895 : vector<1x4xi32>
    %cst_285 = arith.constant 0.000000e+00 : f32
    %897 = vector.shape_cast %894 : vector<1x1xf32> to vector<1x1xf32>
    %898 = vector.broadcast %897 : vector<1x1xf32> to vector<1x4xf32>
    %899 = vector.broadcast %cst_285 : f32 to vector<1x4xf32>
    %900 = arith.select %896, %898, %899 : vector<1x4xi1>, vector<1x4xf32>
    %901 = arith.addf %871, %900 : vector<1x4xf32>
    %c0_286 = arith.constant 0 : index
    %c0_287 = arith.constant 0 : index
    %902 = vector.load %arg5[%c0_286, %c0_287] : memref<1x4xf32, #tpu.memory_space<vmem>>, vector<1x4xf32>
    tpu.vector_store %arg5[%c0_286, %c0_287], %901 {strides = array<i32>} : memref<1x4xf32, #tpu.memory_space<vmem>>, vector<1x4xf32>,
    return
  }
  func.func @transform_0(%arg0: i32) -> (i32, i32) {
    %c0_i32 = arith.constant 0 : i32
    %c0_i32_0 = arith.constant 0 : i32
    %c0_i32_1 = arith.constant 0 : i32
    return %c0_i32, %c0_i32_0 : i32, i32
  }
  func.func @transform_1(%arg0: i32) -> (i32, i32) {
    %c0_i32 = arith.constant 0 : i32
    %c0_i32_0 = arith.constant 0 : i32
    %c0_i32_1 = arith.constant 0 : i32
    return %c0_i32, %c0_i32_0 : i32, i32
  }
  func.func @transform_2(%arg0: i32) -> (i32, i32) {
    %c0_i32 = arith.constant 0 : i32
    %c0_i32_0 = arith.constant 0 : i32
    %c0_i32_1 = arith.constant 0 : i32
    return %c0_i32, %c0_i32_0 : i32, i32
  }
  func.func @transform_3(%arg0: i32) -> (i32, i32) {
    %c0_i32 = arith.constant 0 : i32
    %c0_i32_0 = arith.constant 0 : i32
    %c0_i32_1 = arith.constant 0 : i32
    return %c0_i32, %c0_i32_0 : i32, i32
  }
  func.func @transform_4(%arg0: i32) -> (i32, i32) {
    %c0_i32 = arith.constant 0 : i32
    %c0_i32_0 = arith.constant 0 : i32
    %c0_i32_1 = arith.constant 0 : i32
    return %c0_i32, %c0_i32_0 : i32, i32
  }
}

</mosaic_0001>

<llo_original>
// kernel: instance_rigid_loss_batched.1
$region0: #{instance_rigid_loss_batched.1}
  #allocation0 [shape = 'u32[]', space=smem, size = 0x4, offset = 0x4, fixed_abs, tag = 'smem constant byte address 0x4 - core index']
  #allocation1 [shape = 'u32[72,128]{1,0:T(1,128)}', space=vmem, size = 0x9000, scoped, tag = 'internal scratch']
  %s0 = inlined_call_operand.vmem [shape: f32[6,32], index: 0, kind: input, shape index: {}]
  %s1 = inlined_call_operand.vmem [shape: f32[32,112], index: 1, kind: input, shape index: {}]
  %s2 = inlined_call_operand.vmem [shape: f32[32,112], index: 2, kind: input, shape index: {}]
  %s3 = inlined_call_operand.vmem [shape: f32[6,112], index: 3, kind: input, shape index: {}]
  %s4 = inlined_call_operand.hbm [shape: f32[1,4], index: 4, kind: output, shape index: {}]
  %s5 = sld [smem:[#allocation0]]
  $region26: #{instance_rigid_loss_batched.1} parent=0
    _
  %s7 = ssub.s32 1, %s5
  %s8 = scalar_select 0, %s7, %s5
  $region1: #{instance_rigid_loss_batched.1} parent=0
    #allocation2 [shape = 'u8[512]{0}', space=vmem, size = 0x400, scoped, tag = 'output window, operand 0, single buffered']
    #allocation3 [shape = 's32[1]{0}', space=sflag, size = 0x4, scoped, tag = 'scoped memory for instance_rigid_loss_batched.1']
    %9 = vsyncpa [#allocation3], 0
    // Predicated region
    $region2: #{instance_rigid_loss_batched.1} parent=1 // pred_check
      _
    $region3: #{instance_rigid_loss_batched.1} parent=1 // pred_check_branch
      %11 = sbr.rel (0) target = $region5
    $region4: #{instance_rigid_loss_batched.1} parent=1 // pred_region
      _
    $region5: #{instance_rigid_loss_batched.1} parent=1 // pred_fallthru
      _
    // Predicated region
    $region6: #{instance_rigid_loss_batched.1} parent=1 // pred_check
      _
    $region7: #{instance_rigid_loss_batched.1} parent=1 // pred_check_branch
      %13 = sbr.rel (0) target = $region9
    $region8: #{instance_rigid_loss_batched.1} parent=1 // pred_region
      _
    $region9: #{instance_rigid_loss_batched.1} parent=1 // pred_fallthru
      _
    // Predicated region
    $region10: #{instance_rigid_loss_batched.1} parent=1 // pred_check
      _
    $region11: #{instance_rigid_loss_batched.1} parent=1 // pred_check_branch
      %15 = sbr.rel (0) target = $region13
    $region12: #{instance_rigid_loss_batched.1} parent=1 // pred_region
      _
    $region13: #{instance_rigid_loss_batched.1} parent=1 // pred_fallthru
      _
    // Predicated region
    $region14: #{instance_rigid_loss_batched.1} parent=1 // pred_check
      _
    $region15: #{instance_rigid_loss_batched.1} parent=1 // pred_check_branch
      %17 = sbr.rel (0) target = $region17
    $region16: #{instance_rigid_loss_batched.1} parent=1 // pred_region
      _
    $region17: #{instance_rigid_loss_batched.1} parent=1 // pred_fallthru
      _
    %v18 = vld [vmem:[%s0] sm:$0x3f]
    %v19 = vld [vmem:[%s1] sm:$0x1]
    %21 = vset.pattern.permute.xlu0 0
    %22 = vperm.xlu0 %21, %v18
    %v23 = vpop.permute.xlu0 %22
    %v25 = vperm.slane %v19, 0
    %v26 = vmul.f32 %v23, %v25
    %v27 = vadd.f32 %v26, 0.0
    %v28 = vld [vmem:[%s2] sm:$0x1]
    %v29 = vperm.slane %v28, 0
    %v30 = vmul.f32 %v23, %v29
    %v31 = vadd.f32 %v30, 0.0
    %v32 = vld [vmem:[%s1 + $0x1] sm:$0x1]
    %33 = vset.pattern.permute.xlu0 1
    %34 = vperm.xlu0 %33, %v18
    %v35 = vpop.permute.xlu0 %34
    %v37 = vperm.slane %v32, 0
    %v38 = vmul.f32 %v35, %v37
    %v39 = vadd.f32 %v27, %v38
    %v40 = vld [vmem:[%s2 + $0x1] sm:$0x1]
    %v41 = vperm.slane %v40, 0
    %v42 = vmul.f32 %v35, %v41
    %v43 = vadd.f32 %v31, %v42
    %v44 = vld [vmem:[%s1 + $0x2] sm:$0x1]
    %45 = vset.pattern.permute.xlu0 2
    %46 = vperm.xlu0 %45, %v18
    %v47 = vpop.permute.xlu0 %46
    %v49 = vperm.slane %v44, 0
    %v50 = vmul.f32 %v47, %v49
    %v51 = vadd.f32 %v39, %v50
    %v52 = vld [vmem:[%s2 + $0x2] sm:$0x1]
    %v53 = vperm.slane %v52, 0
    %v54 = vmul.f32 %v47, %v53
    %v55 = vadd.f32 %v43, %v54
    %v56 = vld [vmem:[%s1 + $0x3] sm:$0x1]
    %57 = vset.pattern.permute.xlu0 3
    %58 = vperm.xlu0 %57, %v18
    %v59 = vpop.permute.xlu0 %58
    %v61 = vperm.slane %v56, 0
    %v62 = vmul.f32 %v59, %v61
    %v63 = vadd.f32 %v51, %v62
    %v64 = vld [vmem:[%s2 + $0x3] sm:$0x1]
    %v65 = vperm.slane %v64, 0
    %v66 = vmul.f32 %v59, %v65
    %v67 = vadd.f32 %v55, %v66
    %v68 = vld [vmem:[%s1 + $0x4] sm:$0x1]
    %69 = vset.pattern.permute.xlu0 4
    %70 = vperm.xlu0 %69, %v18
    %v71 = vpop.permute.xlu0 %70
    %v73 = vperm.slane %v68, 0
    %v74 = vmul.f32 %v71, %v73
    %v75 = vadd.f32 %v63, %v74
    %v76 = vld [vmem:[%s2 + $0x4] sm:$0x1]
    %v77 = vperm.slane %v76, 0
    %v78 = vmul.f32 %v71, %v77
    %v79 = vadd.f32 %v67, %v78
    %v80 = vld [vmem:[%s1 + $0x5] sm:$0x1]
    %81 = vset.pattern.permute.xlu0 5
    %82 = vperm.xlu0 %81, %v18
    %v83 = vpop.permute.xlu0 %82
    %v85 = vperm.slane %v80, 0
    %v86 = vmul.f32 %v83, %v85
    %v87 = vadd.f32 %v75, %v86
    %v88 = vld [vmem:[%s2 + $0x5] sm:$0x1]
    %v89 = vperm.slane %v88, 0
    %v90 = vmul.f32 %v83, %v89
    %v91 = vadd.f32 %v79, %v90
    %v92 = vld [vmem:[%s1 + $0x6] sm:$0x1]
    %93 = vset.pattern.permute.xlu0 6
    %94 = vperm.xlu0 %93, %v18
    %v95 = vpop.permute.xlu0 %94
    %v97 = vperm.slane %v92, 0
    %v98 = vmul.f32 %v95, %v97
    %v99 = vadd.f32 %v87, %v98
    %v100 = vld [vmem:[%s2 + $0x6] sm:$0x1]
    %v101 = vperm.slane %v100, 0
    %v102 = vmul.f32 %v95, %v101
    %v103 = vadd.f32 %v91, %v102
    %v104 = vld [vmem:[%s1 + $0x7] sm:$0x1]
    %105 = vset.pattern.permute.xlu0 7
    %106 = vperm.xlu0 %105, %v18
    %v107 = vpop.permute.xlu0 %106
    %v109 = vperm.slane %v104, 0
    %v110 = vmul.f32 %v107, %v109
    %v111 = vadd.f32 %v99, %v110
    %v112 = vld [vmem:[%s2 + $0x7] sm:$0x1]
    %v113 = vperm.slane %v112, 0
    %v114 = vmul.f32 %v107, %v113
    %v115 = vadd.f32 %v103, %v114
    %v116 = vld [vmem:[%s1 + $0x8] sm:$0x1]
    %117 = vset.pattern.permute.xlu0 8
    %118 = vperm.xlu0 %117, %v18
    %v119 = vpop.permute.xlu0 %118
    %v121 = vperm.slane %v116, 0
    %v122 = vmul.f32 %v119, %v121
    %v123 = vadd.f32 %v111, %v122
    %v124 = vld [vmem:[%s2 + $0x8] sm:$0x1]
    %v125 = vperm.slane %v124, 0
    %v126 = vmul.f32 %v119, %v125
    %v127 = vadd.f32 %v115, %v126
    %v128 = vld [vmem:[%s1 + $0x9] sm:$0x1]
    %129 = vset.pattern.permute.xlu0 9
    %130 = vperm.xlu0 %129, %v18
    %v131 = vpop.permute.xlu0 %130
    %v133 = vperm.slane %v128, 0
    %v134 = vmul.f32 %v131, %v133
    %v135 = vadd.f32 %v123, %v134
    %v136 = vld [vmem:[%s2 + $0x9] sm:$0x1]
    %v137 = vperm.slane %v136, 0
    %v138 = vmul.f32 %v131, %v137
    %v139 = vadd.f32 %v127, %v138
    %v140 = vld [vmem:[%s1 + $0xa] sm:$0x1]
    %141 = vset.pattern.permute.xlu0 10
    %142 = vperm.xlu0 %141, %v18
    %v143 = vpop.permute.xlu0 %142
    %v145 = vperm.slane %v140, 0
    %v146 = vmul.f32 %v143, %v145
    %v147 = vadd.f32 %v135, %v146
    %v148 = vld [vmem:[%s2 + $0xa] sm:$0x1]
    %v149 = vperm.slane %v148, 0
    %v150 = vmul.f32 %v143, %v149
    %v151 = vadd.f32 %v139, %v150
    %v152 = vld [vmem:[%s1 + $0xb] sm:$0x1]
    %153 = vset.pattern.permute.xlu0 11
    %154 = vperm.xlu0 %153, %v18
    %v155 = vpop.permute.xlu0 %154
    %v157 = vperm.slane %v152, 0
    %v158 = vmul.f32 %v155, %v157
    %v159 = vadd.f32 %v147, %v158
    %v160 = vld [vmem:[%s2 + $0xb] sm:$0x1]
    %v161 = vperm.slane %v160, 0
    %v162 = vmul.f32 %v155, %v161
    %v163 = vadd.f32 %v151, %v162
    %v164 = vld [vmem:[%s1 + $0xc] sm:$0x1]
    %165 = vset.pattern.permute.xlu0 12
    %166 = vperm.xlu0 %165, %v18
    %v167 = vpop.permute.xlu0 %166
    %v169 = vperm.slane %v164, 0
    %v170 = vmul.f32 %v167, %v169
    %v171 = vadd.f32 %v159, %v170
    %v172 = vld [vmem:[%s2 + $0xc] sm:$0x1]
    %v173 = vperm.slane %v172, 0
    %v174 = vmul.f32 %v167, %v173
    %v175 = vadd.f32 %v163, %v174
    %v176 = vld [vmem:[%s1 + $0xd] sm:$0x1]
    %177 = vset.pattern.permute.xlu0 13
    %178 = vperm.xlu0 %177, %v18
    %v179 = vpop.permute.xlu0 %178
    %v181 = vperm.slane %v176, 0
    %v182 = vmul.f32 %v179, %v181
    %v183 = vadd.f32 %v171, %v182
    %v184 = vld [vmem:[%s2 + $0xd] sm:$0x1]
    %v185 = vperm.slane %v184, 0
    %v186 = vmul.f32 %v179, %v185
    %v187 = vadd.f32 %v175, %v186
    %v188 = vld [vmem:[%s1 + $0xe] sm:$0x1]
    %189 = vset.pattern.permute.xlu0 14
    %190 = vperm.xlu0 %189, %v18
    %v191 = vpop.permute.xlu0 %190
    %v193 = vperm.slane %v188, 0
    %v194 = vmul.f32 %v191, %v193
    %v195 = vadd.f32 %v183, %v194
    %v196 = vld [vmem:[%s2 + $0xe] sm:$0x1]
    %v197 = vperm.slane %v196, 0
    %v198 = vmul.f32 %v191, %v197
    %v199 = vadd.f32 %v187, %v198
    %v200 = vld [vmem:[%s1 + $0xf] sm:$0x1]
    %201 = vset.pattern.permute.xlu0 15
    %202 = vperm.xlu0 %201, %v18
    %v203 = vpop.permute.xlu0 %202
    %v205 = vperm.slane %v200, 0
    %v206 = vmul.f32 %v203, %v205
    %v207 = vadd.f32 %v195, %v206
    %v208 = vld [vmem:[%s2 + $0xf] sm:$0x1]
    %v209 = vperm.slane %v208, 0
    %v210 = vmul.f32 %v203, %v209
    %v211 = vadd.f32 %v199, %v210
    %v212 = vld [vmem:[%s1 + $0x10] sm:$0x1]
    %213 = vset.pattern.permute.xlu0 16
    %214 = vperm.xlu0 %213, %v18
    %v215 = vpop.permute.xlu0 %214
    %v217 = vperm.slane %v212, 0
    %v218 = vmul.f32 %v215, %v217
    %v219 = vadd.f32 %v207, %v218
    %v220 = vld [vmem:[%s2 + $0x10] sm:$0x1]
    %v221 = vperm.slane %v220, 0
    %v222 = vmul.f32 %v215, %v221
    %v223 = vadd.f32 %v211, %v222
    %v224 = vld [vmem:[%s1 + $0x11] sm:$0x1]
    %225 = vset.pattern.permute.xlu0 17
    %226 = vperm.xlu0 %225, %v18
    %v227 = vpop.permute.xlu0 %226
    %v229 = vperm.slane %v224, 0
    %v230 = vmul.f32 %v227, %v229
    %v231 = vadd.f32 %v219, %v230
    %v232 = vld [vmem:[%s2 + $0x11] sm:$0x1]
    %v233 = vperm.slane %v232, 0
    %v234 = vmul.f32 %v227, %v233
    %v235 = vadd.f32 %v223, %v234
    %v236 = vld [vmem:[%s1 + $0x12] sm:$0x1]
    %237 = vset.pattern.permute.xlu0 18
    %238 = vperm.xlu0 %237, %v18
    %v239 = vpop.permute.xlu0 %238
    %v241 = vperm.slane %v236, 0
    %v242 = vmul.f32 %v239, %v241
    %v243 = vadd.f32 %v231, %v242
    %v244 = vld [vmem:[%s2 + $0x12] sm:$0x1]
    %v245 = vperm.slane %v244, 0
    %v246 = vmul.f32 %v239, %v245
    %v247 = vadd.f32 %v235, %v246
    %v248 = vld [vmem:[%s1 + $0x13] sm:$0x1]
    %249 = vset.pattern.permute.xlu0 19
    %250 = vperm.xlu0 %249, %v18
    %v251 = vpop.permute.xlu0 %250
    %v253 = vperm.slane %v248, 0
    %v254 = vmul.f32 %v251, %v253
    %v255 = vadd.f32 %v243, %v254
    %v256 = vld [vmem:[%s2 + $0x13] sm:$0x1]
    %v257 = vperm.slane %v256, 0
    %v258 = vmul.f32 %v251, %v257
    %v259 = vadd.f32 %v247, %v258
    %v260 = vld [vmem:[%s1 + $0x14] sm:$0x1]
    %261 = vset.pattern.permute.xlu0 20
    %262 = vperm.xlu0 %261, %v18
    %v263 = vpop.permute.xlu0 %262
    %v265 = vperm.slane %v260, 0
    %v266 = vmul.f32 %v263, %v265
    %v267 = vadd.f32 %v255, %v266
    %v268 = vld [vmem:[%s2 + $0x14] sm:$0x1]
    %v269 = vperm.slane %v268, 0
    %v270 = vmul.f32 %v263, %v269
    %v271 = vadd.f32 %v259, %v270
    %v272 = vld [vmem:[%s1 + $0x15] sm:$0x1]
    %273 = vset.pattern.permute.xlu0 21
    %274 = vperm.xlu0 %273, %v18
    %v275 = vpop.permute.xlu0 %274
    %v277 = vperm.slane %v272, 0
    %v278 = vmul.f32 %v275, %v277
    %v279 = vadd.f32 %v267, %v278
    %v280 = vld [vmem:[%s2 + $0x15] sm:$0x1]
    %v281 = vperm.slane %v280, 0
    %v282 = vmul.f32 %v275, %v281
    %v283 = vadd.f32 %v271, %v282
    %v284 = vld [vmem:[%s1 + $0x16] sm:$0x1]
    %285 = vset.pattern.permute.xlu0 22
    %286 = vperm.xlu0 %285, %v18
    %v287 = vpop.permute.xlu0 %286
    %v289 = vperm.slane %v284, 0
    %v290 = vmul.f32 %v287, %v289
    %v291 = vadd.f32 %v279, %v290
    %v292 = vld [vmem:[%s2 + $0x16] sm:$0x1]
    %v293 = vperm.slane %v292, 0
    %v294 = vmul.f32 %v287, %v293
    %v295 = vadd.f32 %v283, %v294
    %v296 = vld [vmem:[%s1 + $0x17] sm:$0x1]
    %297 = vset.pattern.permute.xlu0 23
    %298 = vperm.xlu0 %297, %v18
    %v299 = vpop.permute.xlu0 %298
    %v301 = vperm.slane %v296, 0
    %v302 = vmul.f32 %v299, %v301
    %v303 = vadd.f32 %v291, %v302
    %v304 = vld [vmem:[%s2 + $0x17] sm:$0x1]
    %v305 = vperm.slane %v304, 0
    %v306 = vmul.f32 %v299, %v305
    %v307 = vadd.f32 %v295, %v306
    %v308 = vld [vmem:[%s1 + $0x18] sm:$0x1]
    %309 = vset.pattern.permute.xlu0 24
    %310 = vperm.xlu0 %309, %v18
    %v311 = vpop.permute.xlu0 %310
    %v313 = vperm.slane %v308, 0
    %v314 = vmul.f32 %v311, %v313
    %v315 = vadd.f32 %v303, %v314
    %v316 = vld [vmem:[%s2 + $0x18] sm:$0x1]
    %v317 = vperm.slane %v316, 0
    %v318 = vmul.f32 %v311, %v317
    %v319 = vadd.f32 %v307, %v318
    %v320 = vld [vmem:[%s1 + $0x19] sm:$0x1]
    %321 = vset.pattern.permute.xlu0 25
    %322 = vperm.xlu0 %321, %v18
    %v323 = vpop.permute.xlu0 %322
    %v325 = vperm.slane %v320, 0
    %v326 = vmul.f32 %v323, %v325
    %v327 = vadd.f32 %v315, %v326
    %v328 = vld [vmem:[%s2 + $0x19] sm:$0x1]
    %v329 = vperm.slane %v328, 0
    %v330 = vmul.f32 %v323, %v329
    %v331 = vadd.f32 %v319, %v330
    %v332 = vld [vmem:[%s1 + $0x1a] sm:$0x1]
    %333 = vset.pattern.permute.xlu0 26
    %334 = vperm.xlu0 %333, %v18
    %v335 = vpop.permute.xlu0 %334
    %v337 = vperm.slane %v332, 0
    %v338 = vmul.f32 %v335, %v337
    %v339 = vadd.f32 %v327, %v338
    %v340 = vld [vmem:[%s2 + $0x1a] sm:$0x1]
    %v341 = vperm.slane %v340, 0
    %v342 = vmul.f32 %v335, %v341
    %v343 = vadd.f32 %v331, %v342
    %v344 = vld [vmem:[%s1 + $0x1b] sm:$0x1]
    %345 = vset.pattern.permute.xlu0 27
    %346 = vperm.xlu0 %345, %v18
    %v347 = vpop.permute.xlu0 %346
    %v349 = vperm.slane %v344, 0
    %v350 = vmul.f32 %v347, %v349
    %v351 = vadd.f32 %v339, %v350
    %v352 = vld [vmem:[%s2 + $0x1b] sm:$0x1]
    %v353 = vperm.slane %v352, 0
    %v354 = vmul.f32 %v347, %v353
    %v355 = vadd.f32 %v343, %v354
    %v356 = vld [vmem:[%s1 + $0x1c] sm:$0x1]
    %357 = vset.pattern.permute.xlu0 28
    %358 = vperm.xlu0 %357, %v18
    %v359 = vpop.permute.xlu0 %358
    %v361 = vperm.slane %v356, 0
    %v362 = vmul.f32 %v359, %v361
    %v363 = vadd.f32 %v351, %v362
    %v364 = vld [vmem:[%s2 + $0x1c] sm:$0x1]
    %v365 = vperm.slane %v364, 0
    %v366 = vmul.f32 %v359, %v365
    %v367 = vadd.f32 %v355, %v366
    %v368 = vld [vmem:[%s1 + $0x1d] sm:$0x1]
    %369 = vset.pattern.permute.xlu0 29
    %370 = vperm.xlu0 %369, %v18
    %v371 = vpop.permute.xlu0 %370
    %v373 = vperm.slane %v368, 0
    %v374 = vmul.f32 %v371, %v373
    %v375 = vadd.f32 %v363, %v374
    %v376 = vld [vmem:[%s2 + $0x1d] sm:$0x1]
    %v377 = vperm.slane %v376, 0
    %v378 = vmul.f32 %v371, %v377
    %v379 = vadd.f32 %v367, %v378
    %v380 = vld [vmem:[%s1 + $0x1e] sm:$0x1]
    %381 = vset.pattern.permute.xlu0 30
    %382 = vperm.xlu0 %381, %v18
    %v383 = vpop.permute.xlu0 %382
    %v385 = vperm.slane %v380, 0
    %v386 = vmul.f32 %v383, %v385
    %v387 = vadd.f32 %v375, %v386
    %v388 = vld [vmem:[%s2 + $0x1e] sm:$0x1]
    %v389 = vperm.slane %v388, 0
    %v390 = vmul.f32 %v383, %v389
    %v391 = vadd.f32 %v379, %v390
    %v392 = vld [vmem:[%s1 + $0x1f] sm:$0x1]
    %393 = vset.pattern.permute.xlu0 31
    %394 = vperm.xlu0 %393, %v18
    %v395 = vpop.permute.xlu0 %394
    %v397 = vperm.slane %v392, 0
    %v398 = vmul.f32 %v395, %v397
    %v399 = vadd.f32 %v387, %v398
    %v400 = vld [vmem:[%s2 + $0x1f] sm:$0x1]
    %v401 = vperm.slane %v400, 0
    %v402 = vmul.f32 %v395, %v401
    %v403 = vadd.f32 %v391, %v402
    %v404 = vmul.f32 %v399, 0.017453292
    %v405 = vand.u32 2147483647, %v404
    %vm406 = vcmp.le.f32.partialorder %v405, 0.7853982
    %vm407 = vcmp.lt.s32.totalorder %v404, 0
    %v408 = vand.u32 %v404, 2139095040
    %v409 = vshrl.u32 %v408, 23
    %v410 = vsub.s32 %v409, 127
    %v411 = vand.u32 2147483647, %v404
    %v412 = vand.u32 %v411, 8388607
    %v413 = vor.u32 %v412, 8388608
    %v414 = vsub.s32 0, %v413
    %v415 = vadd.s32 %v410, 1
    %vm416 = vcmp.gt.s32.totalorder %v415, 0
    %v417 = vsel %vm416, %v415, 0
    %v418 = vshrl.u32 %v417, 5
    %v419 = vand.u32 %v417, 31
    %v420 = vsub.s32 32, %v419
    %v421 = vshrl.u32 683565275, %v420
    %v422 = vshll.u32 683565275, %v419
    %v423 = vshrl.u32 2475754826, %v420
    %v424 = vor.u32 %v422, %v423
    %v425 = vshll.u32 2475754826, %v419
    %v426 = vshrl.u32 2131351028, %v420
    %v427 = vor.u32 %v425, %v426
    %v428 = vshll.u32 2131351028, %v419
    %v429 = vshrl.u32 2102212464, %v420
    %v430 = vor.u32 %v428, %v429
    %v431 = vshll.u32 2102212464, %v419
    %v432 = vshrl.u32 920167782, %v420
    %v433 = vor.u32 %v431, %v432
    %v434 = vshll.u32 920167782, %v419
    %v435 = vshrl.u32 1326507024, %v420
    %v436 = vor.u32 %v434, %v435
    %vm437 = vcmp.lt.s32.totalorder %v418, 1
    %vm438 = vcmp.lt.s32.totalorder %v418, 2
    %vm439 = vcmp.lt.s32.totalorder %v418, 3
    %vm440 = vcmp.lt.s32.totalorder %v418, 4
    %v441 = vsel %vm437, %v421, %v424
    %v442 = vsel %vm440, %v430, 2102212464
    %v443 = vsel %vm439, %v427, %v442
    %v444 = vsel %vm438, %v441, %v443
    %v445 = vsel %vm437, %v424, %v427
    %v446 = vsel %vm440, %v433, 920167782
    %v447 = vsel %vm439, %v430, %v446
    %v448 = vsel %vm438, %v445, %v447
    %v449 = vsel %vm437, %v427, %v430
    %v450 = vsel %vm440, %v436, 1326507024
    %v451 = vsel %vm439, %v433, %v450
    %v452 = vsel %vm438, %v449, %v451
    %v453 = vshll.u32 %v413, 8
    %v454 = vand.u32 %v453, 65535
    %v455 = vshrl.u32 %v453, 16
    %v456 = vand.u32 %v452, 65535
    %v457 = vshrl.u32 %v452, 16
    %v458 = vmul.u32 %v454, %v456
    %v459 = vmul.u32 %v454, %v457
    %v460 = vmul.u32 %v455, %v456
    %v461 = vmul.u32 %v455, %v457
    %v462 = vshll.u32 %v459, 16
    %v463 = vshrl.u32 %v459, 16
    %v464 = vshll.u32 %v460, 16
    %v465 = vshrl.u32 %v460, 16
    %vm466 = vc.u32 %v458, %v462
    %v467 = vsel %vm466, 1, 0
    %v468 = vadd.s32 %v458, %v462
    %v469 = vadd.s32 %v461, %v467
    %vm470 = vc.u32 %v468, %v464
    %v471 = vsel %vm470, 1, 0
    %v472 = vadd.s32 %v468, %v464
    %v473 = vadd.s32 %v469, %v471
    %v474 = vadd.s32 %v473, %v463
    %v475 = vadd.s32 %v474, %v465
    %v476 = vand.u32 %v453, 65535
    %v477 = vshrl.u32 %v453, 16
    %v478 = vand.u32 %v448, 65535
    %v479 = vshrl.u32 %v448, 16
    %v480 = vmul.u32 %v476, %v478
    %v481 = vmul.u32 %v476, %v479
    %v482 = vmul.u32 %v477, %v478
    %v483 = vmul.u32 %v477, %v479
    %v484 = vshll.u32 %v481, 16
    %v485 = vshrl.u32 %v481, 16
    %v486 = vshll.u32 %v482, 16
    %v487 = vshrl.u32 %v482, 16
    %vm488 = vc.u32 %v480, %v484
    %v489 = vsel %vm488, 1, 0
    %v490 = vadd.s32 %v480, %v484
    %v491 = vadd.s32 %v483, %v489
    %vm492 = vc.u32 %v490, %v486
    %v493 = vsel %vm492, 1, 0
    %v494 = vadd.s32 %v490, %v486
    %v495 = vadd.s32 %v491, %v493
    %v496 = vadd.s32 %v495, %v485
    %v497 = vadd.s32 %v496, %v487
    %v498 = vmul.u32 %v453, %v444
    %v499 = vadd.s32 %v475, %v494
    %vm500 = vc.u32 %v475, %v494
    %v501 = vadd.s32 %v497, 1
    %v502 = vsel %vm500, %v501, %v497
    %v503 = vadd.s32 %v498, %v502
    %v504 = vadd.s32 %v503, 536870912
    %v505 = vshrl.u32 %v504, 30
    %v506 = vshll.u32 %v505, 30
    %v507 = vsub.s32 %v503, %v506
    %vm508 = vcmp.lt.s32.totalorder %v507, 0
    %v509 = vsub.s32 0, %v507
    %v510 = vsel %vm508, %v509, %v507
    %v511 = vclz %v510
    %v512 = vsub.s32 %v511, 2
    %vm513 = vcmp.gt.s32.totalorder 0, %v512
    %v514 = vsel %vm513, 0, %v512
    %v515 = vsub.s32 32, %v514
    %v516 = vshll.u32 %v507, %v514
    %v517 = vshrl.u32 %v499, %v515
    %v518 = vor.u32 %v516, %v517
    %v519 = vsub.s32 4294967266, %v514
    %v520 = vadd.s32 %v519, 127
    %v521 = vshll.u32 %v520, 23
    %v522 = vor.u32 4788187, %v521
    %v523 = vand.u32 2147483647, %v522
    %v525 = vcvt.s32.f32 %v518
    %v526 = vmul.f32 %v525, %v523
    %v527 = vxor.u32 %v526, 2147483648
    %v528 = vsel %vm407, %v527, %v526
    %v529 = vsub.s32 4, %v505
    %v530 = vsel %vm407, %v529, %v505
    %v531 = vsel %vm406, %v404, %v528
    %v532 = vsel %vm406, 0, %v530
    %v533 = vmul.f32 %v531, %v531
    %v534 = vmul.f32 %v533, -0.001358992
    %v535 = vadd.f32 %v534, 0.041655596
    %v536 = vmul.f32 %v533, %v535
    %v537 = vadd.f32 %v536, -0.4999988
    %v538 = vmul.f32 %v533, %v537
    %v539 = vadd.f32 1.0, %v538
    %v540 = vmul.f32 %v531, %v531
    %v541 = vmul.f32 %v540, -0.00019511016
    %v542 = vadd.f32 %v541, 0.008332121
    %v543 = vmul.f32 %v540, %v542
    %v544 = vadd.f32 %v543, -0.16666654
    %v545 = vmul.f32 %v540, %v544
    %v546 = vadd.f32 %v545, 1.0
    %v547 = vmul.f32 %v546, %v531
    %vm548 = vweird.f32 %v404
    %v549 = vadd.s32 %v532, 3
    %v550 = vand.u32 %v549, 3
    %vm551 = vcmp.lt.s32.totalorder %v550, 2
    %vm552 = vcmp.eq.s32.totalorder %v550, 0
    %v553 = vxor.u32 %v547, 2147483648
    %v554 = vsel %vm552, %v539, %v553
    %vm555 = vcmp.eq.s32.totalorder %v550, 2
    %v556 = vxor.u32 %v539, 2147483648
    %v557 = vsel %vm555, %v556, %v547
    %v558 = vsel %vm551, %v554, %v557
    %v559 = vsel %vm548, nan, %v558
    %v560 = vand.u32 2147483647, %v404
    %vm561 = vcmp.le.f32.partialorder %v560, 0.7853982
    %vm562 = vcmp.lt.s32.totalorder %v404, 0
    %v563 = vand.u32 %v404, 2139095040
    %v564 = vshrl.u32 %v563, 23
    %v565 = vsub.s32 %v564, 127
    %v566 = vand.u32 2147483647, %v404
    %v567 = vand.u32 %v566, 8388607
    %v568 = vor.u32 %v567, 8388608
    %v569 = vsub.s32 0, %v568
    %v570 = vadd.s32 %v565, 1
    %vm571 = vcmp.gt.s32.totalorder %v570, 0
    %v572 = vsel %vm571, %v570, 0
    %v573 = vshrl.u32 %v572, 5
    %v574 = vand.u32 %v572, 31
    %v575 = vsub.s32 32, %v574
    %v576 = vshrl.u32 683565275, %v575
    %v577 = vshll.u32 683565275, %v574
    %v578 = vshrl.u32 2475754826, %v575
    %v579 = vor.u32 %v577, %v578
    %v580 = vshll.u32 2475754826, %v574
    %v581 = vshrl.u32 2131351028, %v575
    %v582 = vor.u32 %v580, %v581
    %v583 = vshll.u32 2131351028, %v574
    %v584 = vshrl.u32 2102212464, %v575
    %v585 = vor.u32 %v583, %v584
    %v586 = vshll.u32 2102212464, %v574
    %v587 = vshrl.u32 920167782, %v575
    %v588 = vor.u32 %v586, %v587
    %v589 = vshll.u32 920167782, %v574
    %v590 = vshrl.u32 1326507024, %v575
    %v591 = vor.u32 %v589, %v590
    %vm592 = vcmp.lt.s32.totalorder %v573, 1
    %vm593 = vcmp.lt.s32.totalorder %v573, 2
    %vm594 = vcmp.lt.s32.totalorder %v573, 3
    %vm595 = vcmp.lt.s32.totalorder %v573, 4
    %v596 = vsel %vm592, %v576, %v579
    %v597 = vsel %vm595, %v585, 2102212464
    %v598 = vsel %vm594, %v582, %v597
    %v599 = vsel %vm593, %v596, %v598
    %v600 = vsel %vm592, %v579, %v582
    %v601 = vsel %vm595, %v588, 920167782
    %v602 = vsel %vm594, %v585, %v601
    %v603 = vsel %vm593, %v600, %v602
    %v604 = vsel %vm592, %v582, %v585
    %v605 = vsel %vm595, %v591, 1326507024
    %v606 = vsel %vm594, %v588, %v605
    %v607 = vsel %vm593, %v604, %v606
    %v608 = vshll.u32 %v568, 8
    %v609 = vand.u32 %v608, 65535
    %v610 = vshrl.u32 %v608, 16
    %v611 = vand.u32 %v607, 65535
    %v612 = vshrl.u32 %v607, 16
    %v613 = vmul.u32 %v609, %v611
    %v614 = vmul.u32 %v609, %v612
    %v615 = vmul.u32 %v610, %v611
    %v616 = vmul.u32 %v610, %v612
    %v617 = vshll.u32 %v614, 16
    %v618 = vshrl.u32 %v614, 16
    %v619 = vshll.u32 %v615, 16
    %v620 = vshrl.u32 %v615, 16
    %vm621 = vc.u32 %v613, %v617
    %v622 = vsel %vm621, 1, 0
    %v623 = vadd.s32 %v613, %v617
    %v624 = vadd.s32 %v616, %v622
    %vm625 = vc.u32 %v623, %v619
    %v626 = vsel %vm625, 1, 0
    %v627 = vadd.s32 %v623, %v619
    %v628 = vadd.s32 %v624, %v626
    %v629 = vadd.s32 %v628, %v618
    %v630 = vadd.s32 %v629, %v620
    %v631 = vand.u32 %v608, 65535
    %v632 = vshrl.u32 %v608, 16
    %v633 = vand.u32 %v603, 65535
    %v634 = vshrl.u32 %v603, 16
    %v635 = vmul.u32 %v631, %v633
    %v636 = vmul.u32 %v631, %v634
    %v637 = vmul.u32 %v632, %v633
    %v638 = vmul.u32 %v632, %v634
    %v639 = vshll.u32 %v636, 16
    %v640 = vshrl.u32 %v636, 16
    %v641 = vshll.u32 %v637, 16
    %v642 = vshrl.u32 %v637, 16
    %vm643 = vc.u32 %v635, %v639
    %v644 = vsel %vm643, 1, 0
    %v645 = vadd.s32 %v635, %v639
    %v646 = vadd.s32 %v638, %v644
    %vm647 = vc.u32 %v645, %v641
    %v648 = vsel %vm647, 1, 0
    %v649 = vadd.s32 %v645, %v641
    %v650 = vadd.s32 %v646, %v648
    %v651 = vadd.s32 %v650, %v640
    %v652 = vadd.s32 %v651, %v642
    %v653 = vmul.u32 %v608, %v599
    %v654 = vadd.s32 %v630, %v649
    %vm655 = vc.u32 %v630, %v649
    %v656 = vadd.s32 %v652, 1
    %v657 = vsel %vm655, %v656, %v652
    %v658 = vadd.s32 %v653, %v657
    %v659 = vadd.s32 %v658, 536870912
    %v660 = vshrl.u32 %v659, 30
    %v661 = vshll.u32 %v660, 30
    %v662 = vsub.s32 %v658, %v661
    %vm663 = vcmp.lt.s32.totalorder %v662, 0
    %v664 = vsub.s32 0, %v662
    %v665 = vsel %vm663, %v664, %v662
    %v666 = vclz %v665
    %v667 = vsub.s32 %v666, 2
    %vm668 = vcmp.gt.s32.totalorder 0, %v667
    %v669 = vsel %vm668, 0, %v667
    %v670 = vsub.s32 32, %v669
    %v671 = vshll.u32 %v662, %v669
    %v672 = vshrl.u32 %v654, %v670
    %v673 = vor.u32 %v671, %v672
    %v674 = vsub.s32 4294967266, %v669
    %v675 = vadd.s32 %v674, 127
    %v676 = vshll.u32 %v675, 23
    %v677 = vor.u32 4788187, %v676
    %v678 = vand.u32 2147483647, %v677
    %v680 = vcvt.s32.f32 %v673
    %v681 = vmul.f32 %v680, %v678
    %v682 = vxor.u32 %v681, 2147483648
    %v683 = vsel %vm562, %v682, %v681
    %v684 = vsub.s32 4, %v660
    %v685 = vsel %vm562, %v684, %v660
    %v686 = vsel %vm561, %v404, %v683
    %v687 = vsel %vm561, 0, %v685
    %v688 = vmul.f32 %v686, %v686
    %v689 = vmul.f32 %v688, -0.001358992
    %v690 = vadd.f32 %v689, 0.041655596
    %v691 = vmul.f32 %v688, %v690
    %v692 = vadd.f32 %v691, -0.4999988
    %v693 = vmul.f32 %v688, %v692
    %v694 = vadd.f32 1.0, %v693
    %v695 = vmul.f32 %v686, %v686
    %v696 = vmul.f32 %v695, -0.00019511016
    %v697 = vadd.f32 %v696, 0.008332121
    %v698 = vmul.f32 %v695, %v697
    %v699 = vadd.f32 %v698, -0.16666654
    %v700 = vmul.f32 %v695, %v699
    %v701 = vadd.f32 %v700, 1.0
    %v702 = vmul.f32 %v701, %v686
    %vm703 = vweird.f32 %v404
    %v704 = vand.u32 %v687, 3
    %vm705 = vcmp.lt.s32.totalorder %v704, 2
    %vm706 = vcmp.eq.s32.totalorder %v704, 0
    %v707 = vxor.u32 %v702, 2147483648
    %v708 = vsel %vm706, %v694, %v707
    %vm709 = vcmp.eq.s32.totalorder %v704, 2
    %v710 = vxor.u32 %v694, 2147483648
    %v711 = vsel %vm709, %v710, %v702
    %v712 = vsel %vm705, %v708, %v711
    %v713 = vsel %vm703, nan, %v712
    %v715 = vrot.slane %v713, 7
    %v717 = vmul.f32 %v713, %v715
    %v718 = vmul.f32 %v559, %v715
    %v719 = vsub.f32 0.0, %v559
    %v721 = vrot.slane %v559, 7
    %v723 = vmul.f32 %v713, %v721
    %v724 = vrot.slane %v559, 6
    %v726 = vmul.f32 %v723, %v724
    %v727 = vrot.slane %v713, 6
    %v729 = vmul.f32 %v559, %v727
    %v730 = vsub.f32 %v726, %v729
    %v731 = vmul.f32 %v559, %v721
    %v732 = vmul.f32 %v731, %v724
    %v733 = vmul.f32 %v713, %v727
    %v734 = vadd.f32 %v732, %v733
    %v735 = vmul.f32 %v723, %v727
    %v736 = vmul.f32 %v559, %v724
    %v737 = vadd.f32 %v735, %v736
    %v738 = vmul.f32 %v731, %v727
    %v739 = vmul.f32 %v713, %v724
    %v740 = vsub.f32 %v738, %v739
    %v741 = vmul.f32 %v403, 0.017453292
    %v742 = vand.u32 2147483647, %v741
    %vm743 = vcmp.le.f32.partialorder %v742, 0.7853982
    %vm744 = vcmp.lt.s32.totalorder %v741, 0
    %v745 = vand.u32 %v741, 2139095040
    %v746 = vshrl.u32 %v745, 23
    %v747 = vsub.s32 %v746, 127
    %v748 = vand.u32 2147483647, %v741
    %v749 = vand.u32 %v748, 8388607
    %v750 = vor.u32 %v749, 8388608
    %v751 = vsub.s32 0, %v750
    %v752 = vadd.s32 %v747, 1
    %vm753 = vcmp.gt.s32.totalorder %v752, 0
    %v754 = vsel %vm753, %v752, 0
    %v755 = vshrl.u32 %v754, 5
    %v756 = vand.u32 %v754, 31
    %v757 = vsub.s32 32, %v756
    %v758 = vshrl.u32 683565275, %v757
    %v759 = vshll.u32 683565275, %v756
    %v760 = vshrl.u32 2475754826, %v757
    %v761 = vor.u32 %v759, %v760
    %v762 = vshll.u32 2475754826, %v756
    %v763 = vshrl.u32 2131351028, %v757
    %v764 = vor.u32 %v762, %v763
    %v765 = vshll.u32 2131351028, %v756
    %v766 = vshrl.u32 2102212464, %v757
    %v767 = vor.u32 %v765, %v766
    %v768 = vshll.u32 2102212464, %v756
    %v769 = vshrl.u32 920167782, %v757
    %v770 = vor.u32 %v768, %v769
    %v771 = vshll.u32 920167782, %v756
    %v772 = vshrl.u32 1326507024, %v757
    %v773 = vor.u32 %v771, %v772
    %vm774 = vcmp.lt.s32.totalorder %v755, 1
    %vm775 = vcmp.lt.s32.totalorder %v755, 2
    %vm776 = vcmp.lt.s32.totalorder %v755, 3
    %vm777 = vcmp.lt.s32.totalorder %v755, 4
    %v778 = vsel %vm774, %v758, %v761
    %v779 = vsel %vm777, %v767, 2102212464
    %v780 = vsel %vm776, %v764, %v779
    %v781 = vsel %vm775, %v778, %v780
    %v782 = vsel %vm774, %v761, %v764
    %v783 = vsel %vm777, %v770, 920167782
    %v784 = vsel %vm776, %v767, %v783
    %v785 = vsel %vm775, %v782, %v784
    %v786 = vsel %vm774, %v764, %v767
    %v787 = vsel %vm777, %v773, 1326507024
    %v788 = vsel %vm776, %v770, %v787
    %v789 = vsel %vm775, %v786, %v788
    %v790 = vshll.u32 %v750, 8
    %v791 = vand.u32 %v790, 65535
    %v792 = vshrl.u32 %v790, 16
    %v793 = vand.u32 %v789, 65535
    %v794 = vshrl.u32 %v789, 16
    %v795 = vmul.u32 %v791, %v793
    %v796 = vmul.u32 %v791, %v794
    %v797 = vmul.u32 %v792, %v793
    %v798 = vmul.u32 %v792, %v794
    %v799 = vshll.u32 %v796, 16
    %v800 = vshrl.u32 %v796, 16
    %v801 = vshll.u32 %v797, 16
    %v802 = vshrl.u32 %v797, 16
    %vm803 = vc.u32 %v795, %v799
    %v804 = vsel %vm803, 1, 0
    %v805 = vadd.s32 %v795, %v799
    %v806 = vadd.s32 %v798, %v804
    %vm807 = vc.u32 %v805, %v801
    %v808 = vsel %vm807, 1, 0
    %v809 = vadd.s32 %v805, %v801
    %v810 = vadd.s32 %v806, %v808
    %v811 = vadd.s32 %v810, %v800
    %v812 = vadd.s32 %v811, %v802
    %v813 = vand.u32 %v790, 65535
    %v814 = vshrl.u32 %v790, 16
    %v815 = vand.u32 %v785, 65535
    %v816 = vshrl.u32 %v785, 16
    %v817 = vmul.u32 %v813, %v815
    %v818 = vmul.u32 %v813, %v816
    %v819 = vmul.u32 %v814, %v815
    %v820 = vmul.u32 %v814, %v816
    %v821 = vshll.u32 %v818, 16
    %v822 = vshrl.u32 %v818, 16
    %v823 = vshll.u32 %v819, 16
    %v824 = vshrl.u32 %v819, 16
    %vm825 = vc.u32 %v817, %v821
    %v826 = vsel %vm825, 1, 0
    %v827 = vadd.s32 %v817, %v821
    %v828 = vadd.s32 %v820, %v826
    %vm829 = vc.u32 %v827, %v823
    %v830 = vsel %vm829, 1, 0
    %v831 = vadd.s32 %v827, %v823
    %v832 = vadd.s32 %v828, %v830
    %v833 = vadd.s32 %v832, %v822
    %v834 = vadd.s32 %v833, %v824
    %v835 = vmul.u32 %v790, %v781
    %v836 = vadd.s32 %v812, %v831
    %vm837 = vc.u32 %v812, %v831
    %v838 = vadd.s32 %v834, 1
    %v839 = vsel %vm837, %v838, %v834
    %v840 = vadd.s32 %v835, %v839
    %v841 = vadd.s32 %v840, 536870912
    %v842 = vshrl.u32 %v841, 30
    %v843 = vshll.u32 %v842, 30
    %v844 = vsub.s32 %v840, %v843
    %vm845 = vcmp.lt.s32.totalorder %v844, 0
    %v846 = vsub.s32 0, %v844
    %v847 = vsel %vm845, %v846, %v844
    %v848 = vclz %v847
    %v849 = vsub.s32 %v848, 2
    %vm850 = vcmp.gt.s32.totalorder 0, %v849
    %v851 = vsel %vm850, 0, %v849
    %v852 = vsub.s32 32, %v851
    %v853 = vshll.u32 %v844, %v851
    %v854 = vshrl.u32 %v836, %v852
    %v855 = vor.u32 %v853, %v854
    %v856 = vsub.s32 4294967266, %v851
    %v857 = vadd.s32 %v856, 127
    %v858 = vshll.u32 %v857, 23
    %v859 = vor.u32 4788187, %v858
    %v860 = vand.u32 2147483647, %v859
    %v862 = vcvt.s32.f32 %v855
    %v863 = vmul.f32 %v862, %v860
    %v864 = vxor.u32 %v863, 2147483648
    %v865 = vsel %vm744, %v864, %v863
    %v866 = vsub.s32 4, %v842
    %v867 = vsel %vm744, %v866, %v842
    %v868 = vsel %vm743, %v741, %v865
    %v869 = vsel %vm743, 0, %v867
    %v870 = vmul.f32 %v868, %v868
    %v871 = vmul.f32 %v870, -0.001358992
    %v872 = vadd.f32 %v871, 0.041655596
    %v873 = vmul.f32 %v870, %v872
    %v874 = vadd.f32 %v873, -0.4999988
    %v875 = vmul.f32 %v870, %v874
    %v876 = vadd.f32 1.0, %v875
    %v877 = vmul.f32 %v868, %v868
    %v878 = vmul.f32 %v877, -0.00019511016
    %v879 = vadd.f32 %v878, 0.008332121
    %v880 = vmul.f32 %v877, %v879
    %v881 = vadd.f32 %v880, -0.16666654
    %v882 = vmul.f32 %v877, %v881
    %v883 = vadd.f32 %v882, 1.0
    %v884 = vmul.f32 %v883, %v868
    %vm885 = vweird.f32 %v741
    %v886 = vadd.s32 %v869, 3
    %v887 = vand.u32 %v886, 3
    %vm888 = vcmp.lt.s32.totalorder %v887, 2
    %vm889 = vcmp.eq.s32.totalorder %v887, 0
    %v890 = vxor.u32 %v884, 2147483648
    %v891 = vsel %vm889, %v876, %v890
    %vm892 = vcmp.eq.s32.totalorder %v887, 2
    %v893 = vxor.u32 %v876, 2147483648
    %v894 = vsel %vm892, %v893, %v884
    %v895 = vsel %vm888, %v891, %v894
    %v896 = vsel %vm885, nan, %v895
    %v897 = vand.u32 2147483647, %v741
    %vm898 = vcmp.le.f32.partialorder %v897, 0.7853982
    %vm899 = vcmp.lt.s32.totalorder %v741, 0
    %v900 = vand.u32 %v741, 2139095040
    %v901 = vshrl.u32 %v900, 23
    %v902 = vsub.s32 %v901, 127
    %v903 = vand.u32 2147483647, %v741
    %v904 = vand.u32 %v903, 8388607
    %v905 = vor.u32 %v904, 8388608
    %v906 = vsub.s32 0, %v905
    %v907 = vadd.s32 %v902, 1
    %vm908 = vcmp.gt.s32.totalorder %v907, 0
    %v909 = vsel %vm908, %v907, 0
    %v910 = vshrl.u32 %v909, 5
    %v911 = vand.u32 %v909, 31
    %v912 = vsub.s32 32, %v911
    %v913 = vshrl.u32 683565275, %v912
    %v914 = vshll.u32 683565275, %v911
    %v915 = vshrl.u32 2475754826, %v912
    %v916 = vor.u32 %v914, %v915
    %v917 = vshll.u32 2475754826, %v911
    %v918 = vshrl.u32 2131351028, %v912
    %v919 = vor.u32 %v917, %v918
    %v920 = vshll.u32 2131351028, %v911
    %v921 = vshrl.u32 2102212464, %v912
    %v922 = vor.u32 %v920, %v921
    %v923 = vshll.u32 2102212464, %v911
    %v924 = vshrl.u32 920167782, %v912
    %v925 = vor.u32 %v923, %v924
    %v926 = vshll.u32 920167782, %v911
    %v927 = vshrl.u32 1326507024, %v912
    %v928 = vor.u32 %v926, %v927
    %vm929 = vcmp.lt.s32.totalorder %v910, 1
    %vm930 = vcmp.lt.s32.totalorder %v910, 2
    %vm931 = vcmp.lt.s32.totalorder %v910, 3
    %vm932 = vcmp.lt.s32.totalorder %v910, 4
    %v933 = vsel %vm929, %v913, %v916
    %v934 = vsel %vm932, %v922, 2102212464
    %v935 = vsel %vm931, %v919, %v934
    %v936 = vsel %vm930, %v933, %v935
    %v937 = vsel %vm929, %v916, %v919
    %v938 = vsel %vm932, %v925, 920167782
    %v939 = vsel %vm931, %v922, %v938
    %v940 = vsel %vm930, %v937, %v939
    %v941 = vsel %vm929, %v919, %v922
    %v942 = vsel %vm932, %v928, 1326507024
    %v943 = vsel %vm931, %v925, %v942
    %v944 = vsel %vm930, %v941, %v943
    %v945 = vshll.u32 %v905, 8
    %v946 = vand.u32 %v945, 65535
    %v947 = vshrl.u32 %v945, 16
    %v948 = vand.u32 %v944, 65535
    %v949 = vshrl.u32 %v944, 16
    %v950 = vmul.u32 %v946, %v948
    %v951 = vmul.u32 %v946, %v949
    %v952 = vmul.u32 %v947, %v948
    %v953 = vmul.u32 %v947, %v949
    %v954 = vshll.u32 %v951, 16
    %v955 = vshrl.u32 %v951, 16
    %v956 = vshll.u32 %v952, 16
    %v957 = vshrl.u32 %v952, 16
    %vm958 = vc.u32 %v950, %v954
    %v959 = vsel %vm958, 1, 0
    %v960 = vadd.s32 %v950, %v954
    %v961 = vadd.s32 %v953, %v959
    %vm962 = vc.u32 %v960, %v956
    %v963 = vsel %vm962, 1, 0
    %v964 = vadd.s32 %v960, %v956
    %v965 = vadd.s32 %v961, %v963
    %v966 = vadd.s32 %v965, %v955
    %v967 = vadd.s32 %v966, %v957
    %v968 = vand.u32 %v945, 65535
    %v969 = vshrl.u32 %v945, 16
    %v970 = vand.u32 %v940, 65535
    %v971 = vshrl.u32 %v940, 16
    %v972 = vmul.u32 %v968, %v970
    %v973 = vmul.u32 %v968, %v971
    %v974 = vmul.u32 %v969, %v970
    %v975 = vmul.u32 %v969, %v971
    %v976 = vshll.u32 %v973, 16
    %v977 = vshrl.u32 %v973, 16
    %v978 = vshll.u32 %v974, 16
    %v979 = vshrl.u32 %v974, 16
    %vm980 = vc.u32 %v972, %v976
    %v981 = vsel %vm980, 1, 0
    %v982 = vadd.s32 %v972, %v976
    %v983 = vadd.s32 %v975, %v981
    %vm984 = vc.u32 %v982, %v978
    %v985 = vsel %vm984, 1, 0
    %v986 = vadd.s32 %v982, %v978
    %v987 = vadd.s32 %v983, %v985
    %v988 = vadd.s32 %v987, %v977
    %v989 = vadd.s32 %v988, %v979
    %v990 = vmul.u32 %v945, %v936
    %v991 = vadd.s32 %v967, %v986
    %vm992 = vc.u32 %v967, %v986
    %v993 = vadd.s32 %v989, 1
    %v994 = vsel %vm992, %v993, %v989
    %v995 = vadd.s32 %v990, %v994
    %v996 = vadd.s32 %v995, 536870912
    %v997 = vshrl.u32 %v996, 30
    %v998 = vshll.u32 %v997, 30
    %v999 = vsub.s32 %v995, %v998
    %vm1000 = vcmp.lt.s32.totalorder %v999, 0
    %v1001 = vsub.s32 0, %v999
    %v1002 = vsel %vm1000, %v1001, %v999
    %v1003 = vclz %v1002
    %v1004 = vsub.s32 %v1003, 2
    %vm1005 = vcmp.gt.s32.totalorder 0, %v1004
    %v1006 = vsel %vm1005, 0, %v1004
    %v1007 = vsub.s32 32, %v1006
    %v1008 = vshll.u32 %v999, %v1006
    %v1009 = vshrl.u32 %v991, %v1007
    %v1010 = vor.u32 %v1008, %v1009
    %v1011 = vsub.s32 4294967266, %v1006
    %v1012 = vadd.s32 %v1011, 127
    %v1013 = vshll.u32 %v1012, 23
    %v1014 = vor.u32 4788187, %v1013
    %v1015 = vand.u32 2147483647, %v1014
    %v1017 = vcvt.s32.f32 %v1010
    %v1018 = vmul.f32 %v1017, %v1015
    %v1019 = vxor.u32 %v1018, 2147483648
    %v1020 = vsel %vm899, %v1019, %v1018
    %v1021 = vsub.s32 4, %v997
    %v1022 = vsel %vm899, %v1021, %v997
    %v1023 = vsel %vm898, %v741, %v1020
    %v1024 = vsel %vm898, 0, %v1022
    %v1025 = vmul.f32 %v1023, %v1023
    %v1026 = vmul.f32 %v1025, -0.001358992
    %v1027 = vadd.f32 %v1026, 0.041655596
    %v1028 = vmul.f32 %v1025, %v1027
    %v1029 = vadd.f32 %v1028, -0.4999988
    %v1030 = vmul.f32 %v1025, %v1029
    %v1031 = vadd.f32 1.0, %v1030
    %v1032 = vmul.f32 %v1023, %v1023
    %v1033 = vmul.f32 %v1032, -0.00019511016
    %v1034 = vadd.f32 %v1033, 0.008332121
    %v1035 = vmul.f32 %v1032, %v1034
    %v1036 = vadd.f32 %v1035, -0.16666654
    %v1037 = vmul.f32 %v1032, %v1036
    %v1038 = vadd.f32 %v1037, 1.0
    %v1039 = vmul.f32 %v1038, %v1023
    %vm1040 = vweird.f32 %v741
    %v1041 = vand.u32 %v1024, 3
    %vm1042 = vcmp.lt.s32.totalorder %v1041, 2
    %vm1043 = vcmp.eq.s32.totalorder %v1041, 0
    %v1044 = vxor.u32 %v1039, 2147483648
    %v1045 = vsel %vm1043, %v1031, %v1044
    %vm1046 = vcmp.eq.s32.totalorder %v1041, 2
    %v1047 = vxor.u32 %v1031, 2147483648
    %v1048 = vsel %vm1046, %v1047, %v1039
    %v1049 = vsel %vm1042, %v1045, %v1048
    %v1050 = vsel %vm1040, nan, %v1049
    %v1052 = vrot.slane %v1050, 7
    %v1054 = vmul.f32 %v1050, %v1052
    %v1055 = vmul.f32 %v896, %v1052
    %v1056 = vsub.f32 0.0, %v896
    %v1058 = vrot.slane %v896, 7
    %v1060 = vmul.f32 %v1050, %v1058
    %v1061 = vrot.slane %v896, 6
    %v1063 = vmul.f32 %v1060, %v1061
    %v1064 = vrot.slane %v1050, 6
    %v1066 = vmul.f32 %v896, %v1064
    %v1067 = vsub.f32 %v1063, %v1066
    %v1068 = vmul.f32 %v896, %v1058
    %v1069 = vmul.f32 %v1068, %v1061
    %v1070 = vmul.f32 %v1050, %v1064
    %v1071 = vadd.f32 %v1069, %v1070
    %v1072 = vmul.f32 %v1060, %v1064
    %v1073 = vmul.f32 %v896, %v1061
    %v1074 = vadd.f32 %v1072, %v1073
    %v1075 = vmul.f32 %v1068, %v1064
    %v1076 = vmul.f32 %v1050, %v1061
    %v1077 = vsub.f32 %v1075, %v1076
    %v1078 = vmul.f32 %v717, %v1054
    %v1079 = vmul.f32 %v730, %v1067
    %v1080 = vadd.f32 %v1078, %v1079
    %v1081 = vmul.f32 %v737, %v1074
    %v1082 = vadd.f32 %v1080, %v1081
    %v1083 = vmul.f32 %v717, %v1055
    %v1084 = vmul.f32 %v730, %v1071
    %v1085 = vadd.f32 %v1083, %v1084
    %v1086 = vmul.f32 %v737, %v1077
    %v1087 = vadd.f32 %v1085, %v1086
    %v1089 = vrot.slane %v1056, 7
    %v1091 = vmul.f32 %v717, %v1089
    %v1093 = vrot.slane %v1060, 7
    %v1095 = vmul.f32 %v730, %v1093
    %v1096 = vadd.f32 %v1091, %v1095
    %v1098 = vrot.slane %v1054, 7
    %v1100 = vmul.f32 %v737, %v1098
    %v1101 = vadd.f32 %v1096, %v1100
    %v1103 = vrot.slane %v403, 1
    %v1105 = vmul.f32 %v1082, %v1103
    %v1107 = vrot.slane %v1105, 7
    %v1109 = vsub.f32 %v399, %v1107
    %v1110 = vrot.slane %v403, 2
    %v1112 = vmul.f32 %v1087, %v1110
    %v1114 = vrot.slane %v1112, 7
    %v1116 = vsub.f32 %v1109, %v1114
    %v1117 = vrot.slane %v403, 3
    %v1119 = vmul.f32 %v1101, %v1117
    %v1121 = vrot.slane %v1119, 7
    %v1123 = vsub.f32 %v1116, %v1121
    %v1124 = vmul.f32 %v718, %v1054
    %v1125 = vmul.f32 %v734, %v1067
    %v1126 = vadd.f32 %v1124, %v1125
    %v1127 = vmul.f32 %v740, %v1074
    %v1128 = vadd.f32 %v1126, %v1127
    %v1129 = vmul.f32 %v718, %v1055
    %v1130 = vmul.f32 %v734, %v1071
    %v1131 = vadd.f32 %v1129, %v1130
    %v1132 = vmul.f32 %v740, %v1077
    %v1133 = vadd.f32 %v1131, %v1132
    %v1134 = vmul.f32 %v718, %v1089
    %v1135 = vmul.f32 %v734, %v1093
    %v1136 = vadd.f32 %v1134, %v1135
    %v1137 = vmul.f32 %v740, %v1098
    %v1138 = vadd.f32 %v1136, %v1137
    %v1139 = vmul.f32 %v1128, %v1103
    %v1141 = vrot.slane %v1139, 6
    %v1143 = vsub.f32 %v399, %v1141
    %v1144 = vmul.f32 %v1133, %v1110
    %v1146 = vrot.slane %v1144, 6
    %v1148 = vsub.f32 %v1143, %v1146
    %v1149 = vmul.f32 %v1138, %v1117
    %v1151 = vrot.slane %v1149, 6
    %v1153 = vsub.f32 %v1148, %v1151
    %v1154 = vrot.slane %v1054, 1
    %v1156 = vmul.f32 %v719, %v1154
    %v1158 = vrot.slane %v1067, 1
    %v1160 = vmul.f32 %v723, %v1158
    %v1161 = vadd.f32 %v1156, %v1160
    %v1163 = vrot.slane %v1074, 1
    %v1165 = vmul.f32 %v717, %v1163
    %v1166 = vadd.f32 %v1161, %v1165
    %v1168 = vrot.slane %v1055, 1
    %v1170 = vmul.f32 %v719, %v1168
    %v1172 = vrot.slane %v1071, 1
    %v1174 = vmul.f32 %v723, %v1172
    %v1175 = vadd.f32 %v1170, %v1174
    %v1177 = vrot.slane %v1077, 1
    %v1179 = vmul.f32 %v717, %v1177
    %v1180 = vadd.f32 %v1175, %v1179
    %v1181 = vmul.f32 %v719, %v1056
    %v1182 = vmul.f32 %v723, %v1060
    %v1183 = vadd.f32 %v1181, %v1182
    %v1184 = vadd.f32 %v1183, %v1078
    %v1185 = vmul.f32 %v1166, %v1110
    %v1187 = vrot.slane %v1185, 4
    %v1189 = vsub.f32 %v399, %v1187
    %v1190 = vmul.f32 %v1180, %v1117
    %v1192 = vrot.slane %v1190, 4
    %v1194 = vsub.f32 %v1189, %v1192
    %v1195 = vrot.slane %v403, 4
    %v1197 = vmul.f32 %v1184, %v1195
    %v1199 = vrot.slane %v1197, 4
    %v1201 = vsub.f32 %v1194, %v1199
    %v1202 = vadd.f32 %v1082, %v1133
    %v1204 = vrot.slane %v1184, 7
    %v1206 = vadd.f32 %v1202, %v1204
    %v1207 = vsub.f32 %v1206, 1.0
    %v1208 = vmul.f32 %v1207, 0.5
    %v1209 = vmax.f32 %v1208, -0.999999
    %v1210 = vmin.f32 %v1209, 0.999999
    %v1211 = vand.u32 2147483647, %v1210
    %v1212 = vmul.f32 %v1211, 0.0187293
    %v1213 = vsub.f32 0.074261, %v1212
    %v1214 = vmul.f32 %v1211, %v1213
    %v1215 = vadd.f32 %v1214, -0.2121144
    %v1216 = vmul.f32 %v1211, %v1215
    %v1217 = vadd.f32 %v1216, 1.5707288
    %v1218 = vsub.f32 1.0, %v1211
    %v1219 = vmax.f32 %v1218, 0.0
    %v1220 = vrsqrt.pop %v1219
    %v1221 = vmul.f32 %v1220, %v1219
    %v1222 = vmul.f32 %v1221, %v1220
    %v1223 = vmul.f32 0.5, %v1222
    %v1224 = vsub.f32 1.5, %v1223
    %v1225 = vmul.f32 %v1220, %v1224
    %v1226 = vmul.f32 %v1219, %v1225
    %vm1227 = vcmp.eq.f32.partialorder %v1219, inf
    %v1228 = vsel %vm1227, %v1219, %v1226
    %vm1229 = vcmp.eq.f32.partialorder %v1219, 0.0
    %v1230 = vand.u32 %v1219, 2147483648
    %v1231 = vsel %vm1229, %v1230, %v1228
    %v1232 = vmul.f32 %v1231, %v1217
    %vm1233 = vcmp.lt.f32.partialorder %v1210, 0.0
    %v1234 = vsub.f32 3.1415927, %v1232
    %v1235 = vsel %vm1233, %v1234, %v1232
    %v1236 = vand.u32 2147483647, %v1235
    %vm1237 = vcmp.le.f32.partialorder %v1236, 0.7853982
    %vm1238 = vcmp.lt.s32.totalorder %v1235, 0
    %v1239 = vand.u32 %v1235, 2139095040
    %v1240 = vshrl.u32 %v1239, 23
    %v1241 = vsub.s32 %v1240, 127
    %v1242 = vand.u32 2147483647, %v1235
    %v1243 = vand.u32 %v1242, 8388607
    %v1244 = vor.u32 %v1243, 8388608
    %v1245 = vsub.s32 0, %v1244
    %v1246 = vadd.s32 %v1241, 1
    %vm1247 = vcmp.gt.s32.totalorder %v1246, 0
    %v1248 = vsel %vm1247, %v1246, 0
    %v1249 = vshrl.u32 %v1248, 5
    %v1250 = vand.u32 %v1248, 31
    %v1251 = vsub.s32 32, %v1250
    %v1252 = vshrl.u32 683565275, %v1251
    %v1253 = vshll.u32 683565275, %v1250
    %v1254 = vshrl.u32 2475754826, %v1251
    %v1255 = vor.u32 %v1253, %v1254
    %v1256 = vshll.u32 2475754826, %v1250
    %v1257 = vshrl.u32 2131351028, %v1251
    %v1258 = vor.u32 %v1256, %v1257
    %v1259 = vshll.u32 2131351028, %v1250
    %v1260 = vshrl.u32 2102212464, %v1251
    %v1261 = vor.u32 %v1259, %v1260
    %v1262 = vshll.u32 2102212464, %v1250
    %v1263 = vshrl.u32 920167782, %v1251
    %v1264 = vor.u32 %v1262, %v1263
    %v1265 = vshll.u32 920167782, %v1250
    %v1266 = vshrl.u32 1326507024, %v1251
    %v1267 = vor.u32 %v1265, %v1266
    %vm1268 = vcmp.lt.s32.totalorder %v1249, 1
    %vm1269 = vcmp.lt.s32.totalorder %v1249, 2
    %vm1270 = vcmp.lt.s32.totalorder %v1249, 3
    %vm1271 = vcmp.lt.s32.totalorder %v1249, 4
    %v1272 = vsel %vm1268, %v1252, %v1255
    %v1273 = vsel %vm1271, %v1261, 2102212464
    %v1274 = vsel %vm1270, %v1258, %v1273
    %v1275 = vsel %vm1269, %v1272, %v1274
    %v1276 = vsel %vm1268, %v1255, %v1258
    %v1277 = vsel %vm1271, %v1264, 920167782
    %v1278 = vsel %vm1270, %v1261, %v1277
    %v1279 = vsel %vm1269, %v1276, %v1278
    %v1280 = vsel %vm1268, %v1258, %v1261
    %v1281 = vsel %vm1271, %v1267, 1326507024
    %v1282 = vsel %vm1270, %v1264, %v1281
    %v1283 = vsel %vm1269, %v1280, %v1282
    %v1284 = vshll.u32 %v1244, 8
    %v1285 = vand.u32 %v1284, 65535
    %v1286 = vshrl.u32 %v1284, 16
    %v1287 = vand.u32 %v1283, 65535
    %v1288 = vshrl.u32 %v1283, 16
    %v1289 = vmul.u32 %v1285, %v1287
    %v1290 = vmul.u32 %v1285, %v1288
    %v1291 = vmul.u32 %v1286, %v1287
    %v1292 = vmul.u32 %v1286, %v1288
    %v1293 = vshll.u32 %v1290, 16
    %v1294 = vshrl.u32 %v1290, 16
    %v1295 = vshll.u32 %v1291, 16
    %v1296 = vshrl.u32 %v1291, 16
    %vm1297 = vc.u32 %v1289, %v1293
    %v1298 = vsel %vm1297, 1, 0
    %v1299 = vadd.s32 %v1289, %v1293
    %v1300 = vadd.s32 %v1292, %v1298
    %vm1301 = vc.u32 %v1299, %v1295
    %v1302 = vsel %vm1301, 1, 0
    %v1303 = vadd.s32 %v1299, %v1295
    %v1304 = vadd.s32 %v1300, %v1302
    %v1305 = vadd.s32 %v1304, %v1294
    %v1306 = vadd.s32 %v1305, %v1296
    %v1307 = vand.u32 %v1284, 65535
    %v1308 = vshrl.u32 %v1284, 16
    %v1309 = vand.u32 %v1279, 65535
    %v1310 = vshrl.u32 %v1279, 16
    %v1311 = vmul.u32 %v1307, %v1309
    %v1312 = vmul.u32 %v1307, %v1310
    %v1313 = vmul.u32 %v1308, %v1309
    %v1314 = vmul.u32 %v1308, %v1310
    %v1315 = vshll.u32 %v1312, 16
    %v1316 = vshrl.u32 %v1312, 16
    %v1317 = vshll.u32 %v1313, 16
    %v1318 = vshrl.u32 %v1313, 16
    %vm1319 = vc.u32 %v1311, %v1315
    %v1320 = vsel %vm1319, 1, 0
    %v1321 = vadd.s32 %v1311, %v1315
    %v1322 = vadd.s32 %v1314, %v1320
    %vm1323 = vc.u32 %v1321, %v1317
    %v1324 = vsel %vm1323, 1, 0
    %v1325 = vadd.s32 %v1321, %v1317
    %v1326 = vadd.s32 %v1322, %v1324
    %v1327 = vadd.s32 %v1326, %v1316
    %v1328 = vadd.s32 %v1327, %v1318
    %v1329 = vmul.u32 %v1284, %v1275
    %v1330 = vadd.s32 %v1306, %v1325
    %vm1331 = vc.u32 %v1306, %v1325
    %v1332 = vadd.s32 %v1328, 1
    %v1333 = vsel %vm1331, %v1332, %v1328
    %v1334 = vadd.s32 %v1329, %v1333
    %v1335 = vadd.s32 %v1334, 536870912
    %v1336 = vshrl.u32 %v1335, 30
    %v1337 = vshll.u32 %v1336, 30
    %v1338 = vsub.s32 %v1334, %v1337
    %vm1339 = vcmp.lt.s32.totalorder %v1338, 0
    %v1340 = vsub.s32 0, %v1338
    %v1341 = vsel %vm1339, %v1340, %v1338
    %v1342 = vclz %v1341
    %v1343 = vsub.s32 %v1342, 2
    %vm1344 = vcmp.gt.s32.totalorder 0, %v1343
    %v1345 = vsel %vm1344, 0, %v1343
    %v1346 = vsub.s32 32, %v1345
    %v1347 = vshll.u32 %v1338, %v1345
    %v1348 = vshrl.u32 %v1330, %v1346
    %v1349 = vor.u32 %v1347, %v1348
    %v1350 = vsub.s32 4294967266, %v1345
    %v1351 = vadd.s32 %v1350, 127
    %v1352 = vshll.u32 %v1351, 23
    %v1353 = vor.u32 4788187, %v1352
    %v1354 = vand.u32 2147483647, %v1353
    %v1356 = vcvt.s32.f32 %v1349
    %v1357 = vmul.f32 %v1356, %v1354
    %v1358 = vxor.u32 %v1357, 2147483648
    %v1359 = vsel %vm1238, %v1358, %v1357
    %v1360 = vsub.s32 4, %v1336
    %v1361 = vsel %vm1238, %v1360, %v1336
    %v1362 = vsel %vm1237, %v1235, %v1359
    %v1363 = vsel %vm1237, 0, %v1361
    %v1364 = vmul.f32 %v1362, %v1362
    %v1365 = vmul.f32 %v1364, -0.001358992
    %v1366 = vadd.f32 %v1365, 0.041655596
    %v1367 = vmul.f32 %v1364, %v1366
    %v1368 = vadd.f32 %v1367, -0.4999988
    %v1369 = vmul.f32 %v1364, %v1368
    %v1370 = vadd.f32 1.0, %v1369
    %v1371 = vmul.f32 %v1362, %v1362
    %v1372 = vmul.f32 %v1371, -0.00019511016
    %v1373 = vadd.f32 %v1372, 0.008332121
    %v1374 = vmul.f32 %v1371, %v1373
    %v1375 = vadd.f32 %v1374, -0.16666654
    %v1376 = vmul.f32 %v1371, %v1375
    %v1377 = vadd.f32 %v1376, 1.0
    %v1378 = vmul.f32 %v1377, %v1362
    %vm1379 = vweird.f32 %v1235
    %v1380 = vand.u32 %v1363, 3
    %vm1381 = vcmp.lt.s32.totalorder %v1380, 2
    %vm1382 = vcmp.eq.s32.totalorder %v1380, 0
    %v1383 = vxor.u32 %v1378, 2147483648
    %v1384 = vsel %vm1382, %v1370, %v1383
    %vm1385 = vcmp.eq.s32.totalorder %v1380, 2
    %v1386 = vxor.u32 %v1370, 2147483648
    %v1387 = vsel %vm1385, %v1386, %v1378
    %v1388 = vsel %vm1381, %v1384, %v1387
    %v1389 = vsel %vm1379, nan, %v1388
    %v1390 = vsub.f32 %v1389, %v1210
    %v1391 = vand.u32 2147483647, %v1235
    %vm1392 = vcmp.le.f32.partialorder %v1391, 0.7853982
    %vm1393 = vcmp.lt.s32.totalorder %v1235, 0
    %v1394 = vand.u32 %v1235, 2139095040
    %v1395 = vshrl.u32 %v1394, 23
    %v1396 = vsub.s32 %v1395, 127
    %v1397 = vand.u32 2147483647, %v1235
    %v1398 = vand.u32 %v1397, 8388607
    %v1399 = vor.u32 %v1398, 8388608
    %v1400 = vsub.s32 0, %v1399
    %v1401 = vadd.s32 %v1396, 1
    %vm1402 = vcmp.gt.s32.totalorder %v1401, 0
    %v1403 = vsel %vm1402, %v1401, 0
    %v1404 = vshrl.u32 %v1403, 5
    %v1405 = vand.u32 %v1403, 31
    %v1406 = vsub.s32 32, %v1405
    %v1407 = vshrl.u32 683565275, %v1406
    %v1408 = vshll.u32 683565275, %v1405
    %v1409 = vshrl.u32 2475754826, %v1406
    %v1410 = vor.u32 %v1408, %v1409
    %v1411 = vshll.u32 2475754826, %v1405
    %v1412 = vshrl.u32 2131351028, %v1406
    %v1413 = vor.u32 %v1411, %v1412
    %v1414 = vshll.u32 2131351028, %v1405
    %v1415 = vshrl.u32 2102212464, %v1406
    %v1416 = vor.u32 %v1414, %v1415
    %v1417 = vshll.u32 2102212464, %v1405
    %v1418 = vshrl.u32 920167782, %v1406
    %v1419 = vor.u32 %v1417, %v1418
    %v1420 = vshll.u32 920167782, %v1405
    %v1421 = vshrl.u32 1326507024, %v1406
    %v1422 = vor.u32 %v1420, %v1421
    %vm1423 = vcmp.lt.s32.totalorder %v1404, 1
    %vm1424 = vcmp.lt.s32.totalorder %v1404, 2
    %vm1425 = vcmp.lt.s32.totalorder %v1404, 3
    %vm1426 = vcmp.lt.s32.totalorder %v1404, 4
    %v1427 = vsel %vm1423, %v1407, %v1410
    %v1428 = vsel %vm1426, %v1416, 2102212464
    %v1429 = vsel %vm1425, %v1413, %v1428
    %v1430 = vsel %vm1424, %v1427, %v1429
    %v1431 = vsel %vm1423, %v1410, %v1413
    %v1432 = vsel %vm1426, %v1419, 920167782
    %v1433 = vsel %vm1425, %v1416, %v1432
    %v1434 = vsel %vm1424, %v1431, %v1433
    %v1435 = vsel %vm1423, %v1413, %v1416
    %v1436 = vsel %vm1426, %v1422, 1326507024
    %v1437 = vsel %vm1425, %v1419, %v1436
    %v1438 = vsel %vm1424, %v1435, %v1437
    %v1439 = vshll.u32 %v1399, 8
    %v1440 = vand.u32 %v1439, 65535
    %v1441 = vshrl.u32 %v1439, 16
    %v1442 = vand.u32 %v1438, 65535
    %v1443 = vshrl.u32 %v1438, 16
    %v1444 = vmul.u32 %v1440, %v1442
    %v1445 = vmul.u32 %v1440, %v1443
    %v1446 = vmul.u32 %v1441, %v1442
    %v1447 = vmul.u32 %v1441, %v1443
    %v1448 = vshll.u32 %v1445, 16
    %v1449 = vshrl.u32 %v1445, 16
    %v1450 = vshll.u32 %v1446, 16
    %v1451 = vshrl.u32 %v1446, 16
    %vm1452 = vc.u32 %v1444, %v1448
    %v1453 = vsel %vm1452, 1, 0
    %v1454 = vadd.s32 %v1444, %v1448
    %v1455 = vadd.s32 %v1447, %v1453
    %vm1456 = vc.u32 %v1454, %v1450
    %v1457 = vsel %vm1456, 1, 0
    %v1458 = vadd.s32 %v1454, %v1450
    %v1459 = vadd.s32 %v1455, %v1457
    %v1460 = vadd.s32 %v1459, %v1449
    %v1461 = vadd.s32 %v1460, %v1451
    %v1462 = vand.u32 %v1439, 65535
    %v1463 = vshrl.u32 %v1439, 16
    %v1464 = vand.u32 %v1434, 65535
    %v1465 = vshrl.u32 %v1434, 16
    %v1466 = vmul.u32 %v1462, %v1464
    %v1467 = vmul.u32 %v1462, %v1465
    %v1468 = vmul.u32 %v1463, %v1464
    %v1469 = vmul.u32 %v1463, %v1465
    %v1470 = vshll.u32 %v1467, 16
    %v1471 = vshrl.u32 %v1467, 16
    %v1472 = vshll.u32 %v1468, 16
    %v1473 = vshrl.u32 %v1468, 16
    %vm1474 = vc.u32 %v1466, %v1470
    %v1475 = vsel %vm1474, 1, 0
    %v1476 = vadd.s32 %v1466, %v1470
    %v1477 = vadd.s32 %v1469, %v1475
    %vm1478 = vc.u32 %v1476, %v1472
    %v1479 = vsel %vm1478, 1, 0
    %v1480 = vadd.s32 %v1476, %v1472
    %v1481 = vadd.s32 %v1477, %v1479
    %v1482 = vadd.s32 %v1481, %v1471
    %v1483 = vadd.s32 %v1482, %v1473
    %v1484 = vmul.u32 %v1439, %v1430
    %v1485 = vadd.s32 %v1461, %v1480
    %vm1486 = vc.u32 %v1461, %v1480
    %v1487 = vadd.s32 %v1483, 1
    %v1488 = vsel %vm1486, %v1487, %v1483
    %v1489 = vadd.s32 %v1484, %v1488
    %v1490 = vadd.s32 %v1489, 536870912
    %v1491 = vshrl.u32 %v1490, 30
    %v1492 = vshll.u32 %v1491, 30
    %v1493 = vsub.s32 %v1489, %v1492
    %vm1494 = vcmp.lt.s32.totalorder %v1493, 0
    %v1495 = vsub.s32 0, %v1493
    %v1496 = vsel %vm1494, %v1495, %v1493
    %v1497 = vclz %v1496
    %v1498 = vsub.s32 %v1497, 2
    %vm1499 = vcmp.gt.s32.totalorder 0, %v1498
    %v1500 = vsel %vm1499, 0, %v1498
    %v1501 = vsub.s32 32, %v1500
    %v1502 = vshll.u32 %v1493, %v1500
    %v1503 = vshrl.u32 %v1485, %v1501
    %v1504 = vor.u32 %v1502, %v1503
    %v1505 = vsub.s32 4294967266, %v1500
    %v1506 = vadd.s32 %v1505, 127
    %v1507 = vshll.u32 %v1506, 23
    %v1508 = vor.u32 4788187, %v1507
    %v1509 = vand.u32 2147483647, %v1508
    %v1511 = vcvt.s32.f32 %v1504
    %v1512 = vmul.f32 %v1511, %v1509
    %v1513 = vxor.u32 %v1512, 2147483648
    %v1514 = vsel %vm1393, %v1513, %v1512
    %v1515 = vsub.s32 4, %v1491
    %v1516 = vsel %vm1393, %v1515, %v1491
    %v1517 = vsel %vm1392, %v1235, %v1514
    %v1518 = vsel %vm1392, 0, %v1516
    %v1519 = vmul.f32 %v1517, %v1517
    %v1520 = vmul.f32 %v1519, -0.001358992
    %v1521 = vadd.f32 %v1520, 0.041655596
    %v1522 = vmul.f32 %v1519, %v1521
    %v1523 = vadd.f32 %v1522, -0.4999988
    %v1524 = vmul.f32 %v1519, %v1523
    %v1525 = vadd.f32 1.0, %v1524
    %v1526 = vmul.f32 %v1517, %v1517
    %v1527 = vmul.f32 %v1526, -0.00019511016
    %v1528 = vadd.f32 %v1527, 0.008332121
    %v1529 = vmul.f32 %v1526, %v1528
    %v1530 = vadd.f32 %v1529, -0.16666654
    %v1531 = vmul.f32 %v1526, %v1530
    %v1532 = vadd.f32 %v1531, 1.0
    %v1533 = vmul.f32 %v1532, %v1517
    %vm1534 = vweird.f32 %v1235
    %v1535 = vadd.s32 %v1518, 3
    %v1536 = vand.u32 %v1535, 3
    %vm1537 = vcmp.lt.s32.totalorder %v1536, 2
    %vm1538 = vcmp.eq.s32.totalorder %v1536, 0
    %v1539 = vxor.u32 %v1533, 2147483648
    %v1540 = vsel %vm1538, %v1525, %v1539
    %vm1541 = vcmp.eq.s32.totalorder %v1536, 2
    %v1542 = vxor.u32 %v1525, 2147483648
    %v1543 = vsel %vm1541, %v1542, %v1533
    %v1544 = vsel %vm1537, %v1540, %v1543
    %v1545 = vsel %vm1534, nan, %v1544
    %v1546 = vmax.f32 %v1545, 1e-06
    %v1547 = vrcp.pop %v1546
    %v1548 = vmul.f32 %v1546, %v1547
    %v1549 = vsub.f32 1.0, %v1548
    %v1550 = vmul.f32 %v1547, %v1549
    %v1551 = vadd.f32 %v1547, %v1550
    %vm1552 = vweird.f32 %v1546
    %vm1553 = vweird.f32 %v1547
    %vm1554 = vmor %vm1552, %vm1553
    %v1555 = vsel %vm1554, %v1547, %v1551
    %v1556 = vand.u32 2147483647, %v1546
    %vm1557 = vcmp.eq.f32.partialorder %v1556, 8.507059e+37
    %v1558 = vand.u32 %v1546, 2147483648
    %v1559 = vor.u32 1.1754944e-38, %v1558
    %v1560 = vsel %vm1557, %v1559, %v1555
    %v1561 = vmul.f32 %v1390, %v1560
    %v1562 = vadd.f32 %v1235, %v1561
    %v1563 = vadd.f32 %v1562, 1e-06
    %v1564 = vand.u32 2147483647, %v1563
    %vm1565 = vcmp.le.f32.partialorder %v1564, 0.7853982
    %vm1566 = vcmp.lt.s32.totalorder %v1563, 0
    %v1567 = vand.u32 %v1563, 2139095040
    %v1568 = vshrl.u32 %v1567, 23
    %v1569 = vsub.s32 %v1568, 127
    %v1570 = vand.u32 2147483647, %v1563
    %v1571 = vand.u32 %v1570, 8388607
    %v1572 = vor.u32 %v1571, 8388608
    %v1573 = vsub.s32 0, %v1572
    %v1574 = vadd.s32 %v1569, 1
    %vm1575 = vcmp.gt.s32.totalorder %v1574, 0
    %v1576 = vsel %vm1575, %v1574, 0
    %v1577 = vshrl.u32 %v1576, 5
    %v1578 = vand.u32 %v1576, 31
    %v1579 = vsub.s32 32, %v1578
    %v1580 = vshrl.u32 683565275, %v1579
    %v1581 = vshll.u32 683565275, %v1578
    %v1582 = vshrl.u32 2475754826, %v1579
    %v1583 = vor.u32 %v1581, %v1582
    %v1584 = vshll.u32 2475754826, %v1578
    %v1585 = vshrl.u32 2131351028, %v1579
    %v1586 = vor.u32 %v1584, %v1585
    %v1587 = vshll.u32 2131351028, %v1578
    %v1588 = vshrl.u32 2102212464, %v1579
    %v1589 = vor.u32 %v1587, %v1588
    %v1590 = vshll.u32 2102212464, %v1578
    %v1591 = vshrl.u32 920167782, %v1579
    %v1592 = vor.u32 %v1590, %v1591
    %v1593 = vshll.u32 920167782, %v1578
    %v1594 = vshrl.u32 1326507024, %v1579
    %v1595 = vor.u32 %v1593, %v1594
    %vm1596 = vcmp.lt.s32.totalorder %v1577, 1
    %vm1597 = vcmp.lt.s32.totalorder %v1577, 2
    %vm1598 = vcmp.lt.s32.totalorder %v1577, 3
    %vm1599 = vcmp.lt.s32.totalorder %v1577, 4
    %v1600 = vsel %vm1596, %v1580, %v1583
    %v1601 = vsel %vm1599, %v1589, 2102212464
    %v1602 = vsel %vm1598, %v1586, %v1601
    %v1603 = vsel %vm1597, %v1600, %v1602
    %v1604 = vsel %vm1596, %v1583, %v1586
    %v1605 = vsel %vm1599, %v1592, 920167782
    %v1606 = vsel %vm1598, %v1589, %v1605
    %v1607 = vsel %vm1597, %v1604, %v1606
    %v1608 = vsel %vm1596, %v1586, %v1589
    %v1609 = vsel %vm1599, %v1595, 1326507024
    %v1610 = vsel %vm1598, %v1592, %v1609
    %v1611 = vsel %vm1597, %v1608, %v1610
    %v1612 = vshll.u32 %v1572, 8
    %v1613 = vand.u32 %v1612, 65535
    %v1614 = vshrl.u32 %v1612, 16
    %v1615 = vand.u32 %v1611, 65535
    %v1616 = vshrl.u32 %v1611, 16
    %v1617 = vmul.u32 %v1613, %v1615
    %v1618 = vmul.u32 %v1613, %v1616
    %v1619 = vmul.u32 %v1614, %v1615
    %v1620 = vmul.u32 %v1614, %v1616
    %v1621 = vshll.u32 %v1618, 16
    %v1622 = vshrl.u32 %v1618, 16
    %v1623 = vshll.u32 %v1619, 16
    %v1624 = vshrl.u32 %v1619, 16
    %vm1625 = vc.u32 %v1617, %v1621
    %v1626 = vsel %vm1625, 1, 0
    %v1627 = vadd.s32 %v1617, %v1621
    %v1628 = vadd.s32 %v1620, %v1626
    %vm1629 = vc.u32 %v1627, %v1623
    %v1630 = vsel %vm1629, 1, 0
    %v1631 = vadd.s32 %v1627, %v1623
    %v1632 = vadd.s32 %v1628, %v1630
    %v1633 = vadd.s32 %v1632, %v1622
    %v1634 = vadd.s32 %v1633, %v1624
    %v1635 = vand.u32 %v1612, 65535
    %v1636 = vshrl.u32 %v1612, 16
    %v1637 = vand.u32 %v1607, 65535
    %v1638 = vshrl.u32 %v1607, 16
    %v1639 = vmul.u32 %v1635, %v1637
    %v1640 = vmul.u32 %v1635, %v1638
    %v1641 = vmul.u32 %v1636, %v1637
    %v1642 = vmul.u32 %v1636, %v1638
    %v1643 = vshll.u32 %v1640, 16
    %v1644 = vshrl.u32 %v1640, 16
    %v1645 = vshll.u32 %v1641, 16
    %v1646 = vshrl.u32 %v1641, 16
    %vm1647 = vc.u32 %v1639, %v1643
    %v1648 = vsel %vm1647, 1, 0
    %v1649 = vadd.s32 %v1639, %v1643
    %v1650 = vadd.s32 %v1642, %v1648
    %vm1651 = vc.u32 %v1649, %v1645
    %v1652 = vsel %vm1651, 1, 0
    %v1653 = vadd.s32 %v1649, %v1645
    %v1654 = vadd.s32 %v1650, %v1652
    %v1655 = vadd.s32 %v1654, %v1644
    %v1656 = vadd.s32 %v1655, %v1646
    %v1657 = vmul.u32 %v1612, %v1603
    %v1658 = vadd.s32 %v1634, %v1653
    %vm1659 = vc.u32 %v1634, %v1653
    %v1660 = vadd.s32 %v1656, 1
    %v1661 = vsel %vm1659, %v1660, %v1656
    %v1662 = vadd.s32 %v1657, %v1661
    %v1663 = vadd.s32 %v1662, 536870912
    %v1664 = vshrl.u32 %v1663, 30
    %v1665 = vshll.u32 %v1664, 30
    %v1666 = vsub.s32 %v1662, %v1665
    %vm1667 = vcmp.lt.s32.totalorder %v1666, 0
    %v1668 = vsub.s32 0, %v1666
    %v1669 = vsel %vm1667, %v1668, %v1666
    %v1670 = vclz %v1669
    %v1671 = vsub.s32 %v1670, 2
    %vm1672 = vcmp.gt.s32.totalorder 0, %v1671
    %v1673 = vsel %vm1672, 0, %v1671
    %v1674 = vsub.s32 32, %v1673
    %v1675 = vshll.u32 %v1666, %v1673
    %v1676 = vshrl.u32 %v1658, %v1674
    %v1677 = vor.u32 %v1675, %v1676
    %v1678 = vsub.s32 4294967266, %v1673
    %v1679 = vadd.s32 %v1678, 127
    %v1680 = vshll.u32 %v1679, 23
    %v1681 = vor.u32 4788187, %v1680
    %v1682 = vand.u32 2147483647, %v1681
    %v1684 = vcvt.s32.f32 %v1677
    %v1685 = vmul.f32 %v1684, %v1682
    %v1686 = vxor.u32 %v1685, 2147483648
    %v1687 = vsel %vm1566, %v1686, %v1685
    %v1688 = vsub.s32 4, %v1664
    %v1689 = vsel %vm1566, %v1688, %v1664
    %v1690 = vsel %vm1565, %v1563, %v1687
    %v1691 = vsel %vm1565, 0, %v1689
    %v1692 = vmul.f32 %v1690, %v1690
    %v1693 = vmul.f32 %v1692, -0.001358992
    %v1694 = vadd.f32 %v1693, 0.041655596
    %v1695 = vmul.f32 %v1692, %v1694
    %v1696 = vadd.f32 %v1695, -0.4999988
    %v1697 = vmul.f32 %v1692, %v1696
    %v1698 = vadd.f32 1.0, %v1697
    %v1699 = vmul.f32 %v1690, %v1690
    %v1700 = vmul.f32 %v1699, -0.00019511016
    %v1701 = vadd.f32 %v1700, 0.008332121
    %v1702 = vmul.f32 %v1699, %v1701
    %v1703 = vadd.f32 %v1702, -0.16666654
    %v1704 = vmul.f32 %v1699, %v1703
    %v1705 = vadd.f32 %v1704, 1.0
    %v1706 = vmul.f32 %v1705, %v1690
    %vm1707 = vweird.f32 %v1563
    %v1708 = vadd.s32 %v1691, 3
    %v1709 = vand.u32 %v1708, 3
    %vm1710 = vcmp.lt.s32.totalorder %v1709, 2
    %vm1711 = vcmp.eq.s32.totalorder %v1709, 0
    %v1712 = vxor.u32 %v1706, 2147483648
    %v1713 = vsel %vm1711, %v1698, %v1712
    %vm1714 = vcmp.eq.s32.totalorder %v1709, 2
    %v1715 = vxor.u32 %v1698, 2147483648
    %v1716 = vsel %vm1714, %v1715, %v1706
    %v1717 = vsel %vm1710, %v1713, %v1716
    %v1718 = vsel %vm1707, nan, %v1717
    %v1719 = vand.u32 2147483647, %v1563
    %vm1720 = vcmp.le.f32.partialorder %v1719, 0.7853982
    %vm1721 = vcmp.lt.s32.totalorder %v1563, 0
    %v1722 = vand.u32 %v1563, 2139095040
    %v1723 = vshrl.u32 %v1722, 23
    %v1724 = vsub.s32 %v1723, 127
    %v1725 = vand.u32 2147483647, %v1563
    %v1726 = vand.u32 %v1725, 8388607
    %v1727 = vor.u32 %v1726, 8388608
    %v1728 = vsub.s32 0, %v1727
    %v1729 = vadd.s32 %v1724, 1
    %vm1730 = vcmp.gt.s32.totalorder %v1729, 0
    %v1731 = vsel %vm1730, %v1729, 0
    %v1732 = vshrl.u32 %v1731, 5
    %v1733 = vand.u32 %v1731, 31
    %v1734 = vsub.s32 32, %v1733
    %v1735 = vshrl.u32 683565275, %v1734
    %v1736 = vshll.u32 683565275, %v1733
    %v1737 = vshrl.u32 2475754826, %v1734
    %v1738 = vor.u32 %v1736, %v1737
    %v1739 = vshll.u32 2475754826, %v1733
    %v1740 = vshrl.u32 2131351028, %v1734
    %v1741 = vor.u32 %v1739, %v1740
    %v1742 = vshll.u32 2131351028, %v1733
    %v1743 = vshrl.u32 2102212464, %v1734
    %v1744 = vor.u32 %v1742, %v1743
    %v1745 = vshll.u32 2102212464, %v1733
    %v1746 = vshrl.u32 920167782, %v1734
    %v1747 = vor.u32 %v1745, %v1746
    %v1748 = vshll.u32 920167782, %v1733
    %v1749 = vshrl.u32 1326507024, %v1734
    %v1750 = vor.u32 %v1748, %v1749
    %vm1751 = vcmp.lt.s32.totalorder %v1732, 1
    %vm1752 = vcmp.lt.s32.totalorder %v1732, 2
    %vm1753 = vcmp.lt.s32.totalorder %v1732, 3
    %vm1754 = vcmp.lt.s32.totalorder %v1732, 4
    %v1755 = vsel %vm1751, %v1735, %v1738
    %v1756 = vsel %vm1754, %v1744, 2102212464
    %v1757 = vsel %vm1753, %v1741, %v1756
    %v1758 = vsel %vm1752, %v1755, %v1757
    %v1759 = vsel %vm1751, %v1738, %v1741
    %v1760 = vsel %vm1754, %v1747, 920167782
    %v1761 = vsel %vm1753, %v1744, %v1760
    %v1762 = vsel %vm1752, %v1759, %v1761
    %v1763 = vsel %vm1751, %v1741, %v1744
    %v1764 = vsel %vm1754, %v1750, 1326507024
    %v1765 = vsel %vm1753, %v1747, %v1764
    %v1766 = vsel %vm1752, %v1763, %v1765
    %v1767 = vshll.u32 %v1727, 8
    %v1768 = vand.u32 %v1767, 65535
    %v1769 = vshrl.u32 %v1767, 16
    %v1770 = vand.u32 %v1766, 65535
    %v1771 = vshrl.u32 %v1766, 16
    %v1772 = vmul.u32 %v1768, %v1770
    %v1773 = vmul.u32 %v1768, %v1771
    %v1774 = vmul.u32 %v1769, %v1770
    %v1775 = vmul.u32 %v1769, %v1771
    %v1776 = vshll.u32 %v1773, 16
    %v1777 = vshrl.u32 %v1773, 16
    %v1778 = vshll.u32 %v1774, 16
    %v1779 = vshrl.u32 %v1774, 16
    %vm1780 = vc.u32 %v1772, %v1776
    %v1781 = vsel %vm1780, 1, 0
    %v1782 = vadd.s32 %v1772, %v1776
    %v1783 = vadd.s32 %v1775, %v1781
    %vm1784 = vc.u32 %v1782, %v1778
    %v1785 = vsel %vm1784, 1, 0
    %v1786 = vadd.s32 %v1782, %v1778
    %v1787 = vadd.s32 %v1783, %v1785
    %v1788 = vadd.s32 %v1787, %v1777
    %v1789 = vadd.s32 %v1788, %v1779
    %v1790 = vand.u32 %v1767, 65535
    %v1791 = vshrl.u32 %v1767, 16
    %v1792 = vand.u32 %v1762, 65535
    %v1793 = vshrl.u32 %v1762, 16
    %v1794 = vmul.u32 %v1790, %v1792
    %v1795 = vmul.u32 %v1790, %v1793
    %v1796 = vmul.u32 %v1791, %v1792
    %v1797 = vmul.u32 %v1791, %v1793
    %v1798 = vshll.u32 %v1795, 16
    %v1799 = vshrl.u32 %v1795, 16
    %v1800 = vshll.u32 %v1796, 16
    %v1801 = vshrl.u32 %v1796, 16
    %vm1802 = vc.u32 %v1794, %v1798
    %v1803 = vsel %vm1802, 1, 0
    %v1804 = vadd.s32 %v1794, %v1798
    %v1805 = vadd.s32 %v1797, %v1803
    %vm1806 = vc.u32 %v1804, %v1800
    %v1807 = vsel %vm1806, 1, 0
    %v1808 = vadd.s32 %v1804, %v1800
    %v1809 = vadd.s32 %v1805, %v1807
    %v1810 = vadd.s32 %v1809, %v1799
    %v1811 = vadd.s32 %v1810, %v1801
    %v1812 = vmul.u32 %v1767, %v1758
    %v1813 = vadd.s32 %v1789, %v1808
    %vm1814 = vc.u32 %v1789, %v1808
    %v1815 = vadd.s32 %v1811, 1
    %v1816 = vsel %vm1814, %v1815, %v1811
    %v1817 = vadd.s32 %v1812, %v1816
    %v1818 = vadd.s32 %v1817, 536870912
    %v1819 = vshrl.u32 %v1818, 30
    %v1820 = vshll.u32 %v1819, 30
    %v1821 = vsub.s32 %v1817, %v1820
    %vm1822 = vcmp.lt.s32.totalorder %v1821, 0
    %v1823 = vsub.s32 0, %v1821
    %v1824 = vsel %vm1822, %v1823, %v1821
    %v1825 = vclz %v1824
    %v1826 = vsub.s32 %v1825, 2
    %vm1827 = vcmp.gt.s32.totalorder 0, %v1826
    %v1828 = vsel %vm1827, 0, %v1826
    %v1829 = vsub.s32 32, %v1828
    %v1830 = vshll.u32 %v1821, %v1828
    %v1831 = vshrl.u32 %v1813, %v1829
    %v1832 = vor.u32 %v1830, %v1831
    %v1833 = vsub.s32 4294967266, %v1828
    %v1834 = vadd.s32 %v1833, 127
    %v1835 = vshll.u32 %v1834, 23
    %v1836 = vor.u32 4788187, %v1835
    %v1837 = vand.u32 2147483647, %v1836
    %v1839 = vcvt.s32.f32 %v1832
    %v1840 = vmul.f32 %v1839, %v1837
    %v1841 = vxor.u32 %v1840, 2147483648
    %v1842 = vsel %vm1721, %v1841, %v1840
    %v1843 = vsub.s32 4, %v1819
    %v1844 = vsel %vm1721, %v1843, %v1819
    %v1845 = vsel %vm1720, %v1563, %v1842
    %v1846 = vsel %vm1720, 0, %v1844
    %v1847 = vmul.f32 %v1845, %v1845
    %v1848 = vmul.f32 %v1847, -0.001358992
    %v1849 = vadd.f32 %v1848, 0.041655596
    %v1850 = vmul.f32 %v1847, %v1849
    %v1851 = vadd.f32 %v1850, -0.4999988
    %v1852 = vmul.f32 %v1847, %v1851
    %v1853 = vadd.f32 1.0, %v1852
    %v1854 = vmul.f32 %v1845, %v1845
    %v1855 = vmul.f32 %v1854, -0.00019511016
    %v1856 = vadd.f32 %v1855, 0.008332121
    %v1857 = vmul.f32 %v1854, %v1856
    %v1858 = vadd.f32 %v1857, -0.16666654
    %v1859 = vmul.f32 %v1854, %v1858
    %v1860 = vadd.f32 %v1859, 1.0
    %v1861 = vmul.f32 %v1860, %v1845
    %vm1862 = vweird.f32 %v1563
    %v1863 = vand.u32 %v1846, 3
    %vm1864 = vcmp.lt.s32.totalorder %v1863, 2
    %vm1865 = vcmp.eq.s32.totalorder %v1863, 0
    %v1866 = vxor.u32 %v1861, 2147483648
    %v1867 = vsel %vm1865, %v1853, %v1866
    %vm1868 = vcmp.eq.s32.totalorder %v1863, 2
    %v1869 = vxor.u32 %v1853, 2147483648
    %v1870 = vsel %vm1868, %v1869, %v1861
    %v1871 = vsel %vm1864, %v1867, %v1870
    %v1872 = vsel %vm1862, nan, %v1871
    %v1873 = vmul.f32 %v1718, 2.0
    %v1874 = vrcp.pop %v1873
    %v1875 = vmul.f32 %v1873, %v1874
    %v1876 = vsub.f32 1.0, %v1875
    %v1877 = vmul.f32 %v1874, %v1876
    %v1878 = vadd.f32 %v1874, %v1877
    %vm1879 = vweird.f32 %v1873
    %vm1880 = vweird.f32 %v1874
    %vm1881 = vmor %vm1879, %vm1880
    %v1882 = vsel %vm1881, %v1874, %v1878
    %v1883 = vand.u32 2147483647, %v1873
    %vm1884 = vcmp.eq.f32.partialorder %v1883, 8.507059e+37
    %v1885 = vand.u32 %v1873, 2147483648
    %v1886 = vor.u32 1.1754944e-38, %v1885
    %v1887 = vsel %vm1884, %v1886, %v1882
    %v1888 = vmul.f32 %v1563, %v1887
    %v1890 = vrot.slane %v1138, 1
    %v1892 = vsub.f32 %v1180, %v1890
    %v1894 = vrot.slane %v1892, 7
    %v1896 = vmul.f32 %v1888, %v1894
    %v1898 = vrot.slane %v1166, 7
    %v1900 = vsub.f32 %v1101, %v1898
    %v1901 = vmul.f32 %v1888, %v1900
    %v1902 = vsub.f32 %v1128, %v1087
    %v1903 = vmul.f32 %v1888, %v1902
    %v1904 = vadd.f32 %v1872, 1.0
    %v1905 = vmul.f32 %v1888, %v1904
    %v1906 = vsub.f32 1.0, %v1905
    %v1907 = vmul.f32 %v1563, %v1563
    %v1908 = vrcp.pop %v1907
    %v1909 = vmul.f32 %v1907, %v1908
    %v1910 = vsub.f32 1.0, %v1909
    %v1911 = vmul.f32 %v1908, %v1910
    %v1912 = vadd.f32 %v1908, %v1911
    %vm1913 = vweird.f32 %v1907
    %vm1914 = vweird.f32 %v1908
    %vm1915 = vmor %vm1913, %vm1914
    %v1916 = vsel %vm1915, %v1908, %v1912
    %v1917 = vand.u32 2147483647, %v1907
    %vm1918 = vcmp.eq.f32.partialorder %v1917, 8.507059e+37
    %v1919 = vand.u32 %v1907, 2147483648
    %v1920 = vor.u32 1.1754944e-38, %v1919
    %v1921 = vsel %vm1918, %v1920, %v1916
    %v1922 = vmul.f32 %v1906, %v1921
    %v1923 = vmul.f32 %v1907, 0.0013888889
    %v1924 = vadd.f32 %v1923, 0.083333336
    %vm1925 = vcmp.lt.f32.partialorder %v1563, 0.01
    %v1926 = vsel %vm1925, %v1924, %v1922
    %v1927 = vmul.f32 %v1896, %v1896
    %v1928 = vmul.f32 %v1926, %v1927
    %v1929 = vmul.f32 %v1901, %v1901
    %v1930 = vmul.f32 %v1926, %v1929
    %v1931 = vmul.f32 %v1903, %v1903
    %v1932 = vmul.f32 %v1926, %v1931
    %v1933 = vmul.f32 %v1903, 0.5
    %v1934 = vadd.f32 %v1933, %v1932
    %v1936 = vrot.slane %v1153, 2
    %v1938 = vmul.f32 %v1934, %v1936
    %v1940 = vrot.slane %v1938, 7
    %v1942 = vadd.f32 %v1123, %v1940
    %v1943 = vmul.f32 %v1901, 0.5
    %v1944 = vsub.f32 %v1930, %v1943
    %v1946 = vrot.slane %v1201, 3
    %v1948 = vmul.f32 %v1944, %v1946
    %v1950 = vrot.slane %v1948, 7
    %v1952 = vadd.f32 %v1942, %v1950
    %v1953 = vsub.f32 %v1932, %v1933
    %v1955 = vrot.slane %v1123, 1
    %v1957 = vmul.f32 %v1953, %v1955
    %v1958 = vadd.f32 %v1957, %v1936
    %v1959 = vmul.f32 %v1896, 0.5
    %v1960 = vadd.f32 %v1959, %v1928
    %v1961 = vmul.f32 %v1960, %v1946
    %v1962 = vadd.f32 %v1958, %v1961
    %v1963 = vadd.f32 %v1943, %v1930
    %v1964 = vmul.f32 %v1963, %v1955
    %v1965 = vsub.f32 %v1928, %v1959
    %v1966 = vmul.f32 %v1965, %v1936
    %v1967 = vadd.f32 %v1964, %v1966
    %v1968 = vadd.f32 %v1967, %v1946
    %v1969 = vld [vmem:[%s3] sm:$0x1]
    %v1971 = vrot.slane %v1969, 6
    %v1973 = vsub.f32 %v1896, %v1971
    %v1974 = vmul.f32 %v1973, %v1973
    %v1975 = vld [vmem:[%s3 + $0x1] sm:$0x1]
    %v1977 = vrot.slane %v1975, 6
    %v1979 = vsub.f32 %v1901, %v1977
    %v1980 = vmul.f32 %v1979, %v1979
    %v1981 = vadd.f32 %v1974, %v1980
    %v1982 = vld [vmem:[%s3 + $0x2] sm:$0x1]
    %v1984 = vrot.slane %v1982, 6
    %v1986 = vsub.f32 %v1903, %v1984
    %v1987 = vmul.f32 %v1986, %v1986
    %v1988 = vadd.f32 %v1981, %v1987
    %v1989 = vld [vmem:[%s3 + $0x3] sm:$0x1]
    %v1991 = vrot.slane %v1989, 5
    %v1993 = vsub.f32 %v1952, %v1991
    %v1994 = vmul.f32 %v1993, %v1993
    %v1996 = vrot.slane %v1994, 1
    %v1998 = vadd.f32 %v1988, %v1996
    %v1999 = vld [vmem:[%s3 + $0x4] sm:$0x1]
    %v2001 = vrot.slane %v1999, 6
    %v2003 = vsub.f32 %v1962, %v2001
    %v2004 = vmul.f32 %v2003, %v2003
    %v2005 = vadd.f32 %v1998, %v2004
    %v2006 = vld [vmem:[%s3 + $0x5] sm:$0x1]
    %v2008 = vrot.slane %v2006, 6
    %v2010 = vsub.f32 %v1968, %v2008
    %v2011 = vmul.f32 %v2010, %v2010
    %v2012 = vadd.f32 %v2005, %v2011
    %v2013 = vrsqrt.pop %v2012
    %v2014 = vmul.f32 %v2013, %v2012
    %v2015 = vmul.f32 %v2014, %v2013
    %v2016 = vmul.f32 0.5, %v2015
    %v2017 = vsub.f32 1.5, %v2016
    %v2018 = vmul.f32 %v2013, %v2017
    %v2019 = vmul.f32 %v2012, %v2018
    %vm2020 = vcmp.eq.f32.partialorder %v2012, inf
    %v2021 = vsel %vm2020, %v2012, %v2019
    %vm2022 = vcmp.eq.f32.partialorder %v2012, 0.0
    %v2023 = vand.u32 %v2012, 2147483648
    %v2024 = vsel %vm2022, %v2023, %v2021
    %v2025 = vld [vmem:[%s0] sm:$0x1]
    %v2026 = vmul.f32 %v2025, 0.017453292
    %v2027 = vld [vmem:[%s0 + $0x1] sm:$0x1]
    %v2028 = vmul.f32 %v2027, 0.017453292
    %v2029 = vld [vmem:[%s0 + $0x2] sm:$0x1]
    %v2030 = vmul.f32 %v2029, 0.017453292
    %v2031 = vand.u32 2147483647, %v2026
    %vm2032 = vcmp.le.f32.partialorder %v2031, 0.7853982
    %vm2033 = vcmp.lt.s32.totalorder %v2026, 0
    %v2034 = vand.u32 %v2026, 2139095040
    %v2035 = vshrl.u32 %v2034, 23
    %v2036 = vsub.s32 %v2035, 127
    %v2037 = vand.u32 2147483647, %v2026
    %v2038 = vand.u32 %v2037, 8388607
    %v2039 = vor.u32 %v2038, 8388608
    %v2040 = vsub.s32 0, %v2039
    %v2041 = vadd.s32 %v2036, 1
    %vm2042 = vcmp.gt.s32.totalorder %v2041, 0
    %v2043 = vsel %vm2042, %v2041, 0
    %v2044 = vshrl.u32 %v2043, 5
    %v2045 = vand.u32 %v2043, 31
    %v2046 = vsub.s32 32, %v2045
    %v2047 = vshrl.u32 683565275, %v2046
    %v2048 = vshll.u32 683565275, %v2045
    %v2049 = vshrl.u32 2475754826, %v2046
    %v2050 = vor.u32 %v2048, %v2049
    %v2051 = vshll.u32 2475754826, %v2045
    %v2052 = vshrl.u32 2131351028, %v2046
    %v2053 = vor.u32 %v2051, %v2052
    %v2054 = vshll.u32 2131351028, %v2045
    %v2055 = vshrl.u32 2102212464, %v2046
    %v2056 = vor.u32 %v2054, %v2055
    %v2057 = vshll.u32 2102212464, %v2045
    %v2058 = vshrl.u32 920167782, %v2046
    %v2059 = vor.u32 %v2057, %v2058
    %v2060 = vshll.u32 920167782, %v2045
    %v2061 = vshrl.u32 1326507024, %v2046
    %v2062 = vor.u32 %v2060, %v2061
    %vm2063 = vcmp.lt.s32.totalorder %v2044, 1
    %vm2064 = vcmp.lt.s32.totalorder %v2044, 2
    %vm2065 = vcmp.lt.s32.totalorder %v2044, 3
    %vm2066 = vcmp.lt.s32.totalorder %v2044, 4
    %v2067 = vsel %vm2063, %v2047, %v2050
    %v2068 = vsel %vm2066, %v2056, 2102212464
    %v2069 = vsel %vm2065, %v2053, %v2068
    %v2070 = vsel %vm2064, %v2067, %v2069
    %v2071 = vsel %vm2063, %v2050, %v2053
    %v2072 = vsel %vm2066, %v2059, 920167782
    %v2073 = vsel %vm2065, %v2056, %v2072
    %v2074 = vsel %vm2064, %v2071, %v2073
    %v2075 = vsel %vm2063, %v2053, %v2056
    %v2076 = vsel %vm2066, %v2062, 1326507024
    %v2077 = vsel %vm2065, %v2059, %v2076
    %v2078 = vsel %vm2064, %v2075, %v2077
    %v2079 = vshll.u32 %v2039, 8
    %v2080 = vand.u32 %v2079, 65535
    %v2081 = vshrl.u32 %v2079, 16
    %v2082 = vand.u32 %v2078, 65535
    %v2083 = vshrl.u32 %v2078, 16
    %v2084 = vmul.u32 %v2080, %v2082
    %v2085 = vmul.u32 %v2080, %v2083
    %v2086 = vmul.u32 %v2081, %v2082
    %v2087 = vmul.u32 %v2081, %v2083
    %v2088 = vshll.u32 %v2085, 16
    %v2089 = vshrl.u32 %v2085, 16
    %v2090 = vshll.u32 %v2086, 16
    %v2091 = vshrl.u32 %v2086, 16
    %vm2092 = vc.u32 %v2084, %v2088
    %v2093 = vsel %vm2092, 1, 0
    %v2094 = vadd.s32 %v2084, %v2088
    %v2095 = vadd.s32 %v2087, %v2093
    %vm2096 = vc.u32 %v2094, %v2090
    %v2097 = vsel %vm2096, 1, 0
    %v2098 = vadd.s32 %v2094, %v2090
    %v2099 = vadd.s32 %v2095, %v2097
    %v2100 = vadd.s32 %v2099, %v2089
    %v2101 = vadd.s32 %v2100, %v2091
    %v2102 = vand.u32 %v2079, 65535
    %v2103 = vshrl.u32 %v2079, 16
    %v2104 = vand.u32 %v2074, 65535
    %v2105 = vshrl.u32 %v2074, 16
    %v2106 = vmul.u32 %v2102, %v2104
    %v2107 = vmul.u32 %v2102, %v2105
    %v2108 = vmul.u32 %v2103, %v2104
    %v2109 = vmul.u32 %v2103, %v2105
    %v2110 = vshll.u32 %v2107, 16
    %v2111 = vshrl.u32 %v2107, 16
    %v2112 = vshll.u32 %v2108, 16
    %v2113 = vshrl.u32 %v2108, 16
    %vm2114 = vc.u32 %v2106, %v2110
    %v2115 = vsel %vm2114, 1, 0
    %v2116 = vadd.s32 %v2106, %v2110
    %v2117 = vadd.s32 %v2109, %v2115
    %vm2118 = vc.u32 %v2116, %v2112
    %v2119 = vsel %vm2118, 1, 0
    %v2120 = vadd.s32 %v2116, %v2112
    %v2121 = vadd.s32 %v2117, %v2119
    %v2122 = vadd.s32 %v2121, %v2111
    %v2123 = vadd.s32 %v2122, %v2113
    %v2124 = vmul.u32 %v2079, %v2070
    %v2125 = vadd.s32 %v2101, %v2120
    %vm2126 = vc.u32 %v2101, %v2120
    %v2127 = vadd.s32 %v2123, 1
    %v2128 = vsel %vm2126, %v2127, %v2123
    %v2129 = vadd.s32 %v2124, %v2128
    %v2130 = vadd.s32 %v2129, 536870912
    %v2131 = vshrl.u32 %v2130, 30
    %v2132 = vshll.u32 %v2131, 30
    %v2133 = vsub.s32 %v2129, %v2132
    %vm2134 = vcmp.lt.s32.totalorder %v2133, 0
    %v2135 = vsub.s32 0, %v2133
    %v2136 = vsel %vm2134, %v2135, %v2133
    %v2137 = vclz %v2136
    %v2138 = vsub.s32 %v2137, 2
    %vm2139 = vcmp.gt.s32.totalorder 0, %v2138
    %v2140 = vsel %vm2139, 0, %v2138
    %v2141 = vsub.s32 32, %v2140
    %v2142 = vshll.u32 %v2133, %v2140
    %v2143 = vshrl.u32 %v2125, %v2141
    %v2144 = vor.u32 %v2142, %v2143
    %v2145 = vsub.s32 4294967266, %v2140
    %v2146 = vadd.s32 %v2145, 127
    %v2147 = vshll.u32 %v2146, 23
    %v2148 = vor.u32 4788187, %v2147
    %v2149 = vand.u32 2147483647, %v2148
    %v2151 = vcvt.s32.f32 %v2144
    %v2152 = vmul.f32 %v2151, %v2149
    %v2153 = vxor.u32 %v2152, 2147483648
    %v2154 = vsel %vm2033, %v2153, %v2152
    %v2155 = vsub.s32 4, %v2131
    %v2156 = vsel %vm2033, %v2155, %v2131
    %v2157 = vsel %vm2032, %v2026, %v2154
    %v2158 = vsel %vm2032, 0, %v2156
    %v2159 = vmul.f32 %v2157, %v2157
    %v2160 = vmul.f32 %v2159, -0.001358992
    %v2161 = vadd.f32 %v2160, 0.041655596
    %v2162 = vmul.f32 %v2159, %v2161
    %v2163 = vadd.f32 %v2162, -0.4999988
    %v2164 = vmul.f32 %v2159, %v2163
    %v2165 = vadd.f32 1.0, %v2164
    %v2166 = vmul.f32 %v2157, %v2157
    %v2167 = vmul.f32 %v2166, -0.00019511016
    %v2168 = vadd.f32 %v2167, 0.008332121
    %v2169 = vmul.f32 %v2166, %v2168
    %v2170 = vadd.f32 %v2169, -0.16666654
    %v2171 = vmul.f32 %v2166, %v2170
    %v2172 = vadd.f32 %v2171, 1.0
    %v2173 = vmul.f32 %v2172, %v2157
    %vm2174 = vweird.f32 %v2026
    %v2175 = vadd.s32 %v2158, 3
    %v2176 = vand.u32 %v2175, 3
    %vm2177 = vcmp.lt.s32.totalorder %v2176, 2
    %vm2178 = vcmp.eq.s32.totalorder %v2176, 0
    %v2179 = vxor.u32 %v2173, 2147483648
    %v2180 = vsel %vm2178, %v2165, %v2179
    %vm2181 = vcmp.eq.s32.totalorder %v2176, 2
    %v2182 = vxor.u32 %v2165, 2147483648
    %v2183 = vsel %vm2181, %v2182, %v2173
    %v2184 = vsel %vm2177, %v2180, %v2183
    %v2185 = vsel %vm2174, nan, %v2184
    %v2186 = vand.u32 2147483647, %v2028
    %vm2187 = vcmp.le.f32.partialorder %v2186, 0.7853982
    %vm2188 = vcmp.lt.s32.totalorder %v2028, 0
    %v2189 = vand.u32 %v2028, 2139095040
    %v2190 = vshrl.u32 %v2189, 23
    %v2191 = vsub.s32 %v2190, 127
    %v2192 = vand.u32 2147483647, %v2028
    %v2193 = vand.u32 %v2192, 8388607
    %v2194 = vor.u32 %v2193, 8388608
    %v2195 = vsub.s32 0, %v2194
    %v2196 = vadd.s32 %v2191, 1
    %vm2197 = vcmp.gt.s32.totalorder %v2196, 0
    %v2198 = vsel %vm2197, %v2196, 0
    %v2199 = vshrl.u32 %v2198, 5
    %v2200 = vand.u32 %v2198, 31
    %v2201 = vsub.s32 32, %v2200
    %v2202 = vshrl.u32 683565275, %v2201
    %v2203 = vshll.u32 683565275, %v2200
    %v2204 = vshrl.u32 2475754826, %v2201
    %v2205 = vor.u32 %v2203, %v2204
    %v2206 = vshll.u32 2475754826, %v2200
    %v2207 = vshrl.u32 2131351028, %v2201
    %v2208 = vor.u32 %v2206, %v2207
    %v2209 = vshll.u32 2131351028, %v2200
    %v2210 = vshrl.u32 2102212464, %v2201
    %v2211 = vor.u32 %v2209, %v2210
    %v2212 = vshll.u32 2102212464, %v2200
    %v2213 = vshrl.u32 920167782, %v2201
    %v2214 = vor.u32 %v2212, %v2213
    %v2215 = vshll.u32 920167782, %v2200
    %v2216 = vshrl.u32 1326507024, %v2201
    %v2217 = vor.u32 %v2215, %v2216
    %vm2218 = vcmp.lt.s32.totalorder %v2199, 1
    %vm2219 = vcmp.lt.s32.totalorder %v2199, 2
    %vm2220 = vcmp.lt.s32.totalorder %v2199, 3
    %vm2221 = vcmp.lt.s32.totalorder %v2199, 4
    %v2222 = vsel %vm2218, %v2202, %v2205
    %v2223 = vsel %vm2221, %v2211, 2102212464
    %v2224 = vsel %vm2220, %v2208, %v2223
    %v2225 = vsel %vm2219, %v2222, %v2224
    %v2226 = vsel %vm2218, %v2205, %v2208
    %v2227 = vsel %vm2221, %v2214, 920167782
    %v2228 = vsel %vm2220, %v2211, %v2227
    %v2229 = vsel %vm2219, %v2226, %v2228
    %v2230 = vsel %vm2218, %v2208, %v2211
    %v2231 = vsel %vm2221, %v2217, 1326507024
    %v2232 = vsel %vm2220, %v2214, %v2231
    %v2233 = vsel %vm2219, %v2230, %v2232
    %v2234 = vshll.u32 %v2194, 8
    %v2235 = vand.u32 %v2234, 65535
    %v2236 = vshrl.u32 %v2234, 16
    %v2237 = vand.u32 %v2233, 65535
    %v2238 = vshrl.u32 %v2233, 16
    %v2239 = vmul.u32 %v2235, %v2237
    %v2240 = vmul.u32 %v2235, %v2238
    %v2241 = vmul.u32 %v2236, %v2237
    %v2242 = vmul.u32 %v2236, %v2238
    %v2243 = vshll.u32 %v2240, 16
    %v2244 = vshrl.u32 %v2240, 16
    %v2245 = vshll.u32 %v2241, 16
    %v2246 = vshrl.u32 %v2241, 16
    %vm2247 = vc.u32 %v2239, %v2243
    %v2248 = vsel %vm2247, 1, 0
    %v2249 = vadd.s32 %v2239, %v2243
    %v2250 = vadd.s32 %v2242, %v2248
    %vm2251 = vc.u32 %v2249, %v2245
    %v2252 = vsel %vm2251, 1, 0
    %v2253 = vadd.s32 %v2249, %v2245
    %v2254 = vadd.s32 %v2250, %v2252
    %v2255 = vadd.s32 %v2254, %v2244
    %v2256 = vadd.s32 %v2255, %v2246
    %v2257 = vand.u32 %v2234, 65535
    %v2258 = vshrl.u32 %v2234, 16
    %v2259 = vand.u32 %v2229, 65535
    %v2260 = vshrl.u32 %v2229, 16
    %v2261 = vmul.u32 %v2257, %v2259
    %v2262 = vmul.u32 %v2257, %v2260
    %v2263 = vmul.u32 %v2258, %v2259
    %v2264 = vmul.u32 %v2258, %v2260
    %v2265 = vshll.u32 %v2262, 16
    %v2266 = vshrl.u32 %v2262, 16
    %v2267 = vshll.u32 %v2263, 16
    %v2268 = vshrl.u32 %v2263, 16
    %vm2269 = vc.u32 %v2261, %v2265
    %v2270 = vsel %vm2269, 1, 0
    %v2271 = vadd.s32 %v2261, %v2265
    %v2272 = vadd.s32 %v2264, %v2270
    %vm2273 = vc.u32 %v2271, %v2267
    %v2274 = vsel %vm2273, 1, 0
    %v2275 = vadd.s32 %v2271, %v2267
    %v2276 = vadd.s32 %v2272, %v2274
    %v2277 = vadd.s32 %v2276, %v2266
    %v2278 = vadd.s32 %v2277, %v2268
    %v2279 = vmul.u32 %v2234, %v2225
    %v2280 = vadd.s32 %v2256, %v2275
    %vm2281 = vc.u32 %v2256, %v2275
    %v2282 = vadd.s32 %v2278, 1
    %v2283 = vsel %vm2281, %v2282, %v2278
    %v2284 = vadd.s32 %v2279, %v2283
    %v2285 = vadd.s32 %v2284, 536870912
    %v2286 = vshrl.u32 %v2285, 30
    %v2287 = vshll.u32 %v2286, 30
    %v2288 = vsub.s32 %v2284, %v2287
    %vm2289 = vcmp.lt.s32.totalorder %v2288, 0
    %v2290 = vsub.s32 0, %v2288
    %v2291 = vsel %vm2289, %v2290, %v2288
    %v2292 = vclz %v2291
    %v2293 = vsub.s32 %v2292, 2
    %vm2294 = vcmp.gt.s32.totalorder 0, %v2293
    %v2295 = vsel %vm2294, 0, %v2293
    %v2296 = vsub.s32 32, %v2295
    %v2297 = vshll.u32 %v2288, %v2295
    %v2298 = vshrl.u32 %v2280, %v2296
    %v2299 = vor.u32 %v2297, %v2298
    %v2300 = vsub.s32 4294967266, %v2295
    %v2301 = vadd.s32 %v2300, 127
    %v2302 = vshll.u32 %v2301, 23
    %v2303 = vor.u32 4788187, %v2302
    %v2304 = vand.u32 2147483647, %v2303
    %v2306 = vcvt.s32.f32 %v2299
    %v2307 = vmul.f32 %v2306, %v2304
    %v2308 = vxor.u32 %v2307, 2147483648
    %v2309 = vsel %vm2188, %v2308, %v2307
    %v2310 = vsub.s32 4, %v2286
    %v2311 = vsel %vm2188, %v2310, %v2286
    %v2312 = vsel %vm2187, %v2028, %v2309
    %v2313 = vsel %vm2187, 0, %v2311
    %v2314 = vmul.f32 %v2312, %v2312
    %v2315 = vmul.f32 %v2314, -0.001358992
    %v2316 = vadd.f32 %v2315, 0.041655596
    %v2317 = vmul.f32 %v2314, %v2316
    %v2318 = vadd.f32 %v2317, -0.4999988
    %v2319 = vmul.f32 %v2314, %v2318
    %v2320 = vadd.f32 1.0, %v2319
    %v2321 = vmul.f32 %v2312, %v2312
    %v2322 = vmul.f32 %v2321, -0.00019511016
    %v2323 = vadd.f32 %v2322, 0.008332121
    %v2324 = vmul.f32 %v2321, %v2323
    %v2325 = vadd.f32 %v2324, -0.16666654
    %v2326 = vmul.f32 %v2321, %v2325
    %v2327 = vadd.f32 %v2326, 1.0
    %v2328 = vmul.f32 %v2327, %v2312
    %vm2329 = vweird.f32 %v2028
    %v2330 = vadd.s32 %v2313, 3
    %v2331 = vand.u32 %v2330, 3
    %vm2332 = vcmp.lt.s32.totalorder %v2331, 2
    %vm2333 = vcmp.eq.s32.totalorder %v2331, 0
    %v2334 = vxor.u32 %v2328, 2147483648
    %v2335 = vsel %vm2333, %v2320, %v2334
    %vm2336 = vcmp.eq.s32.totalorder %v2331, 2
    %v2337 = vxor.u32 %v2320, 2147483648
    %v2338 = vsel %vm2336, %v2337, %v2328
    %v2339 = vsel %vm2332, %v2335, %v2338
    %v2340 = vsel %vm2329, nan, %v2339
    %v2341 = vand.u32 2147483647, %v2030
    %vm2342 = vcmp.le.f32.partialorder %v2341, 0.7853982
    %vm2343 = vcmp.lt.s32.totalorder %v2030, 0
    %v2344 = vand.u32 %v2030, 2139095040
    %v2345 = vshrl.u32 %v2344, 23
    %v2346 = vsub.s32 %v2345, 127
    %v2347 = vand.u32 2147483647, %v2030
    %v2348 = vand.u32 %v2347, 8388607
    %v2349 = vor.u32 %v2348, 8388608
    %v2350 = vsub.s32 0, %v2349
    %v2351 = vadd.s32 %v2346, 1
    %vm2352 = vcmp.gt.s32.totalorder %v2351, 0
    %v2353 = vsel %vm2352, %v2351, 0
    %v2354 = vshrl.u32 %v2353, 5
    %v2355 = vand.u32 %v2353, 31
    %v2356 = vsub.s32 32, %v2355
    %v2357 = vshrl.u32 683565275, %v2356
    %v2358 = vshll.u32 683565275, %v2355
    %v2359 = vshrl.u32 2475754826, %v2356
    %v2360 = vor.u32 %v2358, %v2359
    %v2361 = vshll.u32 2475754826, %v2355
    %v2362 = vshrl.u32 2131351028, %v2356
    %v2363 = vor.u32 %v2361, %v2362
    %v2364 = vshll.u32 2131351028, %v2355
    %v2365 = vshrl.u32 2102212464, %v2356
    %v2366 = vor.u32 %v2364, %v2365
    %v2367 = vshll.u32 2102212464, %v2355
    %v2368 = vshrl.u32 920167782, %v2356
    %v2369 = vor.u32 %v2367, %v2368
    %v2370 = vshll.u32 920167782, %v2355
    %v2371 = vshrl.u32 1326507024, %v2356
    %v2372 = vor.u32 %v2370, %v2371
    %vm2373 = vcmp.lt.s32.totalorder %v2354, 1
    %vm2374 = vcmp.lt.s32.totalorder %v2354, 2
    %vm2375 = vcmp.lt.s32.totalorder %v2354, 3
    %vm2376 = vcmp.lt.s32.totalorder %v2354, 4
    %v2377 = vsel %vm2373, %v2357, %v2360
    %v2378 = vsel %vm2376, %v2366, 2102212464
    %v2379 = vsel %vm2375, %v2363, %v2378
    %v2380 = vsel %vm2374, %v2377, %v2379
    %v2381 = vsel %vm2373, %v2360, %v2363
    %v2382 = vsel %vm2376, %v2369, 920167782
    %v2383 = vsel %vm2375, %v2366, %v2382
    %v2384 = vsel %vm2374, %v2381, %v2383
    %v2385 = vsel %vm2373, %v2363, %v2366
    %v2386 = vsel %vm2376, %v2372, 1326507024
    %v2387 = vsel %vm2375, %v2369, %v2386
    %v2388 = vsel %vm2374, %v2385, %v2387
    %v2389 = vshll.u32 %v2349, 8
    %v2390 = vand.u32 %v2389, 65535
    %v2391 = vshrl.u32 %v2389, 16
    %v2392 = vand.u32 %v2388, 65535
    %v2393 = vshrl.u32 %v2388, 16
    %v2394 = vmul.u32 %v2390, %v2392
    %v2395 = vmul.u32 %v2390, %v2393
    %v2396 = vmul.u32 %v2391, %v2392
    %v2397 = vmul.u32 %v2391, %v2393
    %v2398 = vshll.u32 %v2395, 16
    %v2399 = vshrl.u32 %v2395, 16
    %v2400 = vshll.u32 %v2396, 16
    %v2401 = vshrl.u32 %v2396, 16
    %vm2402 = vc.u32 %v2394, %v2398
    %v2403 = vsel %vm2402, 1, 0
    %v2404 = vadd.s32 %v2394, %v2398
    %v2405 = vadd.s32 %v2397, %v2403
    %vm2406 = vc.u32 %v2404, %v2400
    %v2407 = vsel %vm2406, 1, 0
    %v2408 = vadd.s32 %v2404, %v2400
    %v2409 = vadd.s32 %v2405, %v2407
    %v2410 = vadd.s32 %v2409, %v2399
    %v2411 = vadd.s32 %v2410, %v2401
    %v2412 = vand.u32 %v2389, 65535
    %v2413 = vshrl.u32 %v2389, 16
    %v2414 = vand.u32 %v2384, 65535
    %v2415 = vshrl.u32 %v2384, 16
    %v2416 = vmul.u32 %v2412, %v2414
    %v2417 = vmul.u32 %v2412, %v2415
    %v2418 = vmul.u32 %v2413, %v2414
    %v2419 = vmul.u32 %v2413, %v2415
    %v2420 = vshll.u32 %v2417, 16
    %v2421 = vshrl.u32 %v2417, 16
    %v2422 = vshll.u32 %v2418, 16
    %v2423 = vshrl.u32 %v2418, 16
    %vm2424 = vc.u32 %v2416, %v2420
    %v2425 = vsel %vm2424, 1, 0
    %v2426 = vadd.s32 %v2416, %v2420
    %v2427 = vadd.s32 %v2419, %v2425
    %vm2428 = vc.u32 %v2426, %v2422
    %v2429 = vsel %vm2428, 1, 0
    %v2430 = vadd.s32 %v2426, %v2422
    %v2431 = vadd.s32 %v2427, %v2429
    %v2432 = vadd.s32 %v2431, %v2421
    %v2433 = vadd.s32 %v2432, %v2423
    %v2434 = vmul.u32 %v2389, %v2380
    %v2435 = vadd.s32 %v2411, %v2430
    %vm2436 = vc.u32 %v2411, %v2430
    %v2437 = vadd.s32 %v2433, 1
    %v2438 = vsel %vm2436, %v2437, %v2433
    %v2439 = vadd.s32 %v2434, %v2438
    %v2440 = vadd.s32 %v2439, 536870912
    %v2441 = vshrl.u32 %v2440, 30
    %v2442 = vshll.u32 %v2441, 30
    %v2443 = vsub.s32 %v2439, %v2442
    %vm2444 = vcmp.lt.s32.totalorder %v2443, 0
    %v2445 = vsub.s32 0, %v2443
    %v2446 = vsel %vm2444, %v2445, %v2443
    %v2447 = vclz %v2446
    %v2448 = vsub.s32 %v2447, 2
    %vm2449 = vcmp.gt.s32.totalorder 0, %v2448
    %v2450 = vsel %vm2449, 0, %v2448
    %v2451 = vsub.s32 32, %v2450
    %v2452 = vshll.u32 %v2443, %v2450
    %v2453 = vshrl.u32 %v2435, %v2451
    %v2454 = vor.u32 %v2452, %v2453
    %v2455 = vsub.s32 4294967266, %v2450
    %v2456 = vadd.s32 %v2455, 127
    %v2457 = vshll.u32 %v2456, 23
    %v2458 = vor.u32 4788187, %v2457
    %v2459 = vand.u32 2147483647, %v2458
    %v2461 = vcvt.s32.f32 %v2454
    %v2462 = vmul.f32 %v2461, %v2459
    %v2463 = vxor.u32 %v2462, 2147483648
    %v2464 = vsel %vm2343, %v2463, %v2462
    %v2465 = vsub.s32 4, %v2441
    %v2466 = vsel %vm2343, %v2465, %v2441
    %v2467 = vsel %vm2342, %v2030, %v2464
    %v2468 = vsel %vm2342, 0, %v2466
    %v2469 = vmul.f32 %v2467, %v2467
    %v2470 = vmul.f32 %v2469, -0.001358992
    %v2471 = vadd.f32 %v2470, 0.041655596
    %v2472 = vmul.f32 %v2469, %v2471
    %v2473 = vadd.f32 %v2472, -0.4999988
    %v2474 = vmul.f32 %v2469, %v2473
    %v2475 = vadd.f32 1.0, %v2474
    %v2476 = vmul.f32 %v2467, %v2467
    %v2477 = vmul.f32 %v2476, -0.00019511016
    %v2478 = vadd.f32 %v2477, 0.008332121
    %v2479 = vmul.f32 %v2476, %v2478
    %v2480 = vadd.f32 %v2479, -0.16666654
    %v2481 = vmul.f32 %v2476, %v2480
    %v2482 = vadd.f32 %v2481, 1.0
    %v2483 = vmul.f32 %v2482, %v2467
    %vm2484 = vweird.f32 %v2030
    %v2485 = vadd.s32 %v2468, 3
    %v2486 = vand.u32 %v2485, 3
    %vm2487 = vcmp.lt.s32.totalorder %v2486, 2
    %vm2488 = vcmp.eq.s32.totalorder %v2486, 0
    %v2489 = vxor.u32 %v2483, 2147483648
    %v2490 = vsel %vm2488, %v2475, %v2489
    %vm2491 = vcmp.eq.s32.totalorder %v2486, 2
    %v2492 = vxor.u32 %v2475, 2147483648
    %v2493 = vsel %vm2491, %v2492, %v2483
    %v2494 = vsel %vm2487, %v2490, %v2493
    %v2495 = vsel %vm2484, nan, %v2494
    %v2496 = vand.u32 2147483647, %v2026
    %vm2497 = vcmp.le.f32.partialorder %v2496, 0.7853982
    %vm2498 = vcmp.lt.s32.totalorder %v2026, 0
    %v2499 = vand.u32 %v2026, 2139095040
    %v2500 = vshrl.u32 %v2499, 23
    %v2501 = vsub.s32 %v2500, 127
    %v2502 = vand.u32 2147483647, %v2026
    %v2503 = vand.u32 %v2502, 8388607
    %v2504 = vor.u32 %v2503, 8388608
    %v2505 = vsub.s32 0, %v2504
    %v2506 = vadd.s32 %v2501, 1
    %vm2507 = vcmp.gt.s32.totalorder %v2506, 0
    %v2508 = vsel %vm2507, %v2506, 0
    %v2509 = vshrl.u32 %v2508, 5
    %v2510 = vand.u32 %v2508, 31
    %v2511 = vsub.s32 32, %v2510
    %v2512 = vshrl.u32 683565275, %v2511
    %v2513 = vshll.u32 683565275, %v2510
    %v2514 = vshrl.u32 2475754826, %v2511
    %v2515 = vor.u32 %v2513, %v2514
    %v2516 = vshll.u32 2475754826, %v2510
    %v2517 = vshrl.u32 2131351028, %v2511
    %v2518 = vor.u32 %v2516, %v2517
    %v2519 = vshll.u32 2131351028, %v2510
    %v2520 = vshrl.u32 2102212464, %v2511
    %v2521 = vor.u32 %v2519, %v2520
    %v2522 = vshll.u32 2102212464, %v2510
    %v2523 = vshrl.u32 920167782, %v2511
    %v2524 = vor.u32 %v2522, %v2523
    %v2525 = vshll.u32 920167782, %v2510
    %v2526 = vshrl.u32 1326507024, %v2511
    %v2527 = vor.u32 %v2525, %v2526
    %vm2528 = vcmp.lt.s32.totalorder %v2509, 1
    %vm2529 = vcmp.lt.s32.totalorder %v2509, 2
    %vm2530 = vcmp.lt.s32.totalorder %v2509, 3
    %vm2531 = vcmp.lt.s32.totalorder %v2509, 4
    %v2532 = vsel %vm2528, %v2512, %v2515
    %v2533 = vsel %vm2531, %v2521, 2102212464
    %v2534 = vsel %vm2530, %v2518, %v2533
    %v2535 = vsel %vm2529, %v2532, %v2534
    %v2536 = vsel %vm2528, %v2515, %v2518
    %v2537 = vsel %vm2531, %v2524, 920167782
    %v2538 = vsel %vm2530, %v2521, %v2537
    %v2539 = vsel %vm2529, %v2536, %v2538
    %v2540 = vsel %vm2528, %v2518, %v2521
    %v2541 = vsel %vm2531, %v2527, 1326507024
    %v2542 = vsel %vm2530, %v2524, %v2541
    %v2543 = vsel %vm2529, %v2540, %v2542
    %v2544 = vshll.u32 %v2504, 8
    %v2545 = vand.u32 %v2544, 65535
    %v2546 = vshrl.u32 %v2544, 16
    %v2547 = vand.u32 %v2543, 65535
    %v2548 = vshrl.u32 %v2543, 16
    %v2549 = vmul.u32 %v2545, %v2547
    %v2550 = vmul.u32 %v2545, %v2548
    %v2551 = vmul.u32 %v2546, %v2547
    %v2552 = vmul.u32 %v2546, %v2548
    %v2553 = vshll.u32 %v2550, 16
    %v2554 = vshrl.u32 %v2550, 16
    %v2555 = vshll.u32 %v2551, 16
    %v2556 = vshrl.u32 %v2551, 16
    %vm2557 = vc.u32 %v2549, %v2553
    %v2558 = vsel %vm2557, 1, 0
    %v2559 = vadd.s32 %v2549, %v2553
    %v2560 = vadd.s32 %v2552, %v2558
    %vm2561 = vc.u32 %v2559, %v2555
    %v2562 = vsel %vm2561, 1, 0
    %v2563 = vadd.s32 %v2559, %v2555
    %v2564 = vadd.s32 %v2560, %v2562
    %v2565 = vadd.s32 %v2564, %v2554
    %v2566 = vadd.s32 %v2565, %v2556
    %v2567 = vand.u32 %v2544, 65535
    %v2568 = vshrl.u32 %v2544, 16
    %v2569 = vand.u32 %v2539, 65535
    %v2570 = vshrl.u32 %v2539, 16
    %v2571 = vmul.u32 %v2567, %v2569
    %v2572 = vmul.u32 %v2567, %v2570
    %v2573 = vmul.u32 %v2568, %v2569
    %v2574 = vmul.u32 %v2568, %v2570
    %v2575 = vshll.u32 %v2572, 16
    %v2576 = vshrl.u32 %v2572, 16
    %v2577 = vshll.u32 %v2573, 16
    %v2578 = vshrl.u32 %v2573, 16
    %vm2579 = vc.u32 %v2571, %v2575
    %v2580 = vsel %vm2579, 1, 0
    %v2581 = vadd.s32 %v2571, %v2575
    %v2582 = vadd.s32 %v2574, %v2580
    %vm2583 = vc.u32 %v2581, %v2577
    %v2584 = vsel %vm2583, 1, 0
    %v2585 = vadd.s32 %v2581, %v2577
    %v2586 = vadd.s32 %v2582, %v2584
    %v2587 = vadd.s32 %v2586, %v2576
    %v2588 = vadd.s32 %v2587, %v2578
    %v2589 = vmul.u32 %v2544, %v2535
    %v2590 = vadd.s32 %v2566, %v2585
    %vm2591 = vc.u32 %v2566, %v2585
    %v2592 = vadd.s32 %v2588, 1
    %v2593 = vsel %vm2591, %v2592, %v2588
    %v2594 = vadd.s32 %v2589, %v2593
    %v2595 = vadd.s32 %v2594, 536870912
    %v2596 = vshrl.u32 %v2595, 30
    %v2597 = vshll.u32 %v2596, 30
    %v2598 = vsub.s32 %v2594, %v2597
    %vm2599 = vcmp.lt.s32.totalorder %v2598, 0
    %v2600 = vsub.s32 0, %v2598
    %v2601 = vsel %vm2599, %v2600, %v2598
    %v2602 = vclz %v2601
    %v2603 = vsub.s32 %v2602, 2
    %vm2604 = vcmp.gt.s32.totalorder 0, %v2603
    %v2605 = vsel %vm2604, 0, %v2603
    %v2606 = vsub.s32 32, %v2605
    %v2607 = vshll.u32 %v2598, %v2605
    %v2608 = vshrl.u32 %v2590, %v2606
    %v2609 = vor.u32 %v2607, %v2608
    %v2610 = vsub.s32 4294967266, %v2605
    %v2611 = vadd.s32 %v2610, 127
    %v2612 = vshll.u32 %v2611, 23
    %v2613 = vor.u32 4788187, %v2612
    %v2614 = vand.u32 2147483647, %v2613
    %v2616 = vcvt.s32.f32 %v2609
    %v2617 = vmul.f32 %v2616, %v2614
    %v2618 = vxor.u32 %v2617, 2147483648
    %v2619 = vsel %vm2498, %v2618, %v2617
    %v2620 = vsub.s32 4, %v2596
    %v2621 = vsel %vm2498, %v2620, %v2596
    %v2622 = vsel %vm2497, %v2026, %v2619
    %v2623 = vsel %vm2497, 0, %v2621
    %v2624 = vmul.f32 %v2622, %v2622
    %v2625 = vmul.f32 %v2624, -0.001358992
    %v2626 = vadd.f32 %v2625, 0.041655596
    %v2627 = vmul.f32 %v2624, %v2626
    %v2628 = vadd.f32 %v2627, -0.4999988
    %v2629 = vmul.f32 %v2624, %v2628
    %v2630 = vadd.f32 1.0, %v2629
    %v2631 = vmul.f32 %v2622, %v2622
    %v2632 = vmul.f32 %v2631, -0.00019511016
    %v2633 = vadd.f32 %v2632, 0.008332121
    %v2634 = vmul.f32 %v2631, %v2633
    %v2635 = vadd.f32 %v2634, -0.16666654
    %v2636 = vmul.f32 %v2631, %v2635
    %v2637 = vadd.f32 %v2636, 1.0
    %v2638 = vmul.f32 %v2637, %v2622
    %vm2639 = vweird.f32 %v2026
    %v2640 = vand.u32 %v2623, 3
    %vm2641 = vcmp.lt.s32.totalorder %v2640, 2
    %vm2642 = vcmp.eq.s32.totalorder %v2640, 0
    %v2643 = vxor.u32 %v2638, 2147483648
    %v2644 = vsel %vm2642, %v2630, %v2643
    %vm2645 = vcmp.eq.s32.totalorder %v2640, 2
    %v2646 = vxor.u32 %v2630, 2147483648
    %v2647 = vsel %vm2645, %v2646, %v2638
    %v2648 = vsel %vm2641, %v2644, %v2647
    %v2649 = vsel %vm2639, nan, %v2648
    %v2650 = vand.u32 2147483647, %v2028
    %vm2651 = vcmp.le.f32.partialorder %v2650, 0.7853982
    %vm2652 = vcmp.lt.s32.totalorder %v2028, 0
    %v2653 = vand.u32 %v2028, 2139095040
    %v2654 = vshrl.u32 %v2653, 23
    %v2655 = vsub.s32 %v2654, 127
    %v2656 = vand.u32 2147483647, %v2028
    %v2657 = vand.u32 %v2656, 8388607
    %v2658 = vor.u32 %v2657, 8388608
    %v2659 = vsub.s32 0, %v2658
    %v2660 = vadd.s32 %v2655, 1
    %vm2661 = vcmp.gt.s32.totalorder %v2660, 0
    %v2662 = vsel %vm2661, %v2660, 0
    %v2663 = vshrl.u32 %v2662, 5
    %v2664 = vand.u32 %v2662, 31
    %v2665 = vsub.s32 32, %v2664
    %v2666 = vshrl.u32 683565275, %v2665
    %v2667 = vshll.u32 683565275, %v2664
    %v2668 = vshrl.u32 2475754826, %v2665
    %v2669 = vor.u32 %v2667, %v2668
    %v2670 = vshll.u32 2475754826, %v2664
    %v2671 = vshrl.u32 2131351028, %v2665
    %v2672 = vor.u32 %v2670, %v2671
    %v2673 = vshll.u32 2131351028, %v2664
    %v2674 = vshrl.u32 2102212464, %v2665
    %v2675 = vor.u32 %v2673, %v2674
    %v2676 = vshll.u32 2102212464, %v2664
    %v2677 = vshrl.u32 920167782, %v2665
    %v2678 = vor.u32 %v2676, %v2677
    %v2679 = vshll.u32 920167782, %v2664
    %v2680 = vshrl.u32 1326507024, %v2665
    %v2681 = vor.u32 %v2679, %v2680
    %vm2682 = vcmp.lt.s32.totalorder %v2663, 1
    %vm2683 = vcmp.lt.s32.totalorder %v2663, 2
    %vm2684 = vcmp.lt.s32.totalorder %v2663, 3
    %vm2685 = vcmp.lt.s32.totalorder %v2663, 4
    %v2686 = vsel %vm2682, %v2666, %v2669
    %v2687 = vsel %vm2685, %v2675, 2102212464
    %v2688 = vsel %vm2684, %v2672, %v2687
    %v2689 = vsel %vm2683, %v2686, %v2688
    %v2690 = vsel %vm2682, %v2669, %v2672
    %v2691 = vsel %vm2685, %v2678, 920167782
    %v2692 = vsel %vm2684, %v2675, %v2691
    %v2693 = vsel %vm2683, %v2690, %v2692
    %v2694 = vsel %vm2682, %v2672, %v2675
    %v2695 = vsel %vm2685, %v2681, 1326507024
    %v2696 = vsel %vm2684, %v2678, %v2695
    %v2697 = vsel %vm2683, %v2694, %v2696
    %v2698 = vshll.u32 %v2658, 8
    %v2699 = vand.u32 %v2698, 65535
    %v2700 = vshrl.u32 %v2698, 16
    %v2701 = vand.u32 %v2697, 65535
    %v2702 = vshrl.u32 %v2697, 16
    %v2703 = vmul.u32 %v2699, %v2701
    %v2704 = vmul.u32 %v2699, %v2702
    %v2705 = vmul.u32 %v2700, %v2701
    %v2706 = vmul.u32 %v2700, %v2702
    %v2707 = vshll.u32 %v2704, 16
    %v2708 = vshrl.u32 %v2704, 16
    %v2709 = vshll.u32 %v2705, 16
    %v2710 = vshrl.u32 %v2705, 16
    %vm2711 = vc.u32 %v2703, %v2707
    %v2712 = vsel %vm2711, 1, 0
    %v2713 = vadd.s32 %v2703, %v2707
    %v2714 = vadd.s32 %v2706, %v2712
    %vm2715 = vc.u32 %v2713, %v2709
    %v2716 = vsel %vm2715, 1, 0
    %v2717 = vadd.s32 %v2713, %v2709
    %v2718 = vadd.s32 %v2714, %v2716
    %v2719 = vadd.s32 %v2718, %v2708
    %v2720 = vadd.s32 %v2719, %v2710
    %v2721 = vand.u32 %v2698, 65535
    %v2722 = vshrl.u32 %v2698, 16
    %v2723 = vand.u32 %v2693, 65535
    %v2724 = vshrl.u32 %v2693, 16
    %v2725 = vmul.u32 %v2721, %v2723
    %v2726 = vmul.u32 %v2721, %v2724
    %v2727 = vmul.u32 %v2722, %v2723
    %v2728 = vmul.u32 %v2722, %v2724
    %v2729 = vshll.u32 %v2726, 16
    %v2730 = vshrl.u32 %v2726, 16
    %v2731 = vshll.u32 %v2727, 16
    %v2732 = vshrl.u32 %v2727, 16
    %vm2733 = vc.u32 %v2725, %v2729
    %v2734 = vsel %vm2733, 1, 0
    %v2735 = vadd.s32 %v2725, %v2729
    %v2736 = vadd.s32 %v2728, %v2734
    %vm2737 = vc.u32 %v2735, %v2731
    %v2738 = vsel %vm2737, 1, 0
    %v2739 = vadd.s32 %v2735, %v2731
    %v2740 = vadd.s32 %v2736, %v2738
    %v2741 = vadd.s32 %v2740, %v2730
    %v2742 = vadd.s32 %v2741, %v2732
    %v2743 = vmul.u32 %v2698, %v2689
    %v2744 = vadd.s32 %v2720, %v2739
    %vm2745 = vc.u32 %v2720, %v2739
    %v2746 = vadd.s32 %v2742, 1
    %v2747 = vsel %vm2745, %v2746, %v2742
    %v2748 = vadd.s32 %v2743, %v2747
    %v2749 = vadd.s32 %v2748, 536870912
    %v2750 = vshrl.u32 %v2749, 30
    %v2751 = vshll.u32 %v2750, 30
    %v2752 = vsub.s32 %v2748, %v2751
    %vm2753 = vcmp.lt.s32.totalorder %v2752, 0
    %v2754 = vsub.s32 0, %v2752
    %v2755 = vsel %vm2753, %v2754, %v2752
    %v2756 = vclz %v2755
    %v2757 = vsub.s32 %v2756, 2
    %vm2758 = vcmp.gt.s32.totalorder 0, %v2757
    %v2759 = vsel %vm2758, 0, %v2757
    %v2760 = vsub.s32 32, %v2759
    %v2761 = vshll.u32 %v2752, %v2759
    %v2762 = vshrl.u32 %v2744, %v2760
    %v2763 = vor.u32 %v2761, %v2762
    %v2764 = vsub.s32 4294967266, %v2759
    %v2765 = vadd.s32 %v2764, 127
    %v2766 = vshll.u32 %v2765, 23
    %v2767 = vor.u32 4788187, %v2766
    %v2768 = vand.u32 2147483647, %v2767
    %v2770 = vcvt.s32.f32 %v2763
    %v2771 = vmul.f32 %v2770, %v2768
    %v2772 = vxor.u32 %v2771, 2147483648
    %v2773 = vsel %vm2652, %v2772, %v2771
    %v2774 = vsub.s32 4, %v2750
    %v2775 = vsel %vm2652, %v2774, %v2750
    %v2776 = vsel %vm2651, %v2028, %v2773
    %v2777 = vsel %vm2651, 0, %v2775
    %v2778 = vmul.f32 %v2776, %v2776
    %v2779 = vmul.f32 %v2778, -0.001358992
    %v2780 = vadd.f32 %v2779, 0.041655596
    %v2781 = vmul.f32 %v2778, %v2780
    %v2782 = vadd.f32 %v2781, -0.4999988
    %v2783 = vmul.f32 %v2778, %v2782
    %v2784 = vadd.f32 1.0, %v2783
    %v2785 = vmul.f32 %v2776, %v2776
    %v2786 = vmul.f32 %v2785, -0.00019511016
    %v2787 = vadd.f32 %v2786, 0.008332121
    %v2788 = vmul.f32 %v2785, %v2787
    %v2789 = vadd.f32 %v2788, -0.16666654
    %v2790 = vmul.f32 %v2785, %v2789
    %v2791 = vadd.f32 %v2790, 1.0
    %v2792 = vmul.f32 %v2791, %v2776
    %vm2793 = vweird.f32 %v2028
    %v2794 = vand.u32 %v2777, 3
    %vm2795 = vcmp.lt.s32.totalorder %v2794, 2
    %vm2796 = vcmp.eq.s32.totalorder %v2794, 0
    %v2797 = vxor.u32 %v2792, 2147483648
    %v2798 = vsel %vm2796, %v2784, %v2797
    %vm2799 = vcmp.eq.s32.totalorder %v2794, 2
    %v2800 = vxor.u32 %v2784, 2147483648
    %v2801 = vsel %vm2799, %v2800, %v2792
    %v2802 = vsel %vm2795, %v2798, %v2801
    %v2803 = vsel %vm2793, nan, %v2802
    %v2804 = vand.u32 2147483647, %v2030
    %vm2805 = vcmp.le.f32.partialorder %v2804, 0.7853982
    %vm2806 = vcmp.lt.s32.totalorder %v2030, 0
    %v2807 = vand.u32 %v2030, 2139095040
    %v2808 = vshrl.u32 %v2807, 23
    %v2809 = vsub.s32 %v2808, 127
    %v2810 = vand.u32 2147483647, %v2030
    %v2811 = vand.u32 %v2810, 8388607
    %v2812 = vor.u32 %v2811, 8388608
    %v2813 = vsub.s32 0, %v2812
    %v2814 = vadd.s32 %v2809, 1
    %vm2815 = vcmp.gt.s32.totalorder %v2814, 0
    %v2816 = vsel %vm2815, %v2814, 0
    %v2817 = vshrl.u32 %v2816, 5
    %v2818 = vand.u32 %v2816, 31
    %v2819 = vsub.s32 32, %v2818
    %v2820 = vshrl.u32 683565275, %v2819
    %v2821 = vshll.u32 683565275, %v2818
    %v2822 = vshrl.u32 2475754826, %v2819
    %v2823 = vor.u32 %v2821, %v2822
    %v2824 = vshll.u32 2475754826, %v2818
    %v2825 = vshrl.u32 2131351028, %v2819
    %v2826 = vor.u32 %v2824, %v2825
    %v2827 = vshll.u32 2131351028, %v2818
    %v2828 = vshrl.u32 2102212464, %v2819
    %v2829 = vor.u32 %v2827, %v2828
    %v2830 = vshll.u32 2102212464, %v2818
    %v2831 = vshrl.u32 920167782, %v2819
    %v2832 = vor.u32 %v2830, %v2831
    %v2833 = vshll.u32 920167782, %v2818
    %v2834 = vshrl.u32 1326507024, %v2819
    %v2835 = vor.u32 %v2833, %v2834
    %vm2836 = vcmp.lt.s32.totalorder %v2817, 1
    %vm2837 = vcmp.lt.s32.totalorder %v2817, 2
    %vm2838 = vcmp.lt.s32.totalorder %v2817, 3
    %vm2839 = vcmp.lt.s32.totalorder %v2817, 4
    %v2840 = vsel %vm2836, %v2820, %v2823
    %v2841 = vsel %vm2839, %v2829, 2102212464
    %v2842 = vsel %vm2838, %v2826, %v2841
    %v2843 = vsel %vm2837, %v2840, %v2842
    %v2844 = vsel %vm2836, %v2823, %v2826
    %v2845 = vsel %vm2839, %v2832, 920167782
    %v2846 = vsel %vm2838, %v2829, %v2845
    %v2847 = vsel %vm2837, %v2844, %v2846
    %v2848 = vsel %vm2836, %v2826, %v2829
    %v2849 = vsel %vm2839, %v2835, 1326507024
    %v2850 = vsel %vm2838, %v2832, %v2849
    %v2851 = vsel %vm2837, %v2848, %v2850
    %v2852 = vshll.u32 %v2812, 8
    %v2853 = vand.u32 %v2852, 65535
    %v2854 = vshrl.u32 %v2852, 16
    %v2855 = vand.u32 %v2851, 65535
    %v2856 = vshrl.u32 %v2851, 16
    %v2857 = vmul.u32 %v2853, %v2855
    %v2858 = vmul.u32 %v2853, %v2856
    %v2859 = vmul.u32 %v2854, %v2855
    %v2860 = vmul.u32 %v2854, %v2856
    %v2861 = vshll.u32 %v2858, 16
    %v2862 = vshrl.u32 %v2858, 16
    %v2863 = vshll.u32 %v2859, 16
    %v2864 = vshrl.u32 %v2859, 16
    %vm2865 = vc.u32 %v2857, %v2861
    %v2866 = vsel %vm2865, 1, 0
    %v2867 = vadd.s32 %v2857, %v2861
    %v2868 = vadd.s32 %v2860, %v2866
    %vm2869 = vc.u32 %v2867, %v2863
    %v2870 = vsel %vm2869, 1, 0
    %v2871 = vadd.s32 %v2867, %v2863
    %v2872 = vadd.s32 %v2868, %v2870
    %v2873 = vadd.s32 %v2872, %v2862
    %v2874 = vadd.s32 %v2873, %v2864
    %v2875 = vand.u32 %v2852, 65535
    %v2876 = vshrl.u32 %v2852, 16
    %v2877 = vand.u32 %v2847, 65535
    %v2878 = vshrl.u32 %v2847, 16
    %v2879 = vmul.u32 %v2875, %v2877
    %v2880 = vmul.u32 %v2875, %v2878
    %v2881 = vmul.u32 %v2876, %v2877
    %v2882 = vmul.u32 %v2876, %v2878
    %v2883 = vshll.u32 %v2880, 16
    %v2884 = vshrl.u32 %v2880, 16
    %v2885 = vshll.u32 %v2881, 16
    %v2886 = vshrl.u32 %v2881, 16
    %vm2887 = vc.u32 %v2879, %v2883
    %v2888 = vsel %vm2887, 1, 0
    %v2889 = vadd.s32 %v2879, %v2883
    %v2890 = vadd.s32 %v2882, %v2888
    %vm2891 = vc.u32 %v2889, %v2885
    %v2892 = vsel %vm2891, 1, 0
    %v2893 = vadd.s32 %v2889, %v2885
    %v2894 = vadd.s32 %v2890, %v2892
    %v2895 = vadd.s32 %v2894, %v2884
    %v2896 = vadd.s32 %v2895, %v2886
    %v2897 = vmul.u32 %v2852, %v2843
    %v2898 = vadd.s32 %v2874, %v2893
    %vm2899 = vc.u32 %v2874, %v2893
    %v2900 = vadd.s32 %v2896, 1
    %v2901 = vsel %vm2899, %v2900, %v2896
    %v2902 = vadd.s32 %v2897, %v2901
    %v2903 = vadd.s32 %v2902, 536870912
    %v2904 = vshrl.u32 %v2903, 30
    %v2905 = vshll.u32 %v2904, 30
    %v2906 = vsub.s32 %v2902, %v2905
    %vm2907 = vcmp.lt.s32.totalorder %v2906, 0
    %v2908 = vsub.s32 0, %v2906
    %v2909 = vsel %vm2907, %v2908, %v2906
    %v2910 = vclz %v2909
    %v2911 = vsub.s32 %v2910, 2
    %vm2912 = vcmp.gt.s32.totalorder 0, %v2911
    %v2913 = vsel %vm2912, 0, %v2911
    %v2914 = vsub.s32 32, %v2913
    %v2915 = vshll.u32 %v2906, %v2913
    %v2916 = vshrl.u32 %v2898, %v2914
    %v2917 = vor.u32 %v2915, %v2916
    %v2918 = vsub.s32 4294967266, %v2913
    %v2919 = vadd.s32 %v2918, 127
    %v2920 = vshll.u32 %v2919, 23
    %v2921 = vor.u32 4788187, %v2920
    %v2922 = vand.u32 2147483647, %v2921
    %v2924 = vcvt.s32.f32 %v2917
    %v2925 = vmul.f32 %v2924, %v2922
    %v2926 = vxor.u32 %v2925, 2147483648
    %v2927 = vsel %vm2806, %v2926, %v2925
    %v2928 = vsub.s32 4, %v2904
    %v2929 = vsel %vm2806, %v2928, %v2904
    %v2930 = vsel %vm2805, %v2030, %v2927
    %v2931 = vsel %vm2805, 0, %v2929
    %v2932 = vmul.f32 %v2930, %v2930
    %v2933 = vmul.f32 %v2932, -0.001358992
    %v2934 = vadd.f32 %v2933, 0.041655596
    %v2935 = vmul.f32 %v2932, %v2934
    %v2936 = vadd.f32 %v2935, -0.4999988
    %v2937 = vmul.f32 %v2932, %v2936
    %v2938 = vadd.f32 1.0, %v2937
    %v2939 = vmul.f32 %v2930, %v2930
    %v2940 = vmul.f32 %v2939, -0.00019511016
    %v2941 = vadd.f32 %v2940, 0.008332121
    %v2942 = vmul.f32 %v2939, %v2941
    %v2943 = vadd.f32 %v2942, -0.16666654
    %v2944 = vmul.f32 %v2939, %v2943
    %v2945 = vadd.f32 %v2944, 1.0
    %v2946 = vmul.f32 %v2945, %v2930
    %vm2947 = vweird.f32 %v2030
    %v2948 = vand.u32 %v2931, 3
    %vm2949 = vcmp.lt.s32.totalorder %v2948, 2
    %vm2950 = vcmp.eq.s32.totalorder %v2948, 0
    %v2951 = vxor.u32 %v2946, 2147483648
    %v2952 = vsel %vm2950, %v2938, %v2951
    %vm2953 = vcmp.eq.s32.totalorder %v2948, 2
    %v2954 = vxor.u32 %v2938, 2147483648
    %v2955 = vsel %vm2953, %v2954, %v2946
    %v2956 = vsel %vm2949, %v2952, %v2955
    %v2957 = vsel %vm2947, nan, %v2956
    %v2958 = vmul.f32 %v2957, %v2803
    %v2959 = vmul.f32 %v2495, %v2803
    %v2960 = vsub.f32 0.0, %v2340
    %v2961 = vmul.f32 %v2957, %v2340
    %v2962 = vmul.f32 %v2961, %v2185
    %v2963 = vmul.f32 %v2495, %v2649
    %v2964 = vsub.f32 %v2962, %v2963
    %v2965 = vmul.f32 %v2495, %v2340
    %v2966 = vmul.f32 %v2965, %v2185
    %v2967 = vmul.f32 %v2957, %v2649
    %v2968 = vadd.f32 %v2966, %v2967
    %v2969 = vmul.f32 %v2803, %v2185
    %v2970 = vmul.f32 %v2961, %v2649
    %v2971 = vmul.f32 %v2495, %v2185
    %v2972 = vadd.f32 %v2970, %v2971
    %v2973 = vmul.f32 %v2965, %v2649
    %v2974 = vmul.f32 %v2957, %v2185
    %v2975 = vsub.f32 %v2973, %v2974
    %v2976 = vmul.f32 %v2803, %v2649
    %v2977 = vadd.f32 %v2958, %v2968
    %v2978 = vadd.f32 %v2977, %v2976
    %v2979 = vsub.f32 %v2978, 1.0
    %v2980 = vmul.f32 %v2979, 0.5
    %v2981 = vmax.f32 %v2980, -0.999999
    %v2982 = vmin.f32 %v2981, 0.999999
    %v2983 = vand.u32 2147483647, %v2982
    %v2984 = vmul.f32 %v2983, 0.0187293
    %v2985 = vsub.f32 0.074261, %v2984
    %v2986 = vmul.f32 %v2983, %v2985
    %v2987 = vadd.f32 %v2986, -0.2121144
    %v2988 = vmul.f32 %v2983, %v2987
    %v2989 = vadd.f32 %v2988, 1.5707288
    %v2990 = vsub.f32 1.0, %v2983
    %v2991 = vmax.f32 %v2990, 0.0
    %v2992 = vrsqrt.pop %v2991
    %v2993 = vmul.f32 %v2992, %v2991
    %v2994 = vmul.f32 %v2993, %v2992
    %v2995 = vmul.f32 0.5, %v2994
    %v2996 = vsub.f32 1.5, %v2995
    %v2997 = vmul.f32 %v2992, %v2996
    %v2998 = vmul.f32 %v2991, %v2997
    %vm2999 = vcmp.eq.f32.partialorder %v2991, inf
    %v3000 = vsel %vm2999, %v2991, %v2998
    %vm3001 = vcmp.eq.f32.partialorder %v2991, 0.0
    %v3002 = vand.u32 %v2991, 2147483648
    %v3003 = vsel %vm3001, %v3002, %v3000
    %v3004 = vmul.f32 %v3003, %v2989
    %vm3005 = vcmp.lt.f32.partialorder %v2982, 0.0
    %v3006 = vsub.f32 3.1415927, %v3004
    %v3007 = vsel %vm3005, %v3006, %v3004
    %v3008 = vand.u32 2147483647, %v3007
    %vm3009 = vcmp.le.f32.partialorder %v3008, 0.7853982
    %vm3010 = vcmp.lt.s32.totalorder %v3007, 0
    %v3011 = vand.u32 %v3007, 2139095040
    %v3012 = vshrl.u32 %v3011, 23
    %v3013 = vsub.s32 %v3012, 127
    %v3014 = vand.u32 2147483647, %v3007
    %v3015 = vand.u32 %v3014, 8388607
    %v3016 = vor.u32 %v3015, 8388608
    %v3017 = vsub.s32 0, %v3016
    %v3018 = vadd.s32 %v3013, 1
    %vm3019 = vcmp.gt.s32.totalorder %v3018, 0
    %v3020 = vsel %vm3019, %v3018, 0
    %v3021 = vshrl.u32 %v3020, 5
    %v3022 = vand.u32 %v3020, 31
    %v3023 = vsub.s32 32, %v3022
    %v3024 = vshrl.u32 683565275, %v3023
    %v3025 = vshll.u32 683565275, %v3022
    %v3026 = vshrl.u32 2475754826, %v3023
    %v3027 = vor.u32 %v3025, %v3026
    %v3028 = vshll.u32 2475754826, %v3022
    %v3029 = vshrl.u32 2131351028, %v3023
    %v3030 = vor.u32 %v3028, %v3029
    %v3031 = vshll.u32 2131351028, %v3022
    %v3032 = vshrl.u32 2102212464, %v3023
    %v3033 = vor.u32 %v3031, %v3032
    %v3034 = vshll.u32 2102212464, %v3022
    %v3035 = vshrl.u32 920167782, %v3023
    %v3036 = vor.u32 %v3034, %v3035
    %v3037 = vshll.u32 920167782, %v3022
    %v3038 = vshrl.u32 1326507024, %v3023
    %v3039 = vor.u32 %v3037, %v3038
    %vm3040 = vcmp.lt.s32.totalorder %v3021, 1
    %vm3041 = vcmp.lt.s32.totalorder %v3021, 2
    %vm3042 = vcmp.lt.s32.totalorder %v3021, 3
    %vm3043 = vcmp.lt.s32.totalorder %v3021, 4
    %v3044 = vsel %vm3040, %v3024, %v3027
    %v3045 = vsel %vm3043, %v3033, 2102212464
    %v3046 = vsel %vm3042, %v3030, %v3045
    %v3047 = vsel %vm3041, %v3044, %v3046
    %v3048 = vsel %vm3040, %v3027, %v3030
    %v3049 = vsel %vm3043, %v3036, 920167782
    %v3050 = vsel %vm3042, %v3033, %v3049
    %v3051 = vsel %vm3041, %v3048, %v3050
    %v3052 = vsel %vm3040, %v3030, %v3033
    %v3053 = vsel %vm3043, %v3039, 1326507024
    %v3054 = vsel %vm3042, %v3036, %v3053
    %v3055 = vsel %vm3041, %v3052, %v3054
    %v3056 = vshll.u32 %v3016, 8
    %v3057 = vand.u32 %v3056, 65535
    %v3058 = vshrl.u32 %v3056, 16
    %v3059 = vand.u32 %v3055, 65535
    %v3060 = vshrl.u32 %v3055, 16
    %v3061 = vmul.u32 %v3057, %v3059
    %v3062 = vmul.u32 %v3057, %v3060
    %v3063 = vmul.u32 %v3058, %v3059
    %v3064 = vmul.u32 %v3058, %v3060
    %v3065 = vshll.u32 %v3062, 16
    %v3066 = vshrl.u32 %v3062, 16
    %v3067 = vshll.u32 %v3063, 16
    %v3068 = vshrl.u32 %v3063, 16
    %vm3069 = vc.u32 %v3061, %v3065
    %v3070 = vsel %vm3069, 1, 0
    %v3071 = vadd.s32 %v3061, %v3065
    %v3072 = vadd.s32 %v3064, %v3070
    %vm3073 = vc.u32 %v3071, %v3067
    %v3074 = vsel %vm3073, 1, 0
    %v3075 = vadd.s32 %v3071, %v3067
    %v3076 = vadd.s32 %v3072, %v3074
    %v3077 = vadd.s32 %v3076, %v3066
    %v3078 = vadd.s32 %v3077, %v3068
    %v3079 = vand.u32 %v3056, 65535
    %v3080 = vshrl.u32 %v3056, 16
    %v3081 = vand.u32 %v3051, 65535
    %v3082 = vshrl.u32 %v3051, 16
    %v3083 = vmul.u32 %v3079, %v3081
    %v3084 = vmul.u32 %v3079, %v3082
    %v3085 = vmul.u32 %v3080, %v3081
    %v3086 = vmul.u32 %v3080, %v3082
    %v3087 = vshll.u32 %v3084, 16
    %v3088 = vshrl.u32 %v3084, 16
    %v3089 = vshll.u32 %v3085, 16
    %v3090 = vshrl.u32 %v3085, 16
    %vm3091 = vc.u32 %v3083, %v3087
    %v3092 = vsel %vm3091, 1, 0
    %v3093 = vadd.s32 %v3083, %v3087
    %v3094 = vadd.s32 %v3086, %v3092
    %vm3095 = vc.u32 %v3093, %v3089
    %v3096 = vsel %vm3095, 1, 0
    %v3097 = vadd.s32 %v3093, %v3089
    %v3098 = vadd.s32 %v3094, %v3096
    %v3099 = vadd.s32 %v3098, %v3088
    %v3100 = vadd.s32 %v3099, %v3090
    %v3101 = vmul.u32 %v3056, %v3047
    %v3102 = vadd.s32 %v3078, %v3097
    %vm3103 = vc.u32 %v3078, %v3097
    %v3104 = vadd.s32 %v3100, 1
    %v3105 = vsel %vm3103, %v3104, %v3100
    %v3106 = vadd.s32 %v3101, %v3105
    %v3107 = vadd.s32 %v3106, 536870912
    %v3108 = vshrl.u32 %v3107, 30
    %v3109 = vshll.u32 %v3108, 30
    %v3110 = vsub.s32 %v3106, %v3109
    %vm3111 = vcmp.lt.s32.totalorder %v3110, 0
    %v3112 = vsub.s32 0, %v3110
    %v3113 = vsel %vm3111, %v3112, %v3110
    %v3114 = vclz %v3113
    %v3115 = vsub.s32 %v3114, 2
    %vm3116 = vcmp.gt.s32.totalorder 0, %v3115
    %v3117 = vsel %vm3116, 0, %v3115
    %v3118 = vsub.s32 32, %v3117
    %v3119 = vshll.u32 %v3110, %v3117
    %v3120 = vshrl.u32 %v3102, %v3118
    %v3121 = vor.u32 %v3119, %v3120
    %v3122 = vsub.s32 4294967266, %v3117
    %v3123 = vadd.s32 %v3122, 127
    %v3124 = vshll.u32 %v3123, 23
    %v3125 = vor.u32 4788187, %v3124
    %v3126 = vand.u32 2147483647, %v3125
    %v3128 = vcvt.s32.f32 %v3121
    %v3129 = vmul.f32 %v3128, %v3126
    %v3130 = vxor.u32 %v3129, 2147483648
    %v3131 = vsel %vm3010, %v3130, %v3129
    %v3132 = vsub.s32 4, %v3108
    %v3133 = vsel %vm3010, %v3132, %v3108
    %v3134 = vsel %vm3009, %v3007, %v3131
    %v3135 = vsel %vm3009, 0, %v3133
    %v3136 = vmul.f32 %v3134, %v3134
    %v3137 = vmul.f32 %v3136, -0.001358992
    %v3138 = vadd.f32 %v3137, 0.041655596
    %v3139 = vmul.f32 %v3136, %v3138
    %v3140 = vadd.f32 %v3139, -0.4999988
    %v3141 = vmul.f32 %v3136, %v3140
    %v3142 = vadd.f32 1.0, %v3141
    %v3143 = vmul.f32 %v3134, %v3134
    %v3144 = vmul.f32 %v3143, -0.00019511016
    %v3145 = vadd.f32 %v3144, 0.008332121
    %v3146 = vmul.f32 %v3143, %v3145
    %v3147 = vadd.f32 %v3146, -0.16666654
    %v3148 = vmul.f32 %v3143, %v3147
    %v3149 = vadd.f32 %v3148, 1.0
    %v3150 = vmul.f32 %v3149, %v3134
    %vm3151 = vweird.f32 %v3007
    %v3152 = vand.u32 %v3135, 3
    %vm3153 = vcmp.lt.s32.totalorder %v3152, 2
    %vm3154 = vcmp.eq.s32.totalorder %v3152, 0
    %v3155 = vxor.u32 %v3150, 2147483648
    %v3156 = vsel %vm3154, %v3142, %v3155
    %vm3157 = vcmp.eq.s32.totalorder %v3152, 2
    %v3158 = vxor.u32 %v3142, 2147483648
    %v3159 = vsel %vm3157, %v3158, %v3150
    %v3160 = vsel %vm3153, %v3156, %v3159
    %v3161 = vsel %vm3151, nan, %v3160
    %v3162 = vsub.f32 %v3161, %v2982
    %v3163 = vand.u32 2147483647, %v3007
    %vm3164 = vcmp.le.f32.partialorder %v3163, 0.7853982
    %vm3165 = vcmp.lt.s32.totalorder %v3007, 0
    %v3166 = vand.u32 %v3007, 2139095040
    %v3167 = vshrl.u32 %v3166, 23
    %v3168 = vsub.s32 %v3167, 127
    %v3169 = vand.u32 2147483647, %v3007
    %v3170 = vand.u32 %v3169, 8388607
    %v3171 = vor.u32 %v3170, 8388608
    %v3172 = vsub.s32 0, %v3171
    %v3173 = vadd.s32 %v3168, 1
    %vm3174 = vcmp.gt.s32.totalorder %v3173, 0
    %v3175 = vsel %vm3174, %v3173, 0
    %v3176 = vshrl.u32 %v3175, 5
    %v3177 = vand.u32 %v3175, 31
    %v3178 = vsub.s32 32, %v3177
    %v3179 = vshrl.u32 683565275, %v3178
    %v3180 = vshll.u32 683565275, %v3177
    %v3181 = vshrl.u32 2475754826, %v3178
    %v3182 = vor.u32 %v3180, %v3181
    %v3183 = vshll.u32 2475754826, %v3177
    %v3184 = vshrl.u32 2131351028, %v3178
    %v3185 = vor.u32 %v3183, %v3184
    %v3186 = vshll.u32 2131351028, %v3177
    %v3187 = vshrl.u32 2102212464, %v3178
    %v3188 = vor.u32 %v3186, %v3187
    %v3189 = vshll.u32 2102212464, %v3177
    %v3190 = vshrl.u32 920167782, %v3178
    %v3191 = vor.u32 %v3189, %v3190
    %v3192 = vshll.u32 920167782, %v3177
    %v3193 = vshrl.u32 1326507024, %v3178
    %v3194 = vor.u32 %v3192, %v3193
    %vm3195 = vcmp.lt.s32.totalorder %v3176, 1
    %vm3196 = vcmp.lt.s32.totalorder %v3176, 2
    %vm3197 = vcmp.lt.s32.totalorder %v3176, 3
    %vm3198 = vcmp.lt.s32.totalorder %v3176, 4
    %v3199 = vsel %vm3195, %v3179, %v3182
    %v3200 = vsel %vm3198, %v3188, 2102212464
    %v3201 = vsel %vm3197, %v3185, %v3200
    %v3202 = vsel %vm3196, %v3199, %v3201
    %v3203 = vsel %vm3195, %v3182, %v3185
    %v3204 = vsel %vm3198, %v3191, 920167782
    %v3205 = vsel %vm3197, %v3188, %v3204
    %v3206 = vsel %vm3196, %v3203, %v3205
    %v3207 = vsel %vm3195, %v3185, %v3188
    %v3208 = vsel %vm3198, %v3194, 1326507024
    %v3209 = vsel %vm3197, %v3191, %v3208
    %v3210 = vsel %vm3196, %v3207, %v3209
    %v3211 = vshll.u32 %v3171, 8
    %v3212 = vand.u32 %v3211, 65535
    %v3213 = vshrl.u32 %v3211, 16
    %v3214 = vand.u32 %v3210, 65535
    %v3215 = vshrl.u32 %v3210, 16
    %v3216 = vmul.u32 %v3212, %v3214
    %v3217 = vmul.u32 %v3212, %v3215
    %v3218 = vmul.u32 %v3213, %v3214
    %v3219 = vmul.u32 %v3213, %v3215
    %v3220 = vshll.u32 %v3217, 16
    %v3221 = vshrl.u32 %v3217, 16
    %v3222 = vshll.u32 %v3218, 16
    %v3223 = vshrl.u32 %v3218, 16
    %vm3224 = vc.u32 %v3216, %v3220
    %v3225 = vsel %vm3224, 1, 0
    %v3226 = vadd.s32 %v3216, %v3220
    %v3227 = vadd.s32 %v3219, %v3225
    %vm3228 = vc.u32 %v3226, %v3222
    %v3229 = vsel %vm3228, 1, 0
    %v3230 = vadd.s32 %v3226, %v3222
    %v3231 = vadd.s32 %v3227, %v3229
    %v3232 = vadd.s32 %v3231, %v3221
    %v3233 = vadd.s32 %v3232, %v3223
    %v3234 = vand.u32 %v3211, 65535
    %v3235 = vshrl.u32 %v3211, 16
    %v3236 = vand.u32 %v3206, 65535
    %v3237 = vshrl.u32 %v3206, 16
    %v3238 = vmul.u32 %v3234, %v3236
    %v3239 = vmul.u32 %v3234, %v3237
    %v3240 = vmul.u32 %v3235, %v3236
    %v3241 = vmul.u32 %v3235, %v3237
    %v3242 = vshll.u32 %v3239, 16
    %v3243 = vshrl.u32 %v3239, 16
    %v3244 = vshll.u32 %v3240, 16
    %v3245 = vshrl.u32 %v3240, 16
    %vm3246 = vc.u32 %v3238, %v3242
    %v3247 = vsel %vm3246, 1, 0
    %v3248 = vadd.s32 %v3238, %v3242
    %v3249 = vadd.s32 %v3241, %v3247
    %vm3250 = vc.u32 %v3248, %v3244
    %v3251 = vsel %vm3250, 1, 0
    %v3252 = vadd.s32 %v3248, %v3244
    %v3253 = vadd.s32 %v3249, %v3251
    %v3254 = vadd.s32 %v3253, %v3243
    %v3255 = vadd.s32 %v3254, %v3245
    %v3256 = vmul.u32 %v3211, %v3202
    %v3257 = vadd.s32 %v3233, %v3252
    %vm3258 = vc.u32 %v3233, %v3252
    %v3259 = vadd.s32 %v3255, 1
    %v3260 = vsel %vm3258, %v3259, %v3255
    %v3261 = vadd.s32 %v3256, %v3260
    %v3262 = vadd.s32 %v3261, 536870912
    %v3263 = vshrl.u32 %v3262, 30
    %v3264 = vshll.u32 %v3263, 30
    %v3265 = vsub.s32 %v3261, %v3264
    %vm3266 = vcmp.lt.s32.totalorder %v3265, 0
    %v3267 = vsub.s32 0, %v3265
    %v3268 = vsel %vm3266, %v3267, %v3265
    %v3269 = vclz %v3268
    %v3270 = vsub.s32 %v3269, 2
    %vm3271 = vcmp.gt.s32.totalorder 0, %v3270
    %v3272 = vsel %vm3271, 0, %v3270
    %v3273 = vsub.s32 32, %v3272
    %v3274 = vshll.u32 %v3265, %v3272
    %v3275 = vshrl.u32 %v3257, %v3273
    %v3276 = vor.u32 %v3274, %v3275
    %v3277 = vsub.s32 4294967266, %v3272
    %v3278 = vadd.s32 %v3277, 127
    %v3279 = vshll.u32 %v3278, 23
    %v3280 = vor.u32 4788187, %v3279
    %v3281 = vand.u32 2147483647, %v3280
    %v3283 = vcvt.s32.f32 %v3276
    %v3284 = vmul.f32 %v3283, %v3281
    %v3285 = vxor.u32 %v3284, 2147483648
    %v3286 = vsel %vm3165, %v3285, %v3284
    %v3287 = vsub.s32 4, %v3263
    %v3288 = vsel %vm3165, %v3287, %v3263
    %v3289 = vsel %vm3164, %v3007, %v3286
    %v3290 = vsel %vm3164, 0, %v3288
    %v3291 = vmul.f32 %v3289, %v3289
    %v3292 = vmul.f32 %v3291, -0.001358992
    %v3293 = vadd.f32 %v3292, 0.041655596
    %v3294 = vmul.f32 %v3291, %v3293
    %v3295 = vadd.f32 %v3294, -0.4999988
    %v3296 = vmul.f32 %v3291, %v3295
    %v3297 = vadd.f32 1.0, %v3296
    %v3298 = vmul.f32 %v3289, %v3289
    %v3299 = vmul.f32 %v3298, -0.00019511016
    %v3300 = vadd.f32 %v3299, 0.008332121
    %v3301 = vmul.f32 %v3298, %v3300
    %v3302 = vadd.f32 %v3301, -0.16666654
    %v3303 = vmul.f32 %v3298, %v3302
    %v3304 = vadd.f32 %v3303, 1.0
    %v3305 = vmul.f32 %v3304, %v3289
    %vm3306 = vweird.f32 %v3007
    %v3307 = vadd.s32 %v3290, 3
    %v3308 = vand.u32 %v3307, 3
    %vm3309 = vcmp.lt.s32.totalorder %v3308, 2
    %vm3310 = vcmp.eq.s32.totalorder %v3308, 0
    %v3311 = vxor.u32 %v3305, 2147483648
    %v3312 = vsel %vm3310, %v3297, %v3311
    %vm3313 = vcmp.eq.s32.totalorder %v3308, 2
    %v3314 = vxor.u32 %v3297, 2147483648
    %v3315 = vsel %vm3313, %v3314, %v3305
    %v3316 = vsel %vm3309, %v3312, %v3315
    %v3317 = vsel %vm3306, nan, %v3316
    %v3318 = vmax.f32 %v3317, 1e-06
    %v3319 = vrcp.pop %v3318
    %v3320 = vmul.f32 %v3318, %v3319
    %v3321 = vsub.f32 1.0, %v3320
    %v3322 = vmul.f32 %v3319, %v3321
    %v3323 = vadd.f32 %v3319, %v3322
    %vm3324 = vweird.f32 %v3318
    %vm3325 = vweird.f32 %v3319
    %vm3326 = vmor %vm3324, %vm3325
    %v3327 = vsel %vm3326, %v3319, %v3323
    %v3328 = vand.u32 2147483647, %v3318
    %vm3329 = vcmp.eq.f32.partialorder %v3328, 8.507059e+37
    %v3330 = vand.u32 %v3318, 2147483648
    %v3331 = vor.u32 1.1754944e-38, %v3330
    %v3332 = vsel %vm3329, %v3331, %v3327
    %v3333 = vmul.f32 %v3162, %v3332
    %v3334 = vadd.f32 %v3007, %v3333
    %v3335 = vadd.f32 %v3334, 1e-06
    %v3336 = vand.u32 2147483647, %v3335
    %vm3337 = vcmp.le.f32.partialorder %v3336, 0.7853982
    %vm3338 = vcmp.lt.s32.totalorder %v3335, 0
    %v3339 = vand.u32 %v3335, 2139095040
    %v3340 = vshrl.u32 %v3339, 23
    %v3341 = vsub.s32 %v3340, 127
    %v3342 = vand.u32 2147483647, %v3335
    %v3343 = vand.u32 %v3342, 8388607
    %v3344 = vor.u32 %v3343, 8388608
    %v3345 = vsub.s32 0, %v3344
    %v3346 = vadd.s32 %v3341, 1
    %vm3347 = vcmp.gt.s32.totalorder %v3346, 0
    %v3348 = vsel %vm3347, %v3346, 0
    %v3349 = vshrl.u32 %v3348, 5
    %v3350 = vand.u32 %v3348, 31
    %v3351 = vsub.s32 32, %v3350
    %v3352 = vshrl.u32 683565275, %v3351
    %v3353 = vshll.u32 683565275, %v3350
    %v3354 = vshrl.u32 2475754826, %v3351
    %v3355 = vor.u32 %v3353, %v3354
    %v3356 = vshll.u32 2475754826, %v3350
    %v3357 = vshrl.u32 2131351028, %v3351
    %v3358 = vor.u32 %v3356, %v3357
    %v3359 = vshll.u32 2131351028, %v3350
    %v3360 = vshrl.u32 2102212464, %v3351
    %v3361 = vor.u32 %v3359, %v3360
    %v3362 = vshll.u32 2102212464, %v3350
    %v3363 = vshrl.u32 920167782, %v3351
    %v3364 = vor.u32 %v3362, %v3363
    %v3365 = vshll.u32 920167782, %v3350
    %v3366 = vshrl.u32 1326507024, %v3351
    %v3367 = vor.u32 %v3365, %v3366
    %vm3368 = vcmp.lt.s32.totalorder %v3349, 1
    %vm3369 = vcmp.lt.s32.totalorder %v3349, 2
    %vm3370 = vcmp.lt.s32.totalorder %v3349, 3
    %vm3371 = vcmp.lt.s32.totalorder %v3349, 4
    %v3372 = vsel %vm3368, %v3352, %v3355
    %v3373 = vsel %vm3371, %v3361, 2102212464
    %v3374 = vsel %vm3370, %v3358, %v3373
    %v3375 = vsel %vm3369, %v3372, %v3374
    %v3376 = vsel %vm3368, %v3355, %v3358
    %v3377 = vsel %vm3371, %v3364, 920167782
    %v3378 = vsel %vm3370, %v3361, %v3377
    %v3379 = vsel %vm3369, %v3376, %v3378
    %v3380 = vsel %vm3368, %v3358, %v3361
    %v3381 = vsel %vm3371, %v3367, 1326507024
    %v3382 = vsel %vm3370, %v3364, %v3381
    %v3383 = vsel %vm3369, %v3380, %v3382
    %v3384 = vshll.u32 %v3344, 8
    %v3385 = vand.u32 %v3384, 65535
    %v3386 = vshrl.u32 %v3384, 16
    %v3387 = vand.u32 %v3383, 65535
    %v3388 = vshrl.u32 %v3383, 16
    %v3389 = vmul.u32 %v3385, %v3387
    %v3390 = vmul.u32 %v3385, %v3388
    %v3391 = vmul.u32 %v3386, %v3387
    %v3392 = vmul.u32 %v3386, %v3388
    %v3393 = vshll.u32 %v3390, 16
    %v3394 = vshrl.u32 %v3390, 16
    %v3395 = vshll.u32 %v3391, 16
    %v3396 = vshrl.u32 %v3391, 16
    %vm3397 = vc.u32 %v3389, %v3393
    %v3398 = vsel %vm3397, 1, 0
    %v3399 = vadd.s32 %v3389, %v3393
    %v3400 = vadd.s32 %v3392, %v3398
    %vm3401 = vc.u32 %v3399, %v3395
    %v3402 = vsel %vm3401, 1, 0
    %v3403 = vadd.s32 %v3399, %v3395
    %v3404 = vadd.s32 %v3400, %v3402
    %v3405 = vadd.s32 %v3404, %v3394
    %v3406 = vadd.s32 %v3405, %v3396
    %v3407 = vand.u32 %v3384, 65535
    %v3408 = vshrl.u32 %v3384, 16
    %v3409 = vand.u32 %v3379, 65535
    %v3410 = vshrl.u32 %v3379, 16
    %v3411 = vmul.u32 %v3407, %v3409
    %v3412 = vmul.u32 %v3407, %v3410
    %v3413 = vmul.u32 %v3408, %v3409
    %v3414 = vmul.u32 %v3408, %v3410
    %v3415 = vshll.u32 %v3412, 16
    %v3416 = vshrl.u32 %v3412, 16
    %v3417 = vshll.u32 %v3413, 16
    %v3418 = vshrl.u32 %v3413, 16
    %vm3419 = vc.u32 %v3411, %v3415
    %v3420 = vsel %vm3419, 1, 0
    %v3421 = vadd.s32 %v3411, %v3415
    %v3422 = vadd.s32 %v3414, %v3420
    %vm3423 = vc.u32 %v3421, %v3417
    %v3424 = vsel %vm3423, 1, 0
    %v3425 = vadd.s32 %v3421, %v3417
    %v3426 = vadd.s32 %v3422, %v3424
    %v3427 = vadd.s32 %v3426, %v3416
    %v3428 = vadd.s32 %v3427, %v3418
    %v3429 = vmul.u32 %v3384, %v3375
    %v3430 = vadd.s32 %v3406, %v3425
    %vm3431 = vc.u32 %v3406, %v3425
    %v3432 = vadd.s32 %v3428, 1
    %v3433 = vsel %vm3431, %v3432, %v3428
    %v3434 = vadd.s32 %v3429, %v3433
    %v3435 = vadd.s32 %v3434, 536870912
    %v3436 = vshrl.u32 %v3435, 30
    %v3437 = vshll.u32 %v3436, 30
    %v3438 = vsub.s32 %v3434, %v3437
    %vm3439 = vcmp.lt.s32.totalorder %v3438, 0
    %v3440 = vsub.s32 0, %v3438
    %v3441 = vsel %vm3439, %v3440, %v3438
    %v3442 = vclz %v3441
    %v3443 = vsub.s32 %v3442, 2
    %vm3444 = vcmp.gt.s32.totalorder 0, %v3443
    %v3445 = vsel %vm3444, 0, %v3443
    %v3446 = vsub.s32 32, %v3445
    %v3447 = vshll.u32 %v3438, %v3445
    %v3448 = vshrl.u32 %v3430, %v3446
    %v3449 = vor.u32 %v3447, %v3448
    %v3450 = vsub.s32 4294967266, %v3445
    %v3451 = vadd.s32 %v3450, 127
    %v3452 = vshll.u32 %v3451, 23
    %v3453 = vor.u32 4788187, %v3452
    %v3454 = vand.u32 2147483647, %v3453
    %v3456 = vcvt.s32.f32 %v3449
    %v3457 = vmul.f32 %v3456, %v3454
    %v3458 = vxor.u32 %v3457, 2147483648
    %v3459 = vsel %vm3338, %v3458, %v3457
    %v3460 = vsub.s32 4, %v3436
    %v3461 = vsel %vm3338, %v3460, %v3436
    %v3462 = vsel %vm3337, %v3335, %v3459
    %v3463 = vsel %vm3337, 0, %v3461
    %v3464 = vmul.f32 %v3462, %v3462
    %v3465 = vmul.f32 %v3464, -0.001358992
    %v3466 = vadd.f32 %v3465, 0.041655596
    %v3467 = vmul.f32 %v3464, %v3466
    %v3468 = vadd.f32 %v3467, -0.4999988
    %v3469 = vmul.f32 %v3464, %v3468
    %v3470 = vadd.f32 1.0, %v3469
    %v3471 = vmul.f32 %v3462, %v3462
    %v3472 = vmul.f32 %v3471, -0.00019511016
    %v3473 = vadd.f32 %v3472, 0.008332121
    %v3474 = vmul.f32 %v3471, %v3473
    %v3475 = vadd.f32 %v3474, -0.16666654
    %v3476 = vmul.f32 %v3471, %v3475
    %v3477 = vadd.f32 %v3476, 1.0
    %v3478 = vmul.f32 %v3477, %v3462
    %vm3479 = vweird.f32 %v3335
    %v3480 = vadd.s32 %v3463, 3
    %v3481 = vand.u32 %v3480, 3
    %vm3482 = vcmp.lt.s32.totalorder %v3481, 2
    %vm3483 = vcmp.eq.s32.totalorder %v3481, 0
    %v3484 = vxor.u32 %v3478, 2147483648
    %v3485 = vsel %vm3483, %v3470, %v3484
    %vm3486 = vcmp.eq.s32.totalorder %v3481, 2
    %v3487 = vxor.u32 %v3470, 2147483648
    %v3488 = vsel %vm3486, %v3487, %v3478
    %v3489 = vsel %vm3482, %v3485, %v3488
    %v3490 = vsel %vm3479, nan, %v3489
    %v3491 = vand.u32 2147483647, %v3335
    %vm3492 = vcmp.le.f32.partialorder %v3491, 0.7853982
    %vm3493 = vcmp.lt.s32.totalorder %v3335, 0
    %v3494 = vand.u32 %v3335, 2139095040
    %v3495 = vshrl.u32 %v3494, 23
    %v3496 = vsub.s32 %v3495, 127
    %v3497 = vand.u32 2147483647, %v3335
    %v3498 = vand.u32 %v3497, 8388607
    %v3499 = vor.u32 %v3498, 8388608
    %v3500 = vsub.s32 0, %v3499
    %v3501 = vadd.s32 %v3496, 1
    %vm3502 = vcmp.gt.s32.totalorder %v3501, 0
    %v3503 = vsel %vm3502, %v3501, 0
    %v3504 = vshrl.u32 %v3503, 5
    %v3505 = vand.u32 %v3503, 31
    %v3506 = vsub.s32 32, %v3505
    %v3507 = vshrl.u32 683565275, %v3506
    %v3508 = vshll.u32 683565275, %v3505
    %v3509 = vshrl.u32 2475754826, %v3506
    %v3510 = vor.u32 %v3508, %v3509
    %v3511 = vshll.u32 2475754826, %v3505
    %v3512 = vshrl.u32 2131351028, %v3506
    %v3513 = vor.u32 %v3511, %v3512
    %v3514 = vshll.u32 2131351028, %v3505
    %v3515 = vshrl.u32 2102212464, %v3506
    %v3516 = vor.u32 %v3514, %v3515
    %v3517 = vshll.u32 2102212464, %v3505
    %v3518 = vshrl.u32 920167782, %v3506
    %v3519 = vor.u32 %v3517, %v3518
    %v3520 = vshll.u32 920167782, %v3505
    %v3521 = vshrl.u32 1326507024, %v3506
    %v3522 = vor.u32 %v3520, %v3521
    %vm3523 = vcmp.lt.s32.totalorder %v3504, 1
    %vm3524 = vcmp.lt.s32.totalorder %v3504, 2
    %vm3525 = vcmp.lt.s32.totalorder %v3504, 3
    %vm3526 = vcmp.lt.s32.totalorder %v3504, 4
    %v3527 = vsel %vm3523, %v3507, %v3510
    %v3528 = vsel %vm3526, %v3516, 2102212464
    %v3529 = vsel %vm3525, %v3513, %v3528
    %v3530 = vsel %vm3524, %v3527, %v3529
    %v3531 = vsel %vm3523, %v3510, %v3513
    %v3532 = vsel %vm3526, %v3519, 920167782
    %v3533 = vsel %vm3525, %v3516, %v3532
    %v3534 = vsel %vm3524, %v3531, %v3533
    %v3535 = vsel %vm3523, %v3513, %v3516
    %v3536 = vsel %vm3526, %v3522, 1326507024
    %v3537 = vsel %vm3525, %v3519, %v3536
    %v3538 = vsel %vm3524, %v3535, %v3537
    %v3539 = vshll.u32 %v3499, 8
    %v3540 = vand.u32 %v3539, 65535
    %v3541 = vshrl.u32 %v3539, 16
    %v3542 = vand.u32 %v3538, 65535
    %v3543 = vshrl.u32 %v3538, 16
    %v3544 = vmul.u32 %v3540, %v3542
    %v3545 = vmul.u32 %v3540, %v3543
    %v3546 = vmul.u32 %v3541, %v3542
    %v3547 = vmul.u32 %v3541, %v3543
    %v3548 = vshll.u32 %v3545, 16
    %v3549 = vshrl.u32 %v3545, 16
    %v3550 = vshll.u32 %v3546, 16
    %v3551 = vshrl.u32 %v3546, 16
    %vm3552 = vc.u32 %v3544, %v3548
    %v3553 = vsel %vm3552, 1, 0
    %v3554 = vadd.s32 %v3544, %v3548
    %v3555 = vadd.s32 %v3547, %v3553
    %vm3556 = vc.u32 %v3554, %v3550
    %v3557 = vsel %vm3556, 1, 0
    %v3558 = vadd.s32 %v3554, %v3550
    %v3559 = vadd.s32 %v3555, %v3557
    %v3560 = vadd.s32 %v3559, %v3549
    %v3561 = vadd.s32 %v3560, %v3551
    %v3562 = vand.u32 %v3539, 65535
    %v3563 = vshrl.u32 %v3539, 16
    %v3564 = vand.u32 %v3534, 65535
    %v3565 = vshrl.u32 %v3534, 16
    %v3566 = vmul.u32 %v3562, %v3564
    %v3567 = vmul.u32 %v3562, %v3565
    %v3568 = vmul.u32 %v3563, %v3564
    %v3569 = vmul.u32 %v3563, %v3565
    %v3570 = vshll.u32 %v3567, 16
    %v3571 = vshrl.u32 %v3567, 16
    %v3572 = vshll.u32 %v3568, 16
    %v3573 = vshrl.u32 %v3568, 16
    %vm3574 = vc.u32 %v3566, %v3570
    %v3575 = vsel %vm3574, 1, 0
    %v3576 = vadd.s32 %v3566, %v3570
    %v3577 = vadd.s32 %v3569, %v3575
    %vm3578 = vc.u32 %v3576, %v3572
    %v3579 = vsel %vm3578, 1, 0
    %v3580 = vadd.s32 %v3576, %v3572
    %v3581 = vadd.s32 %v3577, %v3579
    %v3582 = vadd.s32 %v3581, %v3571
    %v3583 = vadd.s32 %v3582, %v3573
    %v3584 = vmul.u32 %v3539, %v3530
    %v3585 = vadd.s32 %v3561, %v3580
    %vm3586 = vc.u32 %v3561, %v3580
    %v3587 = vadd.s32 %v3583, 1
    %v3588 = vsel %vm3586, %v3587, %v3583
    %v3589 = vadd.s32 %v3584, %v3588
    %v3590 = vadd.s32 %v3589, 536870912
    %v3591 = vshrl.u32 %v3590, 30
    %v3592 = vshll.u32 %v3591, 30
    %v3593 = vsub.s32 %v3589, %v3592
    %vm3594 = vcmp.lt.s32.totalorder %v3593, 0
    %v3595 = vsub.s32 0, %v3593
    %v3596 = vsel %vm3594, %v3595, %v3593
    %v3597 = vclz %v3596
    %v3598 = vsub.s32 %v3597, 2
    %vm3599 = vcmp.gt.s32.totalorder 0, %v3598
    %v3600 = vsel %vm3599, 0, %v3598
    %v3601 = vsub.s32 32, %v3600
    %v3602 = vshll.u32 %v3593, %v3600
    %v3603 = vshrl.u32 %v3585, %v3601
    %v3604 = vor.u32 %v3602, %v3603
    %v3605 = vsub.s32 4294967266, %v3600
    %v3606 = vadd.s32 %v3605, 127
    %v3607 = vshll.u32 %v3606, 23
    %v3608 = vor.u32 4788187, %v3607
    %v3609 = vand.u32 2147483647, %v3608
    %v3611 = vcvt.s32.f32 %v3604
    %v3612 = vmul.f32 %v3611, %v3609
    %v3613 = vxor.u32 %v3612, 2147483648
    %v3614 = vsel %vm3493, %v3613, %v3612
    %v3615 = vsub.s32 4, %v3591
    %v3616 = vsel %vm3493, %v3615, %v3591
    %v3617 = vsel %vm3492, %v3335, %v3614
    %v3618 = vsel %vm3492, 0, %v3616
    %v3619 = vmul.f32 %v3617, %v3617
    %v3620 = vmul.f32 %v3619, -0.001358992
    %v3621 = vadd.f32 %v3620, 0.041655596
    %v3622 = vmul.f32 %v3619, %v3621
    %v3623 = vadd.f32 %v3622, -0.4999988
    %v3624 = vmul.f32 %v3619, %v3623
    %v3625 = vadd.f32 1.0, %v3624
    %v3626 = vmul.f32 %v3617, %v3617
    %v3627 = vmul.f32 %v3626, -0.00019511016
    %v3628 = vadd.f32 %v3627, 0.008332121
    %v3629 = vmul.f32 %v3626, %v3628
    %v3630 = vadd.f32 %v3629, -0.16666654
    %v3631 = vmul.f32 %v3626, %v3630
    %v3632 = vadd.f32 %v3631, 1.0
    %v3633 = vmul.f32 %v3632, %v3617
    %vm3634 = vweird.f32 %v3335
    %v3635 = vand.u32 %v3618, 3
    %vm3636 = vcmp.lt.s32.totalorder %v3635, 2
    %vm3637 = vcmp.eq.s32.totalorder %v3635, 0
    %v3638 = vxor.u32 %v3633, 2147483648
    %v3639 = vsel %vm3637, %v3625, %v3638
    %vm3640 = vcmp.eq.s32.totalorder %v3635, 2
    %v3641 = vxor.u32 %v3625, 2147483648
    %v3642 = vsel %vm3640, %v3641, %v3633
    %v3643 = vsel %vm3636, %v3639, %v3642
    %v3644 = vsel %vm3634, nan, %v3643
    %v3645 = vmul.f32 %v3490, 2.0
    %v3646 = vrcp.pop %v3645
    %v3647 = vmul.f32 %v3645, %v3646
    %v3648 = vsub.f32 1.0, %v3647
    %v3649 = vmul.f32 %v3646, %v3648
    %v3650 = vadd.f32 %v3646, %v3649
    %vm3651 = vweird.f32 %v3645
    %vm3652 = vweird.f32 %v3646
    %vm3653 = vmor %vm3651, %vm3652
    %v3654 = vsel %vm3653, %v3646, %v3650
    %v3655 = vand.u32 2147483647, %v3645
    %vm3656 = vcmp.eq.f32.partialorder %v3655, 8.507059e+37
    %v3657 = vand.u32 %v3645, 2147483648
    %v3658 = vor.u32 1.1754944e-38, %v3657
    %v3659 = vsel %vm3656, %v3658, %v3654
    %v3660 = vmul.f32 %v3335, %v3659
    %v3661 = vsub.f32 %v2969, %v2975
    %v3662 = vmul.f32 %v3660, %v3661
    %v3663 = vsub.f32 %v2972, %v2960
    %v3664 = vmul.f32 %v3660, %v3663
    %v3665 = vsub.f32 %v2959, %v2964
    %v3666 = vmul.f32 %v3660, %v3665
    %v3667 = vadd.f32 %v3644, 1.0
    %v3668 = vmul.f32 %v3660, %v3667
    %v3669 = vsub.f32 1.0, %v3668
    %v3670 = vmul.f32 %v3335, %v3335
    %v3671 = vrcp.pop %v3670
    %v3672 = vmul.f32 %v3670, %v3671
    %v3673 = vsub.f32 1.0, %v3672
    %v3674 = vmul.f32 %v3671, %v3673
    %v3675 = vadd.f32 %v3671, %v3674
    %vm3676 = vweird.f32 %v3670
    %vm3677 = vweird.f32 %v3671
    %vm3678 = vmor %vm3676, %vm3677
    %v3679 = vsel %vm3678, %v3671, %v3675
    %v3680 = vand.u32 2147483647, %v3670
    %vm3681 = vcmp.eq.f32.partialorder %v3680, 8.507059e+37
    %v3682 = vand.u32 %v3670, 2147483648
    %v3683 = vor.u32 1.1754944e-38, %v3682
    %v3684 = vsel %vm3681, %v3683, %v3679
    %v3685 = vmul.f32 %v3669, %v3684
    %v3686 = vmul.f32 %v3670, 0.0013888889
    %v3687 = vadd.f32 %v3686, 0.083333336
    %vm3688 = vcmp.lt.f32.partialorder %v3335, 0.01
    %v3689 = vsel %vm3688, %v3687, %v3685
    %v3690 = vmul.f32 %v3662, %v3662
    %v3691 = vmul.f32 %v3689, %v3690
    %v3692 = vmul.f32 %v3664, %v3664
    %v3693 = vmul.f32 %v3689, %v3692
    %v3694 = vmul.f32 %v3666, %v3666
    %v3695 = vmul.f32 %v3689, %v3694
    %v3696 = vld [vmem:[%s0 + $0x3] sm:$0x1]
    %v3697 = vld [vmem:[%s0 + $0x4] sm:$0x1]
    %v3698 = vld [vmem:[%s0 + $0x5] sm:$0x1]
    %v3699 = vmul.f32 %v3666, 0.5
    %v3700 = vadd.f32 %v3699, %v3695
    %v3701 = vmul.f32 %v3700, %v3697
    %v3702 = vadd.f32 %v3696, %v3701
    %v3703 = vmul.f32 %v3664, 0.5
    %v3704 = vsub.f32 %v3693, %v3703
    %v3705 = vmul.f32 %v3704, %v3698
    %v3706 = vadd.f32 %v3702, %v3705
    %v3707 = vsub.f32 %v3695, %v3699
    %v3708 = vmul.f32 %v3707, %v3696
    %v3709 = vadd.f32 %v3708, %v3697
    %v3710 = vmul.f32 %v3662, 0.5
    %v3711 = vadd.f32 %v3710, %v3691
    %v3712 = vmul.f32 %v3711, %v3698
    %v3713 = vadd.f32 %v3709, %v3712
    %v3714 = vadd.f32 %v3703, %v3693
    %v3715 = vmul.f32 %v3714, %v3696
    %v3716 = vsub.f32 %v3691, %v3710
    %v3717 = vmul.f32 %v3716, %v3697
    %v3718 = vadd.f32 %v3715, %v3717
    %v3719 = vadd.f32 %v3718, %v3698
    %v3720 = vadd.f32 %v3690, %v3692
    %v3721 = vadd.f32 %v3720, %v3694
    %v3722 = vmul.f32 %v3706, %v3706
    %v3723 = vadd.f32 %v3721, %v3722
    %v3724 = vmul.f32 %v3713, %v3713
    %v3725 = vadd.f32 %v3723, %v3724
    %v3726 = vmul.f32 %v3719, %v3719
    %v3727 = vadd.f32 %v3725, %v3726
    %v3728 = vlaneseq
    %v3729 = vand.u32 %v3728, 127
    %vm3730 = vcmp.ge.s32.totalorder %v3729, 0
    %vm3731 = vcmp.lt.s32.totalorder %v3729, 28
    %vm3732 = vmand %vm3730, %vm3731
    %vm3733 = vcmp.lt.s32.totalorder %v3729, 8
    %vm3734 = vmand %vm3730, %vm3733
    %v3735 = vsel %vm3732, %v2024, 0.0
    %vm3736 = vcmask 911362
    %v3737 = vsel %vm3736, %v3735, 0.0
    %3738 = vadd.xlane.f32.xlu0 %v3737
    %v3739 = vpop.xlane.xlu0 %3738
    %v3740 = vsel %vm3734, %v3727, 0.0
    %vm3741 = vcmask 253952
    %v3742 = vsel %vm3741, %v3740, 0.0
    %3743 = vadd.xlane.f32.xlu0 %v3742
    %v3744 = vpop.xlane.xlu0 %3743
    %v3745 = vmul.f32 %v3744, 0.001
    %v3747 = vrot.slane %v3745, 6
    %v3749 = vadd.f32 %v3739, %v3747
    %v3750 = vrcp.pop 28.0
    %v3751 = vmul.f32 28.0, %v3750
    %v3752 = vsub.f32 1.0, %v3751
    %v3753 = vmul.f32 %v3750, %v3752
    %v3754 = vadd.f32 %v3750, %v3753
    %vm3755 = vweird.f32 %v3750
    %v3756 = vsel %vm3755, %v3750, %v3754
    %v3757 = vmul.f32 %v3749, %v3756
    %vm3758 = vcmp.eq.s32.totalorder %v3729, 0
    %3760 = vset.pattern.permute.xlu0 0
    %3761 = vperm.xlu0 %3760, %v3757
    %v3762 = vpop.permute.xlu0 %3761
    %v3764 = vsel %vm3758, %v3762, 0.0
    %v3765 = vadd.f32 %v3764, 0.0
    %vm3766 = vcmp.ge.s32.totalorder %v3729, 28
    %vm3767 = vcmp.lt.s32.totalorder %v3729, 56
    %vm3768 = vmand %vm3766, %vm3767
    %vm3769 = vcmp.ge.s32.totalorder %v3729, 8
    %vm3770 = vcmp.lt.s32.totalorder %v3729, 16
    %vm3771 = vmand %vm3769, %vm3770
    %v3772 = vsel %vm3768, %v2024, 0.0
    %v3773 = vsel %vm3736, %v3772, 0.0
    %3774 = vadd.xlane.f32.xlu0 %v3773
    %v3775 = vpop.xlane.xlu0 %3774
    %v3776 = vsel %vm3771, %v3727, 0.0
    %v3777 = vsel %vm3741, %v3776, 0.0
    %3778 = vadd.xlane.f32.xlu0 %v3777
    %v3779 = vpop.xlane.xlu0 %3778
    %v3780 = vmul.f32 %v3779, 0.001
    %v3782 = vrot.slane %v3780, 6
    %v3784 = vadd.f32 %v3775, %v3782
    %v3785 = vmul.f32 %v3784, %v3756
    %vm3786 = vcmp.eq.s32.totalorder %v3729, 1
    %3788 = vset.pattern.permute.xlu0 0
    %3789 = vperm.xlu0 %3788, %v3785
    %v3790 = vpop.permute.xlu0 %3789
    %v3792 = vsel %vm3786, %v3790, 0.0
    %v3793 = vadd.f32 %v3765, %v3792
    %vm3794 = vcmp.ge.s32.totalorder %v3729, 56
    %vm3795 = vcmp.lt.s32.totalorder %v3729, 84
    %vm3796 = vmand %vm3794, %vm3795
    %vm3797 = vcmp.ge.s32.totalorder %v3729, 16
    %vm3798 = vcmp.lt.s32.totalorder %v3729, 24
    %vm3799 = vmand %vm3797, %vm3798
    %v3800 = vsel %vm3796, %v2024, 0.0
    %v3801 = vsel %vm3736, %v3800, 0.0
    %3802 = vadd.xlane.f32.xlu0 %v3801
    %v3803 = vpop.xlane.xlu0 %3802
    %v3804 = vsel %vm3799, %v3727, 0.0
    %v3805 = vsel %vm3741, %v3804, 0.0
    %3806 = vadd.xlane.f32.xlu0 %v3805
    %v3807 = vpop.xlane.xlu0 %3806
    %v3808 = vmul.f32 %v3807, 0.001
    %v3810 = vrot.slane %v3808, 6
    %v3812 = vadd.f32 %v3803, %v3810
    %v3813 = vmul.f32 %v3812, %v3756
    %vm3814 = vcmp.eq.s32.totalorder %v3729, 2
    %3816 = vset.pattern.permute.xlu0 0
    %3817 = vperm.xlu0 %3816, %v3813
    %v3818 = vpop.permute.xlu0 %3817
    %v3820 = vsel %vm3814, %v3818, 0.0
    %v3821 = vadd.f32 %v3793, %v3820
    %vm3822 = vcmp.ge.s32.totalorder %v3729, 84
    %vm3823 = vcmp.lt.s32.totalorder %v3729, 112
    %vm3824 = vmand %vm3822, %vm3823
    %vm3825 = vcmp.ge.s32.totalorder %v3729, 24
    %vm3826 = vcmp.lt.s32.totalorder %v3729, 32
    %vm3827 = vmand %vm3825, %vm3826
    %v3828 = vsel %vm3824, %v2024, 0.0
    %v3829 = vsel %vm3736, %v3828, 0.0
    %3830 = vadd.xlane.f32.xlu0 %v3829
    %v3831 = vpop.xlane.xlu0 %3830
    %v3832 = vsel %vm3827, %v3727, 0.0
    %v3833 = vsel %vm3741, %v3832, 0.0
    %3834 = vadd.xlane.f32.xlu0 %v3833
    %v3835 = vpop.xlane.xlu0 %3834
    %v3836 = vmul.f32 %v3835, 0.001
    %v3838 = vrot.slane %v3836, 6
    %v3840 = vadd.f32 %v3831, %v3838
    %v3841 = vmul.f32 %v3840, %v3756
    %vm3842 = vcmp.eq.s32.totalorder %v3729, 3
    %3844 = vset.pattern.permute.xlu0 0
    %3845 = vperm.xlu0 %3844, %v3841
    %v3846 = vpop.permute.xlu0 %3845
    %v3848 = vsel %vm3842, %v3846, 0.0
    %v3849 = vadd.f32 %v3821, %v3848
    %vm3850 = vcmask 26626
    %3851 = vst.msk [vmem:[#allocation2 - $0x2] sm:$0x4] %vm3850, %v3849
    // Predicated region
    $region18: #{instance_rigid_loss_batched.1} parent=1 // pred_check
      _
    $region19: #{instance_rigid_loss_batched.1} parent=1 // pred_check_branch
      %3853 = sbr.rel (0) target = $region21
    $region20: #{instance_rigid_loss_batched.1} parent=1 // pred_region
      %3855 = vsyncadd [#allocation3], 0
      %s3857 = sshll.u32 [#allocation2], 4
      %s3858 = int_to_ptr.vmem [resolvable:$true] %s3857
      %s3859 = sshll.u32 %s4, 4
      %s3860 = int_to_ptr.hbm [resolvable:$true] %s3859
      %3862 = dma.vmem_to_hbm [thread:$0]  %s3858, 16, %s3860, [#allocation3]
    $region21: #{instance_rigid_loss_batched.1} parent=1 // pred_fallthru
      _
    // Predicated region
    $region22: #{instance_rigid_loss_batched.1} parent=1 // pred_check
      _
    $region23: #{instance_rigid_loss_batched.1} parent=1 // pred_check_branch
      %3864 = sbr.rel (0) target = $region25
    $region24: #{instance_rigid_loss_batched.1} parent=1 // pred_region
      %3866 = dma.done [#allocation3], 16
    $region25: #{instance_rigid_loss_batched.1} parent=1 // pred_fallthru
      _
    %3867 = vsyncpa [#allocation3], 1

</llo_original>
